<compile_context>
chip_gen: v6e
topology: v6e:2x2x1
jax: 0.10.0
libtpu: 0.0.40
codegen_flags: <defaults>
</compile_context>

<pallas_src>
import jax
import jax.numpy as jnp
from jax.experimental import pallas as pl
from jax.experimental.pallas import tpu as pltpu

# ----------------- small ViT configuration -----------------
IMG = 16
PATCH = 8
CHANNELS = 3
DIM = 64
LAYERS = 2
HEADS = 4
DIM_HEAD = 16
MLP_DIM = 128
NCLASSES = 16
NCLS_PAD = 128                            # lane-dense classifier output width

INNER = HEADS * DIM_HEAD                  # 64
NPATCH = (IMG // PATCH) ** 2              # 4 patch tokens per image
SEQ = NPATCH + 1                          # 5 real tokens (cls + patches)
SEQ_PAD = 8                               # sublane-aligned padded sequence
PATCH_DIM = CHANNELS * PATCH * PATCH      # 192
SCALE = DIM_HEAD ** -0.5
EPS = 1e-5                                # nn.LayerNorm default eps
NEG_INF = -1e30                           # additive mask for pad keys

# -------- packed-operand layout --------
# w64 slab: every weight matrix whose output width is DIM, stacked along rows.
PW_OFF = 0                                # patch-embedding weight (PATCH_DIM, DIM)
WO_OFF = PATCH_DIM                        # per-layer attn out-proj   (INNER, DIM)
W2_OFF = WO_OFF + LAYERS * INNER          # per-layer MLP fc2         (MLP_DIM, DIM)
W64_ROWS = W2_OFF + LAYERS * MLP_DIM      # 576 (every offset is 8-aligned)

# vecs slab: every bias / LN gain / token vector, one per 128-lane row.
VEC_PB, VEC_CLS, VEC_POS, VEC_HG, VEC_HB, VEC_HBW = range(6)
VEC_L0 = 6
VEC_PER_LAYER = 7                         # ln1g, ln1b, bo, ln2g, ln2b, b1, b2
NVEC = VEC_L0 + LAYERS * VEC_PER_LAYER    # 20


# ----------------- in-kernel math helpers (all f32) -----------------
def _erf(x):
    # Abramowitz & Stegun 7.1.26 polynomial erf (max abs err ~1.5e-7) for the
    # exact (erf-based) nn.GELU().  TODO(synk): move to tanh-approx / EUP if
    # tolerance allows and the VALU ever saturates after batch scaling.
    a1, a2, a3, a4, a5 = 0.254829592, -0.284496736, 1.421413741, -1.453152027, 1.061405429
    p = 0.3275911
    sgn = jnp.where(x >= 0.0, 1.0, -1.0)
    ax = jnp.abs(x)
    t = 1.0 / (1.0 + p * ax)
    poly = ((((a5 * t + a4) * t + a3) * t + a2) * t + a1) * t
    return sgn * (1.0 - poly * jnp.exp(-ax * ax))


def _gelu(x):
    return 0.5 * x * (1.0 + _erf(x * 0.7071067811865476))


def _layernorm(x, g, b):
    mu = jnp.mean(x, axis=-1, keepdims=True)
    var = jnp.mean((x - mu) ** 2, axis=-1, keepdims=True)
    return (x - mu) * jax.lax.rsqrt(var + EPS) * g + b


# ----------------- fused Pallas kernel (one image per grid step) -----------------
def vit_kernel(patches_ref, w64_ref, wqkv_ref, w128_ref, vecs_ref, out_ref):
    def vec(i, n=DIM):                    # (1, n) view of one packed bias/gain row
        return vecs_ref[i:i + 1, :n]

    # ---- patch embedding (Linear) + cls insert + pos add ----
    pw = w64_ref[PW_OFF:PW_OFF + PATCH_DIM, :]                            # (192, 64)
    emb = jnp.dot(patches_ref[0], pw,
                  preferred_element_type=jnp.float32) + vec(VEC_PB)       # (NPATCH, DIM)

    # scatter patch embeddings into token rows 1..NPATCH via a one-hot matmul;
    # row 0 becomes the cls token, rows SEQ..SEQ_PAD-1 are masked padding.
    r = jax.lax.broadcasted_iota(jnp.int32, (SEQ_PAD, NPATCH), 0)
    c = jax.lax.broadcasted_iota(jnp.int32, (SEQ_PAD, NPATCH), 1)
    scatter = (r == c + 1).astype(jnp.float32)
    x = jnp.dot(scatter, emb, preferred_element_type=jnp.float32)         # (SEQ_PAD, DIM)

    row = jax.lax.broadcasted_iota(jnp.int32, (SEQ_PAD, 1), 0)
    x = jnp.where(row == 0, vec(VEC_CLS), x)
    x = x + vec(VEC_POS)          # (1, 1, dim) pos_embedding broadcast (faithful quirk)

    # additive attention bias: pad keys (columns >= SEQ) are masked off once,
    # reused by every head / layer (no per-head vselect).
    col = jax.lax.broadcasted_iota(jnp.int32, (SEQ_PAD, SEQ_PAD), 1)
    mask_bias = jnp.where(col < SEQ, 0.0, NEG_INF).astype(jnp.float32)

    # ---- transformer layers (static unroll) ----
    for l in range(LAYERS):
        base = VEC_L0 + l * VEC_PER_LAYER

        # PreNorm + multi-head attention
        xn = _layernorm(x, vec(base + 0), vec(base + 1))
        ctx = []
        for h in range(HEADS):            # per-head weights -> operands at lane offset 0
            q = jnp.dot(xn, wqkv_ref[l, h, 0, :, :],
                        preferred_element_type=jnp.float32)   # SCALE folded into Wq
            k = jnp.dot(xn, wqkv_ref[l, h, 1, :, :],
                        preferred_element_type=jnp.float32)
            v = jnp.dot(xn, wqkv_ref[l, h, 2, :, :],
                        preferred_element_type=jnp.float32)
            s = jax.lax.dot_general(q, k, (((1,), (1,)), ((), ())),
                                    preferred_element_type=jnp.float32) + mask_bias
            s = s - jnp.max(s, axis=-1, keepdims=True)
            p = jnp.exp(s)
            p = p / jnp.sum(p, axis=-1, keepdims=True)         # exact softmax (f32 faithful)
            ctx.append(jnp.dot(p, v, preferred_element_type=jnp.float32))
        ctx = jnp.concatenate(ctx, axis=-1)                    # (SEQ_PAD, INNER), stays in vregs

        wo = w64_ref[WO_OFF + l * INNER:WO_OFF + (l + 1) * INNER, :]
        x = x + jnp.dot(ctx, wo, preferred_element_type=jnp.float32) + vec(base + 2)

        # PreNorm + MLP
        xn = _layernorm(x, vec(base + 3), vec(base + 4))
        h1 = _gelu(jnp.dot(xn, w128_ref[l],
                           preferred_element_type=jnp.float32) + vec(base + 5, MLP_DIM))
        w2 = w64_ref[W2_OFF + l * MLP_DIM:W2_OFF + (l + 1) * MLP_DIM, :]
        x = x + jnp.dot(h1, w2, preferred_element_type=jnp.float32) + vec(base + 6)

    # ---- cls pooling + LayerNorm + classifier head (lane-dense output) ----
    xc = _layernorm(x[0:1, :], vec(VEC_HG), vec(VEC_HB))
    out_ref[0] = jnp.dot(xc, w128_ref[LAYERS],
                         preferred_element_type=jnp.float32) + vec(VEC_HBW, NCLS_PAD)


# ----------------- parameter init (deterministic, synthetic, torch-like) -----------------
def init_params(key):
    state = {"key": key}

    def nxt():
        state["key"], sub = jax.random.split(state["key"])
        return sub

    def w(shape, scale=0.02):
        return scale * jax.random.normal(nxt(), shape, jnp.float32)

    return {
        "patch_w": w((PATCH_DIM, DIM)),
        "patch_b": jnp.zeros((DIM,), jnp.float32),
        "cls_token": w((1, 1, DIM), 1.0),        # nn.Parameter(torch.randn(1, 1, dim))
        "pos_embedding": w((1, 1, DIM), 1.0),    # num_patches = img % patch == 0 -> (1,1,dim)
        "head_g": jnp.ones((DIM,), jnp.float32),
        "head_b": jnp.zeros((DIM,), jnp.float32),
        "head_w": w((DIM, NCLASSES)),
        "head_bw": jnp.zeros((NCLASSES,), jnp.float32),
        "wqkv": w((LAYERS, DIM, 3 * INNER)),     # to_qkv (no bias)
        "wo": w((LAYERS, INNER, DIM)),
        "bo": jnp.zeros((LAYERS, DIM), jnp.float32),
        "ln1_g": jnp.ones((LAYERS, DIM), jnp.float32),
        "ln1_b": jnp.zeros((LAYERS, DIM), jnp.float32),
        "ln2_g": jnp.ones((LAYERS, DIM), jnp.float32),
        "ln2_b": jnp.zeros((LAYERS, DIM), jnp.float32),
        "w1": w((LAYERS, DIM, MLP_DIM)),
        "b1": jnp.zeros((LAYERS, MLP_DIM), jnp.float32),
        "w2": w((LAYERS, MLP_DIM, DIM)),
        "b2": jnp.zeros((LAYERS, DIM), jnp.float32),
    }


def pack_params(p):
    """Host-side (one-time) packing of logical params into 4 kernel operands."""
    f32 = jnp.float32

    # w64: all DIM-wide weight matrices stacked along (8-aligned) rows.
    w64 = jnp.concatenate(
        [p["patch_w"]] + [p["wo"][l] for l in range(LAYERS)]
        + [p["w2"][l] for l in range(LAYERS)], axis=0).astype(f32)
    assert w64.shape == (W64_ROWS, DIM)

    # wqkv: per-head q/k/v slabs, attention scale folded into q.
    layers = []
    for l in range(LAYERS):
        W = p["wqkv"][l]
        heads = []
        for h in range(HEADS):
            lo = h * DIM_HEAD
            wq = W[:, lo:lo + DIM_HEAD] * SCALE
            wk = W[:, INNER + lo:INNER + lo + DIM_HEAD]
            wv = W[:, 2 * INNER + lo:2 * INNER + lo + DIM_HEAD]
            heads.append(jnp.stack([wq, wk, wv], axis=0))
        layers.append(jnp.stack(heads, axis=0))
    wqkv = jnp.stack(layers, axis=0).astype(f32)      # (LAYERS, HEADS, 3, DIM, DIM_HEAD)

    # w128: MLP fc1 weights + lane-padded classifier weight (all (DIM, 128)).
    head_w = jnp.zeros((DIM, NCLS_PAD), f32).at[:, :NCLASSES].set(p["head_w"])
    w128 = jnp.concatenate([p["w1"], head_w[None]], axis=0).astype(f32)

    # vecs: every bias / gain / token vector, one per 128-lane row.
    def row(v):
        v = jnp.asarray(v, f32).reshape(1, -1)
        return jnp.pad(v, ((0, 0), (0, 128 - v.shape[1])))

    rows = [row(p["patch_b"]), row(p["cls_token"]), row(p["pos_embedding"]),
            row(p["head_g"]), row(p["head_b"]),
            row(jnp.zeros((NCLS_PAD,), f32).at[:NCLASSES].set(p["head_bw"]))]
    for l in range(LAYERS):
        rows += [row(p["ln1_g"][l]), row(p["ln1_b"][l]), row(p["bo"][l]),
                 row(p["ln2_g"][l]), row(p["ln2_b"][l]),
                 row(p["b1"][l]), row(p["b2"][l])]
    vecs = jnp.concatenate(rows, axis=0)
    assert vecs.shape == (NVEC, 128)

    return {"w64": w64, "wqkv": wqkv, "w128": w128, "vecs": vecs}


# ----------------- full forward (one pallas_call) -----------------
def vit_forward(img, packed):
    B, C, H, W = img.shape
    hh, ww = H // PATCH, W // PATCH
    assert hh * ww == NPATCH and C == CHANNELS
    # einops: 'b c (h p1) (w p2) -> b (h w) (p1 p2 c)'  (layout glue only)
    x = img.reshape(B, C, hh, PATCH, ww, PATCH)
    patches = x.transpose(0, 2, 4, 3, 5, 1).reshape(B, NPATCH, PATCH_DIM)

    # TODO(synk): nn.Dropout(emb_dropout) / attention / MLP dropouts are identity
    # here (eval-mode semantics); no RNG masking applied.
    flops = B * (
        2 * NPATCH * PATCH_DIM * DIM + 2 * SEQ_PAD * NPATCH * DIM
        + LAYERS * (2 * SEQ_PAD * DIM * 3 * INNER
                    + HEADS * 4 * SEQ_PAD * SEQ_PAD * DIM_HEAD
                    + 2 * SEQ_PAD * INNER * DIM
                    + 4 * SEQ_PAD * DIM * MLP_DIM)
        + 2 * DIM * NCLS_PAD)
    transcendentals = B * LAYERS * (HEADS * SEQ_PAD * SEQ_PAD + 2 * SEQ_PAD * MLP_DIM)
    bytes_accessed = 4 * (B * NPATCH * PATCH_DIM + W64_ROWS * DIM
                          + LAYERS * HEADS * 3 * DIM * DIM_HEAD
                          + (LAYERS + 1) * DIM * MLP_DIM + NVEC * 128 + B * NCLS_PAD)

    out = pl.pallas_call(
        vit_kernel,
        grid=(B,),
        in_specs=[
            pl.BlockSpec((1, NPATCH, PATCH_DIM), lambda b: (b, 0, 0)),
            pl.BlockSpec((W64_ROWS, DIM), lambda b: (0, 0)),
            pl.BlockSpec((LAYERS, HEADS, 3, DIM, DIM_HEAD), lambda b: (0, 0, 0, 0, 0)),
            pl.BlockSpec((LAYERS + 1, DIM, MLP_DIM), lambda b: (0, 0, 0)),
            pl.BlockSpec((NVEC, 128), lambda b: (0, 0)),
        ],
        out_specs=pl.BlockSpec((1, 1, NCLS_PAD), lambda b: (b, 0, 0)),
        out_shape=jax.ShapeDtypeStruct((B, 1, NCLS_PAD), jnp.float32),
        compiler_params=pltpu.CompilerParams(dimension_semantics=("parallel",)),
        cost_estimate=pl.CostEstimate(flops=flops, transcendentals=transcendentals,
                                      bytes_accessed=bytes_accessed),
    )(patches, packed["w64"], packed["wqkv"], packed["w128"], packed["vecs"])

    return out[:, 0, :NCLASSES]           # strip lane padding (pool == 'cls' logits)


if __name__ == "__main__":
    key = jax.random.PRNGKey(0)
    kparam, kimg = jax.random.split(key)
    params = init_params(kparam)
    packed = pack_params(params)          # host-side, one-time packing
    img = jax.random.normal(kimg, (2, CHANNELS, IMG, IMG), jnp.float32)

    fwd = jax.jit(vit_forward)
    out = jax.block_until_ready(fwd(img, packed))
    assert out.shape == (2, NCLASSES), out.shape
    assert bool(jnp.all(jnp.isfinite(out)))
    print("KERNEL_OK")
</pallas_src>

<mosaic_0001>
module attributes {stable_mosaic.version = 11 : i64} {
  func.func @vit_kernel(%arg0: i32, %arg1: memref<1x4x192xf32, #tpu.memory_space<vmem>>, %arg2: memref<576x64xf32, #tpu.memory_space<vmem>>, %arg3: memref<2x4x3x64x16xf32, #tpu.memory_space<vmem>>, %arg4: memref<3x64x128xf32, #tpu.memory_space<vmem>>, %arg5: memref<20x128xf32, #tpu.memory_space<vmem>>, %arg6: memref<1x1x128xf32, #tpu.memory_space<vmem>>) attributes {dimension_semantics = [#tpu.dimension_semantics<parallel>], iteration_bounds = array<i64: 2>, scalar_prefetch = 0 : i64, scratch_operands = 0 : i64, tpu.core_type = #tpu.core_type<tc>, window_params = [{transform_indices = @transform_0, window_bounds = array<i64: 1, 4, 192>}, {pipeline_mode = #tpu.pipeline_mode<synchronous>, transform_indices = @transform_1, window_bounds = array<i64: 576, 64>}, {pipeline_mode = #tpu.pipeline_mode<synchronous>, transform_indices = @transform_2, window_bounds = array<i64: 2, 4, 3, 64, 16>}, {pipeline_mode = #tpu.pipeline_mode<synchronous>, transform_indices = @transform_3, window_bounds = array<i64: 3, 64, 128>}, {pipeline_mode = #tpu.pipeline_mode<synchronous>, transform_indices = @transform_4, window_bounds = array<i64: 20, 128>}, {transform_indices = @transform_5, window_bounds = array<i64: 1, 1, 128>}]} {
    %c0 = arith.constant 0 : index
    %c0_0 = arith.constant 0 : index
    %0 = vector.load %arg2[%c0, %c0_0] : memref<576x64xf32, #tpu.memory_space<vmem>>, vector<192x64xf32>
    %c0_1 = arith.constant 0 : index
    %c0_2 = arith.constant 0 : index
    %c0_3 = arith.constant 0 : index
    %1 = vector.load %arg1[%c0_1, %c0_2, %c0_3] : memref<1x4x192xf32, #tpu.memory_space<vmem>>, vector<1x4x192xf32>
    %2 = vector.shape_cast %1 : vector<1x4x192xf32> to vector<4x192xf32>
    %cst = arith.constant dense<0.000000e+00> : vector<4x64xf32>
    %3 = tpu.matmul %2, %0, %cst {dimension_numbers = #tpu.dot_dimension_numbers<[1], [0], [0], [1], [0, 0, 1, 1], [], []>} : vector<4x192xf32>, vector<192x64xf32>, vector<4x64xf32> -> vector<4x64xf32>
    %c0_4 = arith.constant 0 : index
    %c0_5 = arith.constant 0 : index
    %4 = vector.load %arg5[%c0_4, %c0_5] : memref<20x128xf32, #tpu.memory_space<vmem>>, vector<1x64xf32>
    %5 = vector.broadcast %4 : vector<1x64xf32> to vector<4x64xf32>
    %6 = arith.addf %3, %5 : vector<4x64xf32>
    %7 = tpu.iota {dimensions = array<i32: 0>} : vector<8x4xi32>
    %8 = tpu.iota {dimensions = array<i32: 1>} : vector<8x4xi32>
    %c1_i32 = arith.constant 1 : i32
    %9 = vector.broadcast %c1_i32 : i32 to vector<8x4xi32>
    %10 = arith.addi %8, %9 : vector<8x4xi32>
    %11 = arith.cmpi eq, %7, %10 : vector<8x4xi32>
    %12 = arith.extui %11 : vector<8x4xi1> to vector<8x4xi32>
    %13 = arith.sitofp %12 : vector<8x4xi32> to vector<8x4xf32>
    %cst_6 = arith.constant dense<0.000000e+00> : vector<8x64xf32>
    %14 = tpu.matmul %13, %6, %cst_6 {dimension_numbers = #tpu.dot_dimension_numbers<[1], [0], [0], [1], [0, 0, 1, 1], [], []>} : vector<8x4xf32>, vector<4x64xf32>, vector<8x64xf32> -> vector<8x64xf32>
    %15 = tpu.iota {dimensions = array<i32: 0>} : vector<8x1xi32>
    %c0_i32 = arith.constant 0 : i32
    %16 = vector.broadcast %c0_i32 : i32 to vector<8x1xi32>
    %17 = arith.cmpi eq, %15, %16 : vector<8x1xi32>
    %c1 = arith.constant 1 : index
    %c0_7 = arith.constant 0 : index
    %18 = vector.load %arg5[%c1, %c0_7] : memref<20x128xf32, #tpu.memory_space<vmem>>, vector<1x64xf32>
    %19 = vector.shape_cast %17 : vector<8x1xi1> to vector<8x1xi1>
    %20 = vector.broadcast %19 : vector<8x1xi1> to vector<8x64xi1>
    %21 = vector.shape_cast %18 : vector<1x64xf32> to vector<1x64xf32>
    %22 = vector.broadcast %21 : vector<1x64xf32> to vector<8x64xf32>
    %23 = arith.select %20, %22, %14 : vector<8x64xi1>, vector<8x64xf32>
    %c2 = arith.constant 2 : index
    %c0_8 = arith.constant 0 : index
    %24 = vector.load %arg5[%c2, %c0_8] : memref<20x128xf32, #tpu.memory_space<vmem>>, vector<1x64xf32>
    %25 = vector.broadcast %24 : vector<1x64xf32> to vector<8x64xf32>
    %26 = arith.addf %23, %25 : vector<8x64xf32>
    %27 = tpu.iota {dimensions = array<i32: 1>} : vector<8x8xi32>
    %c5_i32 = arith.constant 5 : i32
    %28 = vector.broadcast %c5_i32 : i32 to vector<8x8xi32>
    %29 = arith.cmpi slt, %27, %28 : vector<8x8xi32>
    %cst_9 = arith.constant 0.000000e+00 : f32
    %cst_10 = arith.constant -1.000000e+30 : f32
    %30 = vector.broadcast %cst_9 : f32 to vector<8x8xf32>
    %31 = vector.broadcast %cst_10 : f32 to vector<8x8xf32>
    %32 = arith.select %29, %30, %31 : vector<8x8xi1>, vector<8x8xf32>
    %c6 = arith.constant 6 : index
    %c0_11 = arith.constant 0 : index
    %33 = vector.load %arg5[%c6, %c0_11] : memref<20x128xf32, #tpu.memory_space<vmem>>, vector<1x64xf32>
    %c7 = arith.constant 7 : index
    %c0_12 = arith.constant 0 : index
    %34 = vector.load %arg5[%c7, %c0_12] : memref<20x128xf32, #tpu.memory_space<vmem>>, vector<1x64xf32>
    %cst_13 = arith.constant dense<0.000000e+00> : vector<8xf32>
    %35 = vector.multi_reduction <add>, %26, %cst_13 [1] : vector<8x64xf32> to vector<8xf32>
    %36 = vector.shape_cast %35 : vector<8xf32> to vector<8x1xf32>
    %cst_14 = arith.constant 6.400000e+01 : f32
    %37 = vector.broadcast %cst_14 : f32 to vector<8x1xf32>
    %38 = arith.divf %36, %37 : vector<8x1xf32>
    %39 = vector.broadcast %38 : vector<8x1xf32> to vector<8x64xf32>
    %40 = arith.subf %26, %39 : vector<8x64xf32>
    %41 = arith.mulf %40, %40 : vector<8x64xf32>
    %cst_15 = arith.constant dense<0.000000e+00> : vector<8xf32>
    %42 = vector.multi_reduction <add>, %41, %cst_15 [1] : vector<8x64xf32> to vector<8xf32>
    %43 = vector.shape_cast %42 : vector<8xf32> to vector<8x1xf32>
    %cst_16 = arith.constant 6.400000e+01 : f32
    %44 = vector.broadcast %cst_16 : f32 to vector<8x1xf32>
    %45 = arith.divf %43, %44 : vector<8x1xf32>
    %46 = vector.broadcast %38 : vector<8x1xf32> to vector<8x64xf32>
    %47 = arith.subf %26, %46 : vector<8x64xf32>
    %cst_17 = arith.constant 9.99999974E-6 : f32
    %48 = vector.broadcast %cst_17 : f32 to vector<8x1xf32>
    %49 = arith.addf %45, %48 : vector<8x1xf32>
    %50 = math.rsqrt %49 : vector<8x1xf32>
    %51 = vector.broadcast %50 : vector<8x1xf32> to vector<8x64xf32>
    %52 = arith.mulf %47, %51 : vector<8x64xf32>
    %53 = vector.broadcast %33 : vector<1x64xf32> to vector<8x64xf32>
    %54 = arith.mulf %52, %53 : vector<8x64xf32>
    %55 = vector.broadcast %34 : vector<1x64xf32> to vector<8x64xf32>
    %56 = arith.addf %54, %55 : vector<8x64xf32>
    %c0_18 = arith.constant 0 : index
    %c0_19 = arith.constant 0 : index
    %c0_20 = arith.constant 0 : index
    %c0_21 = arith.constant 0 : index
    %c0_22 = arith.constant 0 : index
    %57 = vector.load %arg3[%c0_18, %c0_19, %c0_20, %c0_21, %c0_22] : memref<2x4x3x64x16xf32, #tpu.memory_space<vmem>>, vector<1x1x1x64x16xf32>
    %58 = vector.shape_cast %57 : vector<1x1x1x64x16xf32> to vector<64x16xf32>
    %cst_23 = arith.constant dense<0.000000e+00> : vector<8x16xf32>
    %59 = tpu.matmul %56, %58, %cst_23 {dimension_numbers = #tpu.dot_dimension_numbers<[1], [0], [0], [1], [0, 0, 1, 1], [], []>} : vector<8x64xf32>, vector<64x16xf32>, vector<8x16xf32> -> vector<8x16xf32>
    %c0_24 = arith.constant 0 : index
    %c0_25 = arith.constant 0 : index
    %c1_26 = arith.constant 1 : index
    %c0_27 = arith.constant 0 : index
    %c0_28 = arith.constant 0 : index
    %60 = vector.load %arg3[%c0_24, %c0_25, %c1_26, %c0_27, %c0_28] : memref<2x4x3x64x16xf32, #tpu.memory_space<vmem>>, vector<1x1x1x64x16xf32>
    %61 = vector.shape_cast %60 : vector<1x1x1x64x16xf32> to vector<64x16xf32>
    %cst_29 = arith.constant dense<0.000000e+00> : vector<8x16xf32>
    %62 = tpu.matmul %56, %61, %cst_29 {dimension_numbers = #tpu.dot_dimension_numbers<[1], [0], [0], [1], [0, 0, 1, 1], [], []>} : vector<8x64xf32>, vector<64x16xf32>, vector<8x16xf32> -> vector<8x16xf32>
    %c0_30 = arith.constant 0 : index
    %c0_31 = arith.constant 0 : index
    %c2_32 = arith.constant 2 : index
    %c0_33 = arith.constant 0 : index
    %c0_34 = arith.constant 0 : index
    %63 = vector.load %arg3[%c0_30, %c0_31, %c2_32, %c0_33, %c0_34] : memref<2x4x3x64x16xf32, #tpu.memory_space<vmem>>, vector<1x1x1x64x16xf32>
    %64 = vector.shape_cast %63 : vector<1x1x1x64x16xf32> to vector<64x16xf32>
    %cst_35 = arith.constant dense<0.000000e+00> : vector<8x16xf32>
    %65 = tpu.matmul %56, %64, %cst_35 {dimension_numbers = #tpu.dot_dimension_numbers<[1], [0], [0], [1], [0, 0, 1, 1], [], []>} : vector<8x64xf32>, vector<64x16xf32>, vector<8x16xf32> -> vector<8x16xf32>
    %cst_36 = arith.constant dense<0.000000e+00> : vector<8x8xf32>
    %66 = tpu.matmul %59, %62, %cst_36 {dimension_numbers = #tpu.dot_dimension_numbers<[1], [1], [0], [0], [0, 0, 1, 0], [], []>} : vector<8x16xf32>, vector<8x16xf32>, vector<8x8xf32> -> vector<8x8xf32>
    %67 = arith.addf %66, %32 : vector<8x8xf32>
    %cst_37 = arith.constant dense<0xFF800000> : vector<8xf32>
    %68 = vector.multi_reduction <maximumf>, %67, %cst_37 [1] : vector<8x8xf32> to vector<8xf32>
    %69 = vector.shape_cast %68 : vector<8xf32> to vector<8x1xf32>
    %70 = vector.broadcast %69 : vector<8x1xf32> to vector<8x8xf32>
    %71 = arith.subf %67, %70 : vector<8x8xf32>
    %72 = math.exp %71 : vector<8x8xf32>
    %cst_38 = arith.constant dense<0.000000e+00> : vector<8xf32>
    %73 = vector.multi_reduction <add>, %72, %cst_38 [1] : vector<8x8xf32> to vector<8xf32>
    %74 = vector.shape_cast %73 : vector<8xf32> to vector<8x1xf32>
    %75 = vector.broadcast %74 : vector<8x1xf32> to vector<8x8xf32>
    %76 = arith.divf %72, %75 : vector<8x8xf32>
    %cst_39 = arith.constant dense<0.000000e+00> : vector<8x16xf32>
    %77 = tpu.matmul %76, %65, %cst_39 {dimension_numbers = #tpu.dot_dimension_numbers<[1], [0], [0], [1], [0, 0, 1, 1], [], []>} : vector<8x8xf32>, vector<8x16xf32>, vector<8x16xf32> -> vector<8x16xf32>
    %c0_40 = arith.constant 0 : index
    %c1_41 = arith.constant 1 : index
    %c0_42 = arith.constant 0 : index
    %c0_43 = arith.constant 0 : index
    %c0_44 = arith.constant 0 : index
    %78 = vector.load %arg3[%c0_40, %c1_41, %c0_42, %c0_43, %c0_44] : memref<2x4x3x64x16xf32, #tpu.memory_space<vmem>>, vector<1x1x1x64x16xf32>
    %79 = vector.shape_cast %78 : vector<1x1x1x64x16xf32> to vector<64x16xf32>
    %cst_45 = arith.constant dense<0.000000e+00> : vector<8x16xf32>
    %80 = tpu.matmul %56, %79, %cst_45 {dimension_numbers = #tpu.dot_dimension_numbers<[1], [0], [0], [1], [0, 0, 1, 1], [], []>} : vector<8x64xf32>, vector<64x16xf32>, vector<8x16xf32> -> vector<8x16xf32>
    %c0_46 = arith.constant 0 : index
    %c1_47 = arith.constant 1 : index
    %c1_48 = arith.constant 1 : index
    %c0_49 = arith.constant 0 : index
    %c0_50 = arith.constant 0 : index
    %81 = vector.load %arg3[%c0_46, %c1_47, %c1_48, %c0_49, %c0_50] : memref<2x4x3x64x16xf32, #tpu.memory_space<vmem>>, vector<1x1x1x64x16xf32>
    %82 = vector.shape_cast %81 : vector<1x1x1x64x16xf32> to vector<64x16xf32>
    %cst_51 = arith.constant dense<0.000000e+00> : vector<8x16xf32>
    %83 = tpu.matmul %56, %82, %cst_51 {dimension_numbers = #tpu.dot_dimension_numbers<[1], [0], [0], [1], [0, 0, 1, 1], [], []>} : vector<8x64xf32>, vector<64x16xf32>, vector<8x16xf32> -> vector<8x16xf32>
    %c0_52 = arith.constant 0 : index
    %c1_53 = arith.constant 1 : index
    %c2_54 = arith.constant 2 : index
    %c0_55 = arith.constant 0 : index
    %c0_56 = arith.constant 0 : index
    %84 = vector.load %arg3[%c0_52, %c1_53, %c2_54, %c0_55, %c0_56] : memref<2x4x3x64x16xf32, #tpu.memory_space<vmem>>, vector<1x1x1x64x16xf32>
    %85 = vector.shape_cast %84 : vector<1x1x1x64x16xf32> to vector<64x16xf32>
    %cst_57 = arith.constant dense<0.000000e+00> : vector<8x16xf32>
    %86 = tpu.matmul %56, %85, %cst_57 {dimension_numbers = #tpu.dot_dimension_numbers<[1], [0], [0], [1], [0, 0, 1, 1], [], []>} : vector<8x64xf32>, vector<64x16xf32>, vector<8x16xf32> -> vector<8x16xf32>
    %cst_58 = arith.constant dense<0.000000e+00> : vector<8x8xf32>
    %87 = tpu.matmul %80, %83, %cst_58 {dimension_numbers = #tpu.dot_dimension_numbers<[1], [1], [0], [0], [0, 0, 1, 0], [], []>} : vector<8x16xf32>, vector<8x16xf32>, vector<8x8xf32> -> vector<8x8xf32>
    %88 = arith.addf %87, %32 : vector<8x8xf32>
    %cst_59 = arith.constant dense<0xFF800000> : vector<8xf32>
    %89 = vector.multi_reduction <maximumf>, %88, %cst_59 [1] : vector<8x8xf32> to vector<8xf32>
    %90 = vector.shape_cast %89 : vector<8xf32> to vector<8x1xf32>
    %91 = vector.broadcast %90 : vector<8x1xf32> to vector<8x8xf32>
    %92 = arith.subf %88, %91 : vector<8x8xf32>
    %93 = math.exp %92 : vector<8x8xf32>
    %cst_60 = arith.constant dense<0.000000e+00> : vector<8xf32>
    %94 = vector.multi_reduction <add>, %93, %cst_60 [1] : vector<8x8xf32> to vector<8xf32>
    %95 = vector.shape_cast %94 : vector<8xf32> to vector<8x1xf32>
    %96 = vector.broadcast %95 : vector<8x1xf32> to vector<8x8xf32>
    %97 = arith.divf %93, %96 : vector<8x8xf32>
    %cst_61 = arith.constant dense<0.000000e+00> : vector<8x16xf32>
    %98 = tpu.matmul %97, %86, %cst_61 {dimension_numbers = #tpu.dot_dimension_numbers<[1], [0], [0], [1], [0, 0, 1, 1], [], []>} : vector<8x8xf32>, vector<8x16xf32>, vector<8x16xf32> -> vector<8x16xf32>
    %c0_62 = arith.constant 0 : index
    %c2_63 = arith.constant 2 : index
    %c0_64 = arith.constant 0 : index
    %c0_65 = arith.constant 0 : index
    %c0_66 = arith.constant 0 : index
    %99 = vector.load %arg3[%c0_62, %c2_63, %c0_64, %c0_65, %c0_66] : memref<2x4x3x64x16xf32, #tpu.memory_space<vmem>>, vector<1x1x1x64x16xf32>
    %100 = vector.shape_cast %99 : vector<1x1x1x64x16xf32> to vector<64x16xf32>
    %cst_67 = arith.constant dense<0.000000e+00> : vector<8x16xf32>
    %101 = tpu.matmul %56, %100, %cst_67 {dimension_numbers = #tpu.dot_dimension_numbers<[1], [0], [0], [1], [0, 0, 1, 1], [], []>} : vector<8x64xf32>, vector<64x16xf32>, vector<8x16xf32> -> vector<8x16xf32>
    %c0_68 = arith.constant 0 : index
    %c2_69 = arith.constant 2 : index
    %c1_70 = arith.constant 1 : index
    %c0_71 = arith.constant 0 : index
    %c0_72 = arith.constant 0 : index
    %102 = vector.load %arg3[%c0_68, %c2_69, %c1_70, %c0_71, %c0_72] : memref<2x4x3x64x16xf32, #tpu.memory_space<vmem>>, vector<1x1x1x64x16xf32>
    %103 = vector.shape_cast %102 : vector<1x1x1x64x16xf32> to vector<64x16xf32>
    %cst_73 = arith.constant dense<0.000000e+00> : vector<8x16xf32>
    %104 = tpu.matmul %56, %103, %cst_73 {dimension_numbers = #tpu.dot_dimension_numbers<[1], [0], [0], [1], [0, 0, 1, 1], [], []>} : vector<8x64xf32>, vector<64x16xf32>, vector<8x16xf32> -> vector<8x16xf32>
    %c0_74 = arith.constant 0 : index
    %c2_75 = arith.constant 2 : index
    %c2_76 = arith.constant 2 : index
    %c0_77 = arith.constant 0 : index
    %c0_78 = arith.constant 0 : index
    %105 = vector.load %arg3[%c0_74, %c2_75, %c2_76, %c0_77, %c0_78] : memref<2x4x3x64x16xf32, #tpu.memory_space<vmem>>, vector<1x1x1x64x16xf32>
    %106 = vector.shape_cast %105 : vector<1x1x1x64x16xf32> to vector<64x16xf32>
    %cst_79 = arith.constant dense<0.000000e+00> : vector<8x16xf32>
    %107 = tpu.matmul %56, %106, %cst_79 {dimension_numbers = #tpu.dot_dimension_numbers<[1], [0], [0], [1], [0, 0, 1, 1], [], []>} : vector<8x64xf32>, vector<64x16xf32>, vector<8x16xf32> -> vector<8x16xf32>
    %cst_80 = arith.constant dense<0.000000e+00> : vector<8x8xf32>
    %108 = tpu.matmul %101, %104, %cst_80 {dimension_numbers = #tpu.dot_dimension_numbers<[1], [1], [0], [0], [0, 0, 1, 0], [], []>} : vector<8x16xf32>, vector<8x16xf32>, vector<8x8xf32> -> vector<8x8xf32>
    %109 = arith.addf %108, %32 : vector<8x8xf32>
    %cst_81 = arith.constant dense<0xFF800000> : vector<8xf32>
    %110 = vector.multi_reduction <maximumf>, %109, %cst_81 [1] : vector<8x8xf32> to vector<8xf32>
    %111 = vector.shape_cast %110 : vector<8xf32> to vector<8x1xf32>
    %112 = vector.broadcast %111 : vector<8x1xf32> to vector<8x8xf32>
    %113 = arith.subf %109, %112 : vector<8x8xf32>
    %114 = math.exp %113 : vector<8x8xf32>
    %cst_82 = arith.constant dense<0.000000e+00> : vector<8xf32>
    %115 = vector.multi_reduction <add>, %114, %cst_82 [1] : vector<8x8xf32> to vector<8xf32>
    %116 = vector.shape_cast %115 : vector<8xf32> to vector<8x1xf32>
    %117 = vector.broadcast %116 : vector<8x1xf32> to vector<8x8xf32>
    %118 = arith.divf %114, %117 : vector<8x8xf32>
    %cst_83 = arith.constant dense<0.000000e+00> : vector<8x16xf32>
    %119 = tpu.matmul %118, %107, %cst_83 {dimension_numbers = #tpu.dot_dimension_numbers<[1], [0], [0], [1], [0, 0, 1, 1], [], []>} : vector<8x8xf32>, vector<8x16xf32>, vector<8x16xf32> -> vector<8x16xf32>
    %c0_84 = arith.constant 0 : index
    %c3 = arith.constant 3 : index
    %c0_85 = arith.constant 0 : index
    %c0_86 = arith.constant 0 : index
    %c0_87 = arith.constant 0 : index
    %120 = vector.load %arg3[%c0_84, %c3, %c0_85, %c0_86, %c0_87] : memref<2x4x3x64x16xf32, #tpu.memory_space<vmem>>, vector<1x1x1x64x16xf32>
    %121 = vector.shape_cast %120 : vector<1x1x1x64x16xf32> to vector<64x16xf32>
    %cst_88 = arith.constant dense<0.000000e+00> : vector<8x16xf32>
    %122 = tpu.matmul %56, %121, %cst_88 {dimension_numbers = #tpu.dot_dimension_numbers<[1], [0], [0], [1], [0, 0, 1, 1], [], []>} : vector<8x64xf32>, vector<64x16xf32>, vector<8x16xf32> -> vector<8x16xf32>
    %c0_89 = arith.constant 0 : index
    %c3_90 = arith.constant 3 : index
    %c1_91 = arith.constant 1 : index
    %c0_92 = arith.constant 0 : index
    %c0_93 = arith.constant 0 : index
    %123 = vector.load %arg3[%c0_89, %c3_90, %c1_91, %c0_92, %c0_93] : memref<2x4x3x64x16xf32, #tpu.memory_space<vmem>>, vector<1x1x1x64x16xf32>
    %124 = vector.shape_cast %123 : vector<1x1x1x64x16xf32> to vector<64x16xf32>
    %cst_94 = arith.constant dense<0.000000e+00> : vector<8x16xf32>
    %125 = tpu.matmul %56, %124, %cst_94 {dimension_numbers = #tpu.dot_dimension_numbers<[1], [0], [0], [1], [0, 0, 1, 1], [], []>} : vector<8x64xf32>, vector<64x16xf32>, vector<8x16xf32> -> vector<8x16xf32>
    %c0_95 = arith.constant 0 : index
    %c3_96 = arith.constant 3 : index
    %c2_97 = arith.constant 2 : index
    %c0_98 = arith.constant 0 : index
    %c0_99 = arith.constant 0 : index
    %126 = vector.load %arg3[%c0_95, %c3_96, %c2_97, %c0_98, %c0_99] : memref<2x4x3x64x16xf32, #tpu.memory_space<vmem>>, vector<1x1x1x64x16xf32>
    %127 = vector.shape_cast %126 : vector<1x1x1x64x16xf32> to vector<64x16xf32>
    %cst_100 = arith.constant dense<0.000000e+00> : vector<8x16xf32>
    %128 = tpu.matmul %56, %127, %cst_100 {dimension_numbers = #tpu.dot_dimension_numbers<[1], [0], [0], [1], [0, 0, 1, 1], [], []>} : vector<8x64xf32>, vector<64x16xf32>, vector<8x16xf32> -> vector<8x16xf32>
    %cst_101 = arith.constant dense<0.000000e+00> : vector<8x8xf32>
    %129 = tpu.matmul %122, %125, %cst_101 {dimension_numbers = #tpu.dot_dimension_numbers<[1], [1], [0], [0], [0, 0, 1, 0], [], []>} : vector<8x16xf32>, vector<8x16xf32>, vector<8x8xf32> -> vector<8x8xf32>
    %130 = arith.addf %129, %32 : vector<8x8xf32>
    %cst_102 = arith.constant dense<0xFF800000> : vector<8xf32>
    %131 = vector.multi_reduction <maximumf>, %130, %cst_102 [1] : vector<8x8xf32> to vector<8xf32>
    %132 = vector.shape_cast %131 : vector<8xf32> to vector<8x1xf32>
    %133 = vector.broadcast %132 : vector<8x1xf32> to vector<8x8xf32>
    %134 = arith.subf %130, %133 : vector<8x8xf32>
    %135 = math.exp %134 : vector<8x8xf32>
    %cst_103 = arith.constant dense<0.000000e+00> : vector<8xf32>
    %136 = vector.multi_reduction <add>, %135, %cst_103 [1] : vector<8x8xf32> to vector<8xf32>
    %137 = vector.shape_cast %136 : vector<8xf32> to vector<8x1xf32>
    %138 = vector.broadcast %137 : vector<8x1xf32> to vector<8x8xf32>
    %139 = arith.divf %135, %138 : vector<8x8xf32>
    %cst_104 = arith.constant dense<0.000000e+00> : vector<8x16xf32>
    %140 = tpu.matmul %139, %128, %cst_104 {dimension_numbers = #tpu.dot_dimension_numbers<[1], [0], [0], [1], [0, 0, 1, 1], [], []>} : vector<8x8xf32>, vector<8x16xf32>, vector<8x16xf32> -> vector<8x16xf32>
    %141 = tpu.concatenate %77, %98, %119, %140 in 1 : vector<8x16xf32>, vector<8x16xf32>, vector<8x16xf32>, vector<8x16xf32> -> vector<8x64xf32>
    %c192 = arith.constant 192 : index
    %c0_105 = arith.constant 0 : index
    %142 = vector.load %arg2[%c192, %c0_105] : memref<576x64xf32, #tpu.memory_space<vmem>>, vector<64x64xf32>
    %cst_106 = arith.constant dense<0.000000e+00> : vector<8x64xf32>
    %143 = tpu.matmul %141, %142, %cst_106 {dimension_numbers = #tpu.dot_dimension_numbers<[1], [0], [0], [1], [0, 0, 1, 1], [], []>} : vector<8x64xf32>, vector<64x64xf32>, vector<8x64xf32> -> vector<8x64xf32>
    %144 = arith.addf %26, %143 : vector<8x64xf32>
    %c8 = arith.constant 8 : index
    %c0_107 = arith.constant 0 : index
    %145 = vector.load %arg5[%c8, %c0_107] : memref<20x128xf32, #tpu.memory_space<vmem>>, vector<1x64xf32>
    %146 = vector.broadcast %145 : vector<1x64xf32> to vector<8x64xf32>
    %147 = arith.addf %144, %146 : vector<8x64xf32>
    %c9 = arith.constant 9 : index
    %c0_108 = arith.constant 0 : index
    %148 = vector.load %arg5[%c9, %c0_108] : memref<20x128xf32, #tpu.memory_space<vmem>>, vector<1x64xf32>
    %c10 = arith.constant 10 : index
    %c0_109 = arith.constant 0 : index
    %149 = vector.load %arg5[%c10, %c0_109] : memref<20x128xf32, #tpu.memory_space<vmem>>, vector<1x64xf32>
    %cst_110 = arith.constant dense<0.000000e+00> : vector<8xf32>
    %150 = vector.multi_reduction <add>, %147, %cst_110 [1] : vector<8x64xf32> to vector<8xf32>
    %151 = vector.shape_cast %150 : vector<8xf32> to vector<8x1xf32>
    %cst_111 = arith.constant 6.400000e+01 : f32
    %152 = vector.broadcast %cst_111 : f32 to vector<8x1xf32>
    %153 = arith.divf %151, %152 : vector<8x1xf32>
    %154 = vector.broadcast %153 : vector<8x1xf32> to vector<8x64xf32>
    %155 = arith.subf %147, %154 : vector<8x64xf32>
    %156 = arith.mulf %155, %155 : vector<8x64xf32>
    %cst_112 = arith.constant dense<0.000000e+00> : vector<8xf32>
    %157 = vector.multi_reduction <add>, %156, %cst_112 [1] : vector<8x64xf32> to vector<8xf32>
    %158 = vector.shape_cast %157 : vector<8xf32> to vector<8x1xf32>
    %cst_113 = arith.constant 6.400000e+01 : f32
    %159 = vector.broadcast %cst_113 : f32 to vector<8x1xf32>
    %160 = arith.divf %158, %159 : vector<8x1xf32>
    %161 = vector.broadcast %153 : vector<8x1xf32> to vector<8x64xf32>
    %162 = arith.subf %147, %161 : vector<8x64xf32>
    %cst_114 = arith.constant 9.99999974E-6 : f32
    %163 = vector.broadcast %cst_114 : f32 to vector<8x1xf32>
    %164 = arith.addf %160, %163 : vector<8x1xf32>
    %165 = math.rsqrt %164 : vector<8x1xf32>
    %166 = vector.broadcast %165 : vector<8x1xf32> to vector<8x64xf32>
    %167 = arith.mulf %162, %166 : vector<8x64xf32>
    %168 = vector.broadcast %148 : vector<1x64xf32> to vector<8x64xf32>
    %169 = arith.mulf %167, %168 : vector<8x64xf32>
    %170 = vector.broadcast %149 : vector<1x64xf32> to vector<8x64xf32>
    %171 = arith.addf %169, %170 : vector<8x64xf32>
    %c0_115 = arith.constant 0 : index
    %c0_116 = arith.constant 0 : index
    %c0_117 = arith.constant 0 : index
    %172 = vector.load %arg4[%c0_115, %c0_116, %c0_117] : memref<3x64x128xf32, #tpu.memory_space<vmem>>, vector<1x64x128xf32>
    %173 = vector.shape_cast %172 : vector<1x64x128xf32> to vector<64x128xf32>
    %cst_118 = arith.constant dense<0.000000e+00> : vector<8x128xf32>
    %174 = tpu.matmul %171, %173, %cst_118 {dimension_numbers = #tpu.dot_dimension_numbers<[1], [0], [0], [1], [0, 0, 1, 1], [], []>} : vector<8x64xf32>, vector<64x128xf32>, vector<8x128xf32> -> vector<8x128xf32>
    %c11 = arith.constant 11 : index
    %c0_119 = arith.constant 0 : index
    %175 = vector.load %arg5[%c11, %c0_119] : memref<20x128xf32, #tpu.memory_space<vmem>>, vector<1x128xf32>
    %176 = vector.broadcast %175 : vector<1x128xf32> to vector<8x128xf32>
    %177 = arith.addf %174, %176 : vector<8x128xf32>
    %cst_120 = arith.constant 5.000000e-01 : f32
    %178 = vector.broadcast %cst_120 : f32 to vector<8x128xf32>
    %179 = arith.mulf %178, %177 : vector<8x128xf32>
    %cst_121 = arith.constant 0.707106769 : f32
    %180 = vector.broadcast %cst_121 : f32 to vector<8x128xf32>
    %181 = arith.mulf %177, %180 : vector<8x128xf32>
    %cst_122 = arith.constant 0.000000e+00 : f32
    %182 = vector.broadcast %cst_122 : f32 to vector<8x128xf32>
    %183 = arith.cmpf oge, %181, %182 : vector<8x128xf32>
    %cst_123 = arith.constant 1.000000e+00 : f32
    %cst_124 = arith.constant -1.000000e+00 : f32
    %184 = vector.broadcast %cst_123 : f32 to vector<8x128xf32>
    %185 = vector.broadcast %cst_124 : f32 to vector<8x128xf32>
    %186 = arith.select %183, %184, %185 : vector<8x128xi1>, vector<8x128xf32>
    %187 = math.absf %181 : vector<8x128xf32>
    %cst_125 = arith.constant 0.327591091 : f32
    %188 = vector.broadcast %cst_125 : f32 to vector<8x128xf32>
    %189 = arith.mulf %188, %187 : vector<8x128xf32>
    %cst_126 = arith.constant 1.000000e+00 : f32
    %190 = vector.broadcast %cst_126 : f32 to vector<8x128xf32>
    %191 = arith.addf %190, %189 : vector<8x128xf32>
    %cst_127 = arith.constant 1.000000e+00 : f32
    %192 = vector.broadcast %cst_127 : f32 to vector<8x128xf32>
    %193 = arith.divf %192, %191 : vector<8x128xf32>
    %cst_128 = arith.constant 1.06140542 : f32
    %194 = vector.broadcast %cst_128 : f32 to vector<8x128xf32>
    %195 = arith.mulf %194, %193 : vector<8x128xf32>
    %cst_129 = arith.constant -1.45315206 : f32
    %196 = vector.broadcast %cst_129 : f32 to vector<8x128xf32>
    %197 = arith.addf %195, %196 : vector<8x128xf32>
    %198 = arith.mulf %197, %193 : vector<8x128xf32>
    %cst_130 = arith.constant 1.42141378 : f32
    %199 = vector.broadcast %cst_130 : f32 to vector<8x128xf32>
    %200 = arith.addf %198, %199 : vector<8x128xf32>
    %201 = arith.mulf %200, %193 : vector<8x128xf32>
    %cst_131 = arith.constant -0.284496725 : f32
    %202 = vector.broadcast %cst_131 : f32 to vector<8x128xf32>
    %203 = arith.addf %201, %202 : vector<8x128xf32>
    %204 = arith.mulf %203, %193 : vector<8x128xf32>
    %cst_132 = arith.constant 0.254829586 : f32
    %205 = vector.broadcast %cst_132 : f32 to vector<8x128xf32>
    %206 = arith.addf %204, %205 : vector<8x128xf32>
    %207 = arith.mulf %206, %193 : vector<8x128xf32>
    %cst_133 = arith.constant 0.000000e+00 : f32
    %208 = vector.broadcast %cst_133 : f32 to vector<8x128xf32>
    %209 = arith.subf %208, %187 : vector<8x128xf32>
    %210 = arith.mulf %209, %187 : vector<8x128xf32>
    %211 = math.exp %210 : vector<8x128xf32>
    %212 = arith.mulf %207, %211 : vector<8x128xf32>
    %cst_134 = arith.constant 1.000000e+00 : f32
    %213 = vector.broadcast %cst_134 : f32 to vector<8x128xf32>
    %214 = arith.subf %213, %212 : vector<8x128xf32>
    %215 = arith.mulf %186, %214 : vector<8x128xf32>
    %cst_135 = arith.constant 1.000000e+00 : f32
    %216 = vector.broadcast %cst_135 : f32 to vector<8x128xf32>
    %217 = arith.addf %216, %215 : vector<8x128xf32>
    %218 = arith.mulf %179, %217 : vector<8x128xf32>
    %c320 = arith.constant 320 : index
    %c0_136 = arith.constant 0 : index
    %219 = vector.load %arg2[%c320, %c0_136] : memref<576x64xf32, #tpu.memory_space<vmem>>, vector<128x64xf32>
    %cst_137 = arith.constant dense<0.000000e+00> : vector<8x64xf32>
    %220 = tpu.matmul %218, %219, %cst_137 {dimension_numbers = #tpu.dot_dimension_numbers<[1], [0], [0], [1], [0, 0, 1, 1], [], []>} : vector<8x128xf32>, vector<128x64xf32>, vector<8x64xf32> -> vector<8x64xf32>
    %221 = arith.addf %147, %220 : vector<8x64xf32>
    %c12 = arith.constant 12 : index
    %c0_138 = arith.constant 0 : index
    %222 = vector.load %arg5[%c12, %c0_138] : memref<20x128xf32, #tpu.memory_space<vmem>>, vector<1x64xf32>
    %223 = vector.broadcast %222 : vector<1x64xf32> to vector<8x64xf32>
    %224 = arith.addf %221, %223 : vector<8x64xf32>
    %c13 = arith.constant 13 : index
    %c0_139 = arith.constant 0 : index
    %225 = vector.load %arg5[%c13, %c0_139] : memref<20x128xf32, #tpu.memory_space<vmem>>, vector<1x64xf32>
    %c14 = arith.constant 14 : index
    %c0_140 = arith.constant 0 : index
    %226 = vector.load %arg5[%c14, %c0_140] : memref<20x128xf32, #tpu.memory_space<vmem>>, vector<1x64xf32>
    %cst_141 = arith.constant dense<0.000000e+00> : vector<8xf32>
    %227 = vector.multi_reduction <add>, %224, %cst_141 [1] : vector<8x64xf32> to vector<8xf32>
    %228 = vector.shape_cast %227 : vector<8xf32> to vector<8x1xf32>
    %cst_142 = arith.constant 6.400000e+01 : f32
    %229 = vector.broadcast %cst_142 : f32 to vector<8x1xf32>
    %230 = arith.divf %228, %229 : vector<8x1xf32>
    %231 = vector.broadcast %230 : vector<8x1xf32> to vector<8x64xf32>
    %232 = arith.subf %224, %231 : vector<8x64xf32>
    %233 = arith.mulf %232, %232 : vector<8x64xf32>
    %cst_143 = arith.constant dense<0.000000e+00> : vector<8xf32>
    %234 = vector.multi_reduction <add>, %233, %cst_143 [1] : vector<8x64xf32> to vector<8xf32>
    %235 = vector.shape_cast %234 : vector<8xf32> to vector<8x1xf32>
    %cst_144 = arith.constant 6.400000e+01 : f32
    %236 = vector.broadcast %cst_144 : f32 to vector<8x1xf32>
    %237 = arith.divf %235, %236 : vector<8x1xf32>
    %238 = vector.broadcast %230 : vector<8x1xf32> to vector<8x64xf32>
    %239 = arith.subf %224, %238 : vector<8x64xf32>
    %cst_145 = arith.constant 9.99999974E-6 : f32
    %240 = vector.broadcast %cst_145 : f32 to vector<8x1xf32>
    %241 = arith.addf %237, %240 : vector<8x1xf32>
    %242 = math.rsqrt %241 : vector<8x1xf32>
    %243 = vector.broadcast %242 : vector<8x1xf32> to vector<8x64xf32>
    %244 = arith.mulf %239, %243 : vector<8x64xf32>
    %245 = vector.broadcast %225 : vector<1x64xf32> to vector<8x64xf32>
    %246 = arith.mulf %244, %245 : vector<8x64xf32>
    %247 = vector.broadcast %226 : vector<1x64xf32> to vector<8x64xf32>
    %248 = arith.addf %246, %247 : vector<8x64xf32>
    %c1_146 = arith.constant 1 : index
    %c0_147 = arith.constant 0 : index
    %c0_148 = arith.constant 0 : index
    %c0_149 = arith.constant 0 : index
    %c0_150 = arith.constant 0 : index
    %249 = vector.load %arg3[%c1_146, %c0_147, %c0_148, %c0_149, %c0_150] : memref<2x4x3x64x16xf32, #tpu.memory_space<vmem>>, vector<1x1x1x64x16xf32>
    %250 = vector.shape_cast %249 : vector<1x1x1x64x16xf32> to vector<64x16xf32>
    %cst_151 = arith.constant dense<0.000000e+00> : vector<8x16xf32>
    %251 = tpu.matmul %248, %250, %cst_151 {dimension_numbers = #tpu.dot_dimension_numbers<[1], [0], [0], [1], [0, 0, 1, 1], [], []>} : vector<8x64xf32>, vector<64x16xf32>, vector<8x16xf32> -> vector<8x16xf32>
    %c1_152 = arith.constant 1 : index
    %c0_153 = arith.constant 0 : index
    %c1_154 = arith.constant 1 : index
    %c0_155 = arith.constant 0 : index
    %c0_156 = arith.constant 0 : index
    %252 = vector.load %arg3[%c1_152, %c0_153, %c1_154, %c0_155, %c0_156] : memref<2x4x3x64x16xf32, #tpu.memory_space<vmem>>, vector<1x1x1x64x16xf32>
    %253 = vector.shape_cast %252 : vector<1x1x1x64x16xf32> to vector<64x16xf32>
    %cst_157 = arith.constant dense<0.000000e+00> : vector<8x16xf32>
    %254 = tpu.matmul %248, %253, %cst_157 {dimension_numbers = #tpu.dot_dimension_numbers<[1], [0], [0], [1], [0, 0, 1, 1], [], []>} : vector<8x64xf32>, vector<64x16xf32>, vector<8x16xf32> -> vector<8x16xf32>
    %c1_158 = arith.constant 1 : index
    %c0_159 = arith.constant 0 : index
    %c2_160 = arith.constant 2 : index
    %c0_161 = arith.constant 0 : index
    %c0_162 = arith.constant 0 : index
    %255 = vector.load %arg3[%c1_158, %c0_159, %c2_160, %c0_161, %c0_162] : memref<2x4x3x64x16xf32, #tpu.memory_space<vmem>>, vector<1x1x1x64x16xf32>
    %256 = vector.shape_cast %255 : vector<1x1x1x64x16xf32> to vector<64x16xf32>
    %cst_163 = arith.constant dense<0.000000e+00> : vector<8x16xf32>
    %257 = tpu.matmul %248, %256, %cst_163 {dimension_numbers = #tpu.dot_dimension_numbers<[1], [0], [0], [1], [0, 0, 1, 1], [], []>} : vector<8x64xf32>, vector<64x16xf32>, vector<8x16xf32> -> vector<8x16xf32>
    %cst_164 = arith.constant dense<0.000000e+00> : vector<8x8xf32>
    %258 = tpu.matmul %251, %254, %cst_164 {dimension_numbers = #tpu.dot_dimension_numbers<[1], [1], [0], [0], [0, 0, 1, 0], [], []>} : vector<8x16xf32>, vector<8x16xf32>, vector<8x8xf32> -> vector<8x8xf32>
    %259 = arith.addf %258, %32 : vector<8x8xf32>
    %cst_165 = arith.constant dense<0xFF800000> : vector<8xf32>
    %260 = vector.multi_reduction <maximumf>, %259, %cst_165 [1] : vector<8x8xf32> to vector<8xf32>
    %261 = vector.shape_cast %260 : vector<8xf32> to vector<8x1xf32>
    %262 = vector.broadcast %261 : vector<8x1xf32> to vector<8x8xf32>
    %263 = arith.subf %259, %262 : vector<8x8xf32>
    %264 = math.exp %263 : vector<8x8xf32>
    %cst_166 = arith.constant dense<0.000000e+00> : vector<8xf32>
    %265 = vector.multi_reduction <add>, %264, %cst_166 [1] : vector<8x8xf32> to vector<8xf32>
    %266 = vector.shape_cast %265 : vector<8xf32> to vector<8x1xf32>
    %267 = vector.broadcast %266 : vector<8x1xf32> to vector<8x8xf32>
    %268 = arith.divf %264, %267 : vector<8x8xf32>
    %cst_167 = arith.constant dense<0.000000e+00> : vector<8x16xf32>
    %269 = tpu.matmul %268, %257, %cst_167 {dimension_numbers = #tpu.dot_dimension_numbers<[1], [0], [0], [1], [0, 0, 1, 1], [], []>} : vector<8x8xf32>, vector<8x16xf32>, vector<8x16xf32> -> vector<8x16xf32>
    %c1_168 = arith.constant 1 : index
    %c1_169 = arith.constant 1 : index
    %c0_170 = arith.constant 0 : index
    %c0_171 = arith.constant 0 : index
    %c0_172 = arith.constant 0 : index
    %270 = vector.load %arg3[%c1_168, %c1_169, %c0_170, %c0_171, %c0_172] : memref<2x4x3x64x16xf32, #tpu.memory_space<vmem>>, vector<1x1x1x64x16xf32>
    %271 = vector.shape_cast %270 : vector<1x1x1x64x16xf32> to vector<64x16xf32>
    %cst_173 = arith.constant dense<0.000000e+00> : vector<8x16xf32>
    %272 = tpu.matmul %248, %271, %cst_173 {dimension_numbers = #tpu.dot_dimension_numbers<[1], [0], [0], [1], [0, 0, 1, 1], [], []>} : vector<8x64xf32>, vector<64x16xf32>, vector<8x16xf32> -> vector<8x16xf32>
    %c1_174 = arith.constant 1 : index
    %c1_175 = arith.constant 1 : index
    %c1_176 = arith.constant 1 : index
    %c0_177 = arith.constant 0 : index
    %c0_178 = arith.constant 0 : index
    %273 = vector.load %arg3[%c1_174, %c1_175, %c1_176, %c0_177, %c0_178] : memref<2x4x3x64x16xf32, #tpu.memory_space<vmem>>, vector<1x1x1x64x16xf32>
    %274 = vector.shape_cast %273 : vector<1x1x1x64x16xf32> to vector<64x16xf32>
    %cst_179 = arith.constant dense<0.000000e+00> : vector<8x16xf32>
    %275 = tpu.matmul %248, %274, %cst_179 {dimension_numbers = #tpu.dot_dimension_numbers<[1], [0], [0], [1], [0, 0, 1, 1], [], []>} : vector<8x64xf32>, vector<64x16xf32>, vector<8x16xf32> -> vector<8x16xf32>
    %c1_180 = arith.constant 1 : index
    %c1_181 = arith.constant 1 : index
    %c2_182 = arith.constant 2 : index
    %c0_183 = arith.constant 0 : index
    %c0_184 = arith.constant 0 : index
    %276 = vector.load %arg3[%c1_180, %c1_181, %c2_182, %c0_183, %c0_184] : memref<2x4x3x64x16xf32, #tpu.memory_space<vmem>>, vector<1x1x1x64x16xf32>
    %277 = vector.shape_cast %276 : vector<1x1x1x64x16xf32> to vector<64x16xf32>
    %cst_185 = arith.constant dense<0.000000e+00> : vector<8x16xf32>
    %278 = tpu.matmul %248, %277, %cst_185 {dimension_numbers = #tpu.dot_dimension_numbers<[1], [0], [0], [1], [0, 0, 1, 1], [], []>} : vector<8x64xf32>, vector<64x16xf32>, vector<8x16xf32> -> vector<8x16xf32>
    %cst_186 = arith.constant dense<0.000000e+00> : vector<8x8xf32>
    %279 = tpu.matmul %272, %275, %cst_186 {dimension_numbers = #tpu.dot_dimension_numbers<[1], [1], [0], [0], [0, 0, 1, 0], [], []>} : vector<8x16xf32>, vector<8x16xf32>, vector<8x8xf32> -> vector<8x8xf32>
    %280 = arith.addf %279, %32 : vector<8x8xf32>
    %cst_187 = arith.constant dense<0xFF800000> : vector<8xf32>
    %281 = vector.multi_reduction <maximumf>, %280, %cst_187 [1] : vector<8x8xf32> to vector<8xf32>
    %282 = vector.shape_cast %281 : vector<8xf32> to vector<8x1xf32>
    %283 = vector.broadcast %282 : vector<8x1xf32> to vector<8x8xf32>
    %284 = arith.subf %280, %283 : vector<8x8xf32>
    %285 = math.exp %284 : vector<8x8xf32>
    %cst_188 = arith.constant dense<0.000000e+00> : vector<8xf32>
    %286 = vector.multi_reduction <add>, %285, %cst_188 [1] : vector<8x8xf32> to vector<8xf32>
    %287 = vector.shape_cast %286 : vector<8xf32> to vector<8x1xf32>
    %288 = vector.broadcast %287 : vector<8x1xf32> to vector<8x8xf32>
    %289 = arith.divf %285, %288 : vector<8x8xf32>
    %cst_189 = arith.constant dense<0.000000e+00> : vector<8x16xf32>
    %290 = tpu.matmul %289, %278, %cst_189 {dimension_numbers = #tpu.dot_dimension_numbers<[1], [0], [0], [1], [0, 0, 1, 1], [], []>} : vector<8x8xf32>, vector<8x16xf32>, vector<8x16xf32> -> vector<8x16xf32>
    %c1_190 = arith.constant 1 : index
    %c2_191 = arith.constant 2 : index
    %c0_192 = arith.constant 0 : index
    %c0_193 = arith.constant 0 : index
    %c0_194 = arith.constant 0 : index
    %291 = vector.load %arg3[%c1_190, %c2_191, %c0_192, %c0_193, %c0_194] : memref<2x4x3x64x16xf32, #tpu.memory_space<vmem>>, vector<1x1x1x64x16xf32>
    %292 = vector.shape_cast %291 : vector<1x1x1x64x16xf32> to vector<64x16xf32>
    %cst_195 = arith.constant dense<0.000000e+00> : vector<8x16xf32>
    %293 = tpu.matmul %248, %292, %cst_195 {dimension_numbers = #tpu.dot_dimension_numbers<[1], [0], [0], [1], [0, 0, 1, 1], [], []>} : vector<8x64xf32>, vector<64x16xf32>, vector<8x16xf32> -> vector<8x16xf32>
    %c1_196 = arith.constant 1 : index
    %c2_197 = arith.constant 2 : index
    %c1_198 = arith.constant 1 : index
    %c0_199 = arith.constant 0 : index
    %c0_200 = arith.constant 0 : index
    %294 = vector.load %arg3[%c1_196, %c2_197, %c1_198, %c0_199, %c0_200] : memref<2x4x3x64x16xf32, #tpu.memory_space<vmem>>, vector<1x1x1x64x16xf32>
    %295 = vector.shape_cast %294 : vector<1x1x1x64x16xf32> to vector<64x16xf32>
    %cst_201 = arith.constant dense<0.000000e+00> : vector<8x16xf32>
    %296 = tpu.matmul %248, %295, %cst_201 {dimension_numbers = #tpu.dot_dimension_numbers<[1], [0], [0], [1], [0, 0, 1, 1], [], []>} : vector<8x64xf32>, vector<64x16xf32>, vector<8x16xf32> -> vector<8x16xf32>
    %c1_202 = arith.constant 1 : index
    %c2_203 = arith.constant 2 : index
    %c2_204 = arith.constant 2 : index
    %c0_205 = arith.constant 0 : index
    %c0_206 = arith.constant 0 : index
    %297 = vector.load %arg3[%c1_202, %c2_203, %c2_204, %c0_205, %c0_206] : memref<2x4x3x64x16xf32, #tpu.memory_space<vmem>>, vector<1x1x1x64x16xf32>
    %298 = vector.shape_cast %297 : vector<1x1x1x64x16xf32> to vector<64x16xf32>
    %cst_207 = arith.constant dense<0.000000e+00> : vector<8x16xf32>
    %299 = tpu.matmul %248, %298, %cst_207 {dimension_numbers = #tpu.dot_dimension_numbers<[1], [0], [0], [1], [0, 0, 1, 1], [], []>} : vector<8x64xf32>, vector<64x16xf32>, vector<8x16xf32> -> vector<8x16xf32>
    %cst_208 = arith.constant dense<0.000000e+00> : vector<8x8xf32>
    %300 = tpu.matmul %293, %296, %cst_208 {dimension_numbers = #tpu.dot_dimension_numbers<[1], [1], [0], [0], [0, 0, 1, 0], [], []>} : vector<8x16xf32>, vector<8x16xf32>, vector<8x8xf32> -> vector<8x8xf32>
    %301 = arith.addf %300, %32 : vector<8x8xf32>
    %cst_209 = arith.constant dense<0xFF800000> : vector<8xf32>
    %302 = vector.multi_reduction <maximumf>, %301, %cst_209 [1] : vector<8x8xf32> to vector<8xf32>
    %303 = vector.shape_cast %302 : vector<8xf32> to vector<8x1xf32>
    %304 = vector.broadcast %303 : vector<8x1xf32> to vector<8x8xf32>
    %305 = arith.subf %301, %304 : vector<8x8xf32>
    %306 = math.exp %305 : vector<8x8xf32>
    %cst_210 = arith.constant dense<0.000000e+00> : vector<8xf32>
    %307 = vector.multi_reduction <add>, %306, %cst_210 [1] : vector<8x8xf32> to vector<8xf32>
    %308 = vector.shape_cast %307 : vector<8xf32> to vector<8x1xf32>
    %309 = vector.broadcast %308 : vector<8x1xf32> to vector<8x8xf32>
    %310 = arith.divf %306, %309 : vector<8x8xf32>
    %cst_211 = arith.constant dense<0.000000e+00> : vector<8x16xf32>
    %311 = tpu.matmul %310, %299, %cst_211 {dimension_numbers = #tpu.dot_dimension_numbers<[1], [0], [0], [1], [0, 0, 1, 1], [], []>} : vector<8x8xf32>, vector<8x16xf32>, vector<8x16xf32> -> vector<8x16xf32>
    %c1_212 = arith.constant 1 : index
    %c3_213 = arith.constant 3 : index
    %c0_214 = arith.constant 0 : index
    %c0_215 = arith.constant 0 : index
    %c0_216 = arith.constant 0 : index
    %312 = vector.load %arg3[%c1_212, %c3_213, %c0_214, %c0_215, %c0_216] : memref<2x4x3x64x16xf32, #tpu.memory_space<vmem>>, vector<1x1x1x64x16xf32>
    %313 = vector.shape_cast %312 : vector<1x1x1x64x16xf32> to vector<64x16xf32>
    %cst_217 = arith.constant dense<0.000000e+00> : vector<8x16xf32>
    %314 = tpu.matmul %248, %313, %cst_217 {dimension_numbers = #tpu.dot_dimension_numbers<[1], [0], [0], [1], [0, 0, 1, 1], [], []>} : vector<8x64xf32>, vector<64x16xf32>, vector<8x16xf32> -> vector<8x16xf32>
    %c1_218 = arith.constant 1 : index
    %c3_219 = arith.constant 3 : index
    %c1_220 = arith.constant 1 : index
    %c0_221 = arith.constant 0 : index
    %c0_222 = arith.constant 0 : index
    %315 = vector.load %arg3[%c1_218, %c3_219, %c1_220, %c0_221, %c0_222] : memref<2x4x3x64x16xf32, #tpu.memory_space<vmem>>, vector<1x1x1x64x16xf32>
    %316 = vector.shape_cast %315 : vector<1x1x1x64x16xf32> to vector<64x16xf32>
    %cst_223 = arith.constant dense<0.000000e+00> : vector<8x16xf32>
    %317 = tpu.matmul %248, %316, %cst_223 {dimension_numbers = #tpu.dot_dimension_numbers<[1], [0], [0], [1], [0, 0, 1, 1], [], []>} : vector<8x64xf32>, vector<64x16xf32>, vector<8x16xf32> -> vector<8x16xf32>
    %c1_224 = arith.constant 1 : index
    %c3_225 = arith.constant 3 : index
    %c2_226 = arith.constant 2 : index
    %c0_227 = arith.constant 0 : index
    %c0_228 = arith.constant 0 : index
    %318 = vector.load %arg3[%c1_224, %c3_225, %c2_226, %c0_227, %c0_228] : memref<2x4x3x64x16xf32, #tpu.memory_space<vmem>>, vector<1x1x1x64x16xf32>
    %319 = vector.shape_cast %318 : vector<1x1x1x64x16xf32> to vector<64x16xf32>
    %cst_229 = arith.constant dense<0.000000e+00> : vector<8x16xf32>
    %320 = tpu.matmul %248, %319, %cst_229 {dimension_numbers = #tpu.dot_dimension_numbers<[1], [0], [0], [1], [0, 0, 1, 1], [], []>} : vector<8x64xf32>, vector<64x16xf32>, vector<8x16xf32> -> vector<8x16xf32>
    %cst_230 = arith.constant dense<0.000000e+00> : vector<8x8xf32>
    %321 = tpu.matmul %314, %317, %cst_230 {dimension_numbers = #tpu.dot_dimension_numbers<[1], [1], [0], [0], [0, 0, 1, 0], [], []>} : vector<8x16xf32>, vector<8x16xf32>, vector<8x8xf32> -> vector<8x8xf32>
    %322 = arith.addf %321, %32 : vector<8x8xf32>
    %cst_231 = arith.constant dense<0xFF800000> : vector<8xf32>
    %323 = vector.multi_reduction <maximumf>, %322, %cst_231 [1] : vector<8x8xf32> to vector<8xf32>
    %324 = vector.shape_cast %323 : vector<8xf32> to vector<8x1xf32>
    %325 = vector.broadcast %324 : vector<8x1xf32> to vector<8x8xf32>
    %326 = arith.subf %322, %325 : vector<8x8xf32>
    %327 = math.exp %326 : vector<8x8xf32>
    %cst_232 = arith.constant dense<0.000000e+00> : vector<8xf32>
    %328 = vector.multi_reduction <add>, %327, %cst_232 [1] : vector<8x8xf32> to vector<8xf32>
    %329 = vector.shape_cast %328 : vector<8xf32> to vector<8x1xf32>
    %330 = vector.broadcast %329 : vector<8x1xf32> to vector<8x8xf32>
    %331 = arith.divf %327, %330 : vector<8x8xf32>
    %cst_233 = arith.constant dense<0.000000e+00> : vector<8x16xf32>
    %332 = tpu.matmul %331, %320, %cst_233 {dimension_numbers = #tpu.dot_dimension_numbers<[1], [0], [0], [1], [0, 0, 1, 1], [], []>} : vector<8x8xf32>, vector<8x16xf32>, vector<8x16xf32> -> vector<8x16xf32>
    %333 = tpu.concatenate %269, %290, %311, %332 in 1 : vector<8x16xf32>, vector<8x16xf32>, vector<8x16xf32>, vector<8x16xf32> -> vector<8x64xf32>
    %c256 = arith.constant 256 : index
    %c0_234 = arith.constant 0 : index
    %334 = vector.load %arg2[%c256, %c0_234] : memref<576x64xf32, #tpu.memory_space<vmem>>, vector<64x64xf32>
    %cst_235 = arith.constant dense<0.000000e+00> : vector<8x64xf32>
    %335 = tpu.matmul %333, %334, %cst_235 {dimension_numbers = #tpu.dot_dimension_numbers<[1], [0], [0], [1], [0, 0, 1, 1], [], []>} : vector<8x64xf32>, vector<64x64xf32>, vector<8x64xf32> -> vector<8x64xf32>
    %336 = arith.addf %224, %335 : vector<8x64xf32>
    %c15 = arith.constant 15 : index
    %c0_236 = arith.constant 0 : index
    %337 = vector.load %arg5[%c15, %c0_236] : memref<20x128xf32, #tpu.memory_space<vmem>>, vector<1x64xf32>
    %338 = vector.broadcast %337 : vector<1x64xf32> to vector<8x64xf32>
    %339 = arith.addf %336, %338 : vector<8x64xf32>
    %c16 = arith.constant 16 : index
    %c0_237 = arith.constant 0 : index
    %340 = vector.load %arg5[%c16, %c0_237] : memref<20x128xf32, #tpu.memory_space<vmem>>, vector<1x64xf32>
    %c17 = arith.constant 17 : index
    %c0_238 = arith.constant 0 : index
    %341 = vector.load %arg5[%c17, %c0_238] : memref<20x128xf32, #tpu.memory_space<vmem>>, vector<1x64xf32>
    %cst_239 = arith.constant dense<0.000000e+00> : vector<8xf32>
    %342 = vector.multi_reduction <add>, %339, %cst_239 [1] : vector<8x64xf32> to vector<8xf32>
    %343 = vector.shape_cast %342 : vector<8xf32> to vector<8x1xf32>
    %cst_240 = arith.constant 6.400000e+01 : f32
    %344 = vector.broadcast %cst_240 : f32 to vector<8x1xf32>
    %345 = arith.divf %343, %344 : vector<8x1xf32>
    %346 = vector.broadcast %345 : vector<8x1xf32> to vector<8x64xf32>
    %347 = arith.subf %339, %346 : vector<8x64xf32>
    %348 = arith.mulf %347, %347 : vector<8x64xf32>
    %cst_241 = arith.constant dense<0.000000e+00> : vector<8xf32>
    %349 = vector.multi_reduction <add>, %348, %cst_241 [1] : vector<8x64xf32> to vector<8xf32>
    %350 = vector.shape_cast %349 : vector<8xf32> to vector<8x1xf32>
    %cst_242 = arith.constant 6.400000e+01 : f32
    %351 = vector.broadcast %cst_242 : f32 to vector<8x1xf32>
    %352 = arith.divf %350, %351 : vector<8x1xf32>
    %353 = vector.broadcast %345 : vector<8x1xf32> to vector<8x64xf32>
    %354 = arith.subf %339, %353 : vector<8x64xf32>
    %cst_243 = arith.constant 9.99999974E-6 : f32
    %355 = vector.broadcast %cst_243 : f32 to vector<8x1xf32>
    %356 = arith.addf %352, %355 : vector<8x1xf32>
    %357 = math.rsqrt %356 : vector<8x1xf32>
    %358 = vector.broadcast %357 : vector<8x1xf32> to vector<8x64xf32>
    %359 = arith.mulf %354, %358 : vector<8x64xf32>
    %360 = vector.broadcast %340 : vector<1x64xf32> to vector<8x64xf32>
    %361 = arith.mulf %359, %360 : vector<8x64xf32>
    %362 = vector.broadcast %341 : vector<1x64xf32> to vector<8x64xf32>
    %363 = arith.addf %361, %362 : vector<8x64xf32>
    %c1_244 = arith.constant 1 : index
    %c0_245 = arith.constant 0 : index
    %c0_246 = arith.constant 0 : index
    %364 = vector.load %arg4[%c1_244, %c0_245, %c0_246] : memref<3x64x128xf32, #tpu.memory_space<vmem>>, vector<1x64x128xf32>
    %365 = vector.shape_cast %364 : vector<1x64x128xf32> to vector<64x128xf32>
    %cst_247 = arith.constant dense<0.000000e+00> : vector<8x128xf32>
    %366 = tpu.matmul %363, %365, %cst_247 {dimension_numbers = #tpu.dot_dimension_numbers<[1], [0], [0], [1], [0, 0, 1, 1], [], []>} : vector<8x64xf32>, vector<64x128xf32>, vector<8x128xf32> -> vector<8x128xf32>
    %c18 = arith.constant 18 : index
    %c0_248 = arith.constant 0 : index
    %367 = vector.load %arg5[%c18, %c0_248] : memref<20x128xf32, #tpu.memory_space<vmem>>, vector<1x128xf32>
    %368 = vector.broadcast %367 : vector<1x128xf32> to vector<8x128xf32>
    %369 = arith.addf %366, %368 : vector<8x128xf32>
    %cst_249 = arith.constant 5.000000e-01 : f32
    %370 = vector.broadcast %cst_249 : f32 to vector<8x128xf32>
    %371 = arith.mulf %370, %369 : vector<8x128xf32>
    %cst_250 = arith.constant 0.707106769 : f32
    %372 = vector.broadcast %cst_250 : f32 to vector<8x128xf32>
    %373 = arith.mulf %369, %372 : vector<8x128xf32>
    %cst_251 = arith.constant 0.000000e+00 : f32
    %374 = vector.broadcast %cst_251 : f32 to vector<8x128xf32>
    %375 = arith.cmpf oge, %373, %374 : vector<8x128xf32>
    %cst_252 = arith.constant 1.000000e+00 : f32
    %cst_253 = arith.constant -1.000000e+00 : f32
    %376 = vector.broadcast %cst_252 : f32 to vector<8x128xf32>
    %377 = vector.broadcast %cst_253 : f32 to vector<8x128xf32>
    %378 = arith.select %375, %376, %377 : vector<8x128xi1>, vector<8x128xf32>
    %379 = math.absf %373 : vector<8x128xf32>
    %cst_254 = arith.constant 0.327591091 : f32
    %380 = vector.broadcast %cst_254 : f32 to vector<8x128xf32>
    %381 = arith.mulf %380, %379 : vector<8x128xf32>
    %cst_255 = arith.constant 1.000000e+00 : f32
    %382 = vector.broadcast %cst_255 : f32 to vector<8x128xf32>
    %383 = arith.addf %382, %381 : vector<8x128xf32>
    %cst_256 = arith.constant 1.000000e+00 : f32
    %384 = vector.broadcast %cst_256 : f32 to vector<8x128xf32>
    %385 = arith.divf %384, %383 : vector<8x128xf32>
    %cst_257 = arith.constant 1.06140542 : f32
    %386 = vector.broadcast %cst_257 : f32 to vector<8x128xf32>
    %387 = arith.mulf %386, %385 : vector<8x128xf32>
    %cst_258 = arith.constant -1.45315206 : f32
    %388 = vector.broadcast %cst_258 : f32 to vector<8x128xf32>
    %389 = arith.addf %387, %388 : vector<8x128xf32>
    %390 = arith.mulf %389, %385 : vector<8x128xf32>
    %cst_259 = arith.constant 1.42141378 : f32
    %391 = vector.broadcast %cst_259 : f32 to vector<8x128xf32>
    %392 = arith.addf %390, %391 : vector<8x128xf32>
    %393 = arith.mulf %392, %385 : vector<8x128xf32>
    %cst_260 = arith.constant -0.284496725 : f32
    %394 = vector.broadcast %cst_260 : f32 to vector<8x128xf32>
    %395 = arith.addf %393, %394 : vector<8x128xf32>
    %396 = arith.mulf %395, %385 : vector<8x128xf32>
    %cst_261 = arith.constant 0.254829586 : f32
    %397 = vector.broadcast %cst_261 : f32 to vector<8x128xf32>
    %398 = arith.addf %396, %397 : vector<8x128xf32>
    %399 = arith.mulf %398, %385 : vector<8x128xf32>
    %cst_262 = arith.constant 0.000000e+00 : f32
    %400 = vector.broadcast %cst_262 : f32 to vector<8x128xf32>
    %401 = arith.subf %400, %379 : vector<8x128xf32>
    %402 = arith.mulf %401, %379 : vector<8x128xf32>
    %403 = math.exp %402 : vector<8x128xf32>
    %404 = arith.mulf %399, %403 : vector<8x128xf32>
    %cst_263 = arith.constant 1.000000e+00 : f32
    %405 = vector.broadcast %cst_263 : f32 to vector<8x128xf32>
    %406 = arith.subf %405, %404 : vector<8x128xf32>
    %407 = arith.mulf %378, %406 : vector<8x128xf32>
    %cst_264 = arith.constant 1.000000e+00 : f32
    %408 = vector.broadcast %cst_264 : f32 to vector<8x128xf32>
    %409 = arith.addf %408, %407 : vector<8x128xf32>
    %410 = arith.mulf %371, %409 : vector<8x128xf32>
    %c448 = arith.constant 448 : index
    %c0_265 = arith.constant 0 : index
    %411 = vector.load %arg2[%c448, %c0_265] : memref<576x64xf32, #tpu.memory_space<vmem>>, vector<128x64xf32>
    %cst_266 = arith.constant dense<0.000000e+00> : vector<8x64xf32>
    %412 = tpu.matmul %410, %411, %cst_266 {dimension_numbers = #tpu.dot_dimension_numbers<[1], [0], [0], [1], [0, 0, 1, 1], [], []>} : vector<8x128xf32>, vector<128x64xf32>, vector<8x64xf32> -> vector<8x64xf32>
    %413 = arith.addf %339, %412 : vector<8x64xf32>
    %c19 = arith.constant 19 : index
    %c0_267 = arith.constant 0 : index
    %414 = vector.load %arg5[%c19, %c0_267] : memref<20x128xf32, #tpu.memory_space<vmem>>, vector<1x64xf32>
    %415 = vector.broadcast %414 : vector<1x64xf32> to vector<8x64xf32>
    %416 = arith.addf %413, %415 : vector<8x64xf32>
    %417 = vector.extract_strided_slice %416 {offsets = [0, 0], sizes = [1, 64], strides = [1, 1]} : vector<8x64xf32> to vector<1x64xf32>
    %c3_268 = arith.constant 3 : index
    %c0_269 = arith.constant 0 : index
    %418 = vector.load %arg5[%c3_268, %c0_269] : memref<20x128xf32, #tpu.memory_space<vmem>>, vector<1x64xf32>
    %c4 = arith.constant 4 : index
    %c0_270 = arith.constant 0 : index
    %419 = vector.load %arg5[%c4, %c0_270] : memref<20x128xf32, #tpu.memory_space<vmem>>, vector<1x64xf32>
    %cst_271 = arith.constant dense<0.000000e+00> : vector<1xf32>
    %420 = vector.multi_reduction <add>, %417, %cst_271 [1] : vector<1x64xf32> to vector<1xf32>
    %421 = vector.shape_cast %420 : vector<1xf32> to vector<1x1xf32>
    %cst_272 = arith.constant 6.400000e+01 : f32
    %422 = vector.broadcast %cst_272 : f32 to vector<1x1xf32>
    %423 = arith.divf %421, %422 : vector<1x1xf32>
    %424 = vector.broadcast %423 : vector<1x1xf32> to vector<1x64xf32>
    %425 = arith.subf %417, %424 : vector<1x64xf32>
    %426 = arith.mulf %425, %425 : vector<1x64xf32>
    %cst_273 = arith.constant dense<0.000000e+00> : vector<1xf32>
    %427 = vector.multi_reduction <add>, %426, %cst_273 [1] : vector<1x64xf32> to vector<1xf32>
    %428 = vector.shape_cast %427 : vector<1xf32> to vector<1x1xf32>
    %cst_274 = arith.constant 6.400000e+01 : f32
    %429 = vector.broadcast %cst_274 : f32 to vector<1x1xf32>
    %430 = arith.divf %428, %429 : vector<1x1xf32>
    %431 = vector.broadcast %423 : vector<1x1xf32> to vector<1x64xf32>
    %432 = arith.subf %417, %431 : vector<1x64xf32>
    %cst_275 = arith.constant 9.99999974E-6 : f32
    %433 = vector.broadcast %cst_275 : f32 to vector<1x1xf32>
    %434 = arith.addf %430, %433 : vector<1x1xf32>
    %435 = math.rsqrt %434 : vector<1x1xf32>
    %436 = vector.broadcast %435 : vector<1x1xf32> to vector<1x64xf32>
    %437 = arith.mulf %432, %436 : vector<1x64xf32>
    %438 = arith.mulf %437, %418 : vector<1x64xf32>
    %439 = arith.addf %438, %419 : vector<1x64xf32>
    %c2_276 = arith.constant 2 : index
    %c0_277 = arith.constant 0 : index
    %c0_278 = arith.constant 0 : index
    %440 = vector.load %arg4[%c2_276, %c0_277, %c0_278] : memref<3x64x128xf32, #tpu.memory_space<vmem>>, vector<1x64x128xf32>
    %441 = vector.shape_cast %440 : vector<1x64x128xf32> to vector<64x128xf32>
    %cst_279 = arith.constant dense<0.000000e+00> : vector<1x128xf32>
    %442 = tpu.matmul %439, %441, %cst_279 {dimension_numbers = #tpu.dot_dimension_numbers<[1], [0], [0], [1], [0, 0, 1, 1], [], []>} : vector<1x64xf32>, vector<64x128xf32>, vector<1x128xf32> -> vector<1x128xf32>
    %c5 = arith.constant 5 : index
    %c0_280 = arith.constant 0 : index
    %443 = vector.load %arg5[%c5, %c0_280] : memref<20x128xf32, #tpu.memory_space<vmem>>, vector<1x128xf32>
    %444 = arith.addf %442, %443 : vector<1x128xf32>
    %c0_281 = arith.constant 0 : index
    %c0_282 = arith.constant 0 : index
    %c0_283 = arith.constant 0 : index
    %445 = vector.load %arg6[%c0_281, %c0_282, %c0_283] : memref<1x1x128xf32, #tpu.memory_space<vmem>>, vector<1x1x128xf32>
    %446 = vector.shape_cast %445 : vector<1x1x128xf32> to vector<1x128xf32>
    %447 = vector.shape_cast %444 : vector<1x128xf32> to vector<1x1x128xf32>
    tpu.vector_store %arg6[%c0_281, %c0_282, %c0_283], %447 {strides = array<i32>} : memref<1x1x128xf32, #tpu.memory_space<vmem>>, vector<1x1x128xf32>,
    return
  }
  func.func @transform_0(%arg0: i32) -> (i32, i32, i32) {
    %c0_i32 = arith.constant 0 : i32
    %c0_i32_0 = arith.constant 0 : i32
    %c0_i32_1 = arith.constant 0 : i32
    return %arg0, %c0_i32, %c0_i32_0 : i32, i32, i32
  }
  func.func @transform_1(%arg0: i32) -> (i32, i32) {
    %c0_i32 = arith.constant 0 : i32
    %c0_i32_0 = arith.constant 0 : i32
    %c0_i32_1 = arith.constant 0 : i32
    return %c0_i32, %c0_i32_0 : i32, i32
  }
  func.func @transform_2(%arg0: i32) -> (i32, i32, i32, i32, i32) {
    %c0_i32 = arith.constant 0 : i32
    %c0_i32_0 = arith.constant 0 : i32
    %c0_i32_1 = arith.constant 0 : i32
    %c0_i32_2 = arith.constant 0 : i32
    %c0_i32_3 = arith.constant 0 : i32
    %c0_i32_4 = arith.constant 0 : i32
    return %c0_i32, %c0_i32_0, %c0_i32_1, %c0_i32_2, %c0_i32_3 : i32, i32, i32, i32, i32
  }
  func.func @transform_3(%arg0: i32) -> (i32, i32, i32) {
    %c0_i32 = arith.constant 0 : i32
    %c0_i32_0 = arith.constant 0 : i32
    %c0_i32_1 = arith.constant 0 : i32
    %c0_i32_2 = arith.constant 0 : i32
    return %c0_i32, %c0_i32_0, %c0_i32_1 : i32, i32, i32
  }
  func.func @transform_4(%arg0: i32) -> (i32, i32) {
    %c0_i32 = arith.constant 0 : i32
    %c0_i32_0 = arith.constant 0 : i32
    %c0_i32_1 = arith.constant 0 : i32
    return %c0_i32, %c0_i32_0 : i32, i32
  }
  func.func @transform_5(%arg0: i32) -> (i32, i32, i32) {
    %c0_i32 = arith.constant 0 : i32
    %c0_i32_0 = arith.constant 0 : i32
    %c0_i32_1 = arith.constant 0 : i32
    return %arg0, %c0_i32, %c0_i32_0 : i32, i32, i32
  }
}

</mosaic_0001>

<llo_original>
// kernel: vit_forward.1
$region0: #{vit_forward.1}
  #allocation0 [shape = 'u32[]', space=smem, size = 0x4, offset = 0x4, fixed_abs, tag = 'smem constant byte address 0x4 - core index']
  #allocation1 [shape = 'u32[144,128]{1,0:T(1,128)}', space=vmem, size = 0x12000, scoped, tag = 'internal scratch']
  %s0 = inlined_call_operand.vmem [shape: f32[2,4,192], index: 0, kind: input, shape index: {}]
  %s1 = inlined_call_operand.vmem [shape: f32[576,64], index: 1, kind: input, shape index: {}]
  %s2 = inlined_call_operand.vmem [shape: f32[2,4,3,64,16], index: 2, kind: input, shape index: {}]
  %s3 = inlined_call_operand.vmem [shape: f32[3,64,128], index: 3, kind: input, shape index: {}]
  %s4 = inlined_call_operand.vmem [shape: f32[20,128], index: 4, kind: input, shape index: {}]
  %s5 = inlined_call_operand.hbm [shape: f32[2,1,128], index: 5, kind: output, shape index: {}]
  %s6 = sld [smem:[#allocation0]]
  $region53: #{vit_forward.1} parent=0
    _
  %s8 = ssub.s32 1, %s6
  %s9 = scalar_select 0, %s8, %s6
  $region1: #{vit_forward.1} parent=0
    #allocation2 [shape = 'u8[1024]{0}', space=vmem, size = 0x400, scoped, tag = 'output window, operand 0']
    #allocation3 [shape = 's32[2]{0}', space=sflag, size = 0x8, scoped, tag = 'scoped memory for vit_forward.1']
    %10 = vsyncpa [#allocation3], 0
    %s11 = scalar_lea.sflag [#allocation3], 1
    %12 = vsyncpa %s11, 0
    loop: start=0, step=1, limit=4
    $region2: #{vit_forward.1} parent=1 // loop_pre_header
      _
    $region3: #{vit_forward.1} parent=1 // loop_header
      %s14 = sphi 0, %s18
      %p15 = scmp.ge.s32.totalorder %s14, 4
      %s24 = sphi 0, %s26
      %s27 = sphi 0, %s24
      %s28 = sphi 0, %s27
      %s44 = sphi 0, %s28
      %s48 = sphi 0, %s48
      %s50 = sphi 0, %s48
      %s51 = sphi 0, %s50
      %s65 = sphi 0, %s51
      %s69 = sphi 0, %s69
      %s71 = sphi 0, %s69
      %s72 = sphi 0, %s71
      %s86 = sphi 0, %s72
      %s90 = sphi 0, %s90
      %s92 = sphi 0, %s90
      %s93 = sphi 0, %s92
      %s107 = sphi 0, %s93
      %s111 = sphi 0, %s111
      %s113 = sphi 0, %s111
      %s114 = sphi 0, %s113
      %s128 = sphi 0, %s114
      %s134 = sphi 0, %s136
      %s137 = sphi 0, %s134
      %s138 = sphi 0, %s137
      %s154 = sphi 0, %s138
    $region4: #{vit_forward.1} parent=1 // loop_header_branch
      %17 = sbr.rel (%p15) target = $region8
    $region5: #{vit_forward.1} parent=1 // loop_body
      %s19 = ssub.s32 %s14, 1
      %s20 = ssub.s32 %s14, 2
      %s21 = sadd.s32 %s14, 1
      %s22 = ssub.s32 %s14, %s21
      %p23 = scmp.eq.s32.totalorder %s22, 0
      %s25 = sadd.s32 %s24, 1
      %s26 = scalar_select %p23, %s24, %s25
      %p29 = pneg %p23
      %p30 = scmp.eq.s32.totalorder %s14, 1
      %p31 = por %p29, %p30
      %p32 = scmp.ne.s32.totalorder %s24, %s27
      %p33 = scmp.eq.s32.totalorder %s14, 0
      %p34 = por %p32, %p33
      %p35 = scmp.ne.s32.totalorder %s24, %s27
      %p36 = scmp.eq.s32.totalorder %s19, 1
      %p37 = por %p35, %p36
      %p38 = scmp.ne.s32.totalorder %s27, %s28
      %p39 = scmp.eq.s32.totalorder %s19, 0
      %p40 = por %p38, %p39
      %p41 = scmp.ne.s32.totalorder %s27, %s28
      %p42 = scmp.eq.s32.totalorder %s20, 1
      %p43 = por %p41, %p42
      %p45 = scmp.ne.s32.totalorder %s28, %s44
      %p46 = scmp.eq.s32.totalorder %s20, 0
      %p47 = por %p45, %p46
      %s49 = sadd.s32 %s48, 1
      %p52 = scmp.eq.s32.totalorder %s14, 1
      %p53 = scmp.ne.s32.totalorder %s48, %s50
      %p54 = scmp.eq.s32.totalorder %s14, 0
      %p55 = por %p53, %p54
      %p56 = scmp.ne.s32.totalorder %s48, %s50
      %p57 = scmp.eq.s32.totalorder %s19, 1
      %p58 = por %p56, %p57
      %p59 = scmp.ne.s32.totalorder %s50, %s51
      %p60 = scmp.eq.s32.totalorder %s19, 0
      %p61 = por %p59, %p60
      %p62 = scmp.ne.s32.totalorder %s50, %s51
      %p63 = scmp.eq.s32.totalorder %s20, 1
      %p64 = por %p62, %p63
      %p66 = scmp.ne.s32.totalorder %s51, %s65
      %p67 = scmp.eq.s32.totalorder %s20, 0
      %p68 = por %p66, %p67
      %s70 = sadd.s32 %s69, 1
      %p73 = scmp.eq.s32.totalorder %s14, 1
      %p74 = scmp.ne.s32.totalorder %s69, %s71
      %p75 = scmp.eq.s32.totalorder %s14, 0
      %p76 = por %p74, %p75
      %p77 = scmp.ne.s32.totalorder %s69, %s71
      %p78 = scmp.eq.s32.totalorder %s19, 1
      %p79 = por %p77, %p78
      %p80 = scmp.ne.s32.totalorder %s71, %s72
      %p81 = scmp.eq.s32.totalorder %s19, 0
      %p82 = por %p80, %p81
      %p83 = scmp.ne.s32.totalorder %s71, %s72
      %p84 = scmp.eq.s32.totalorder %s20, 1
      %p85 = por %p83, %p84
      %p87 = scmp.ne.s32.totalorder %s72, %s86
      %p88 = scmp.eq.s32.totalorder %s20, 0
      %p89 = por %p87, %p88
      %s91 = sadd.s32 %s90, 1
      %p94 = scmp.eq.s32.totalorder %s14, 1
      %p95 = scmp.ne.s32.totalorder %s90, %s92
      %p96 = scmp.eq.s32.totalorder %s14, 0
      %p97 = por %p95, %p96
      %p98 = scmp.ne.s32.totalorder %s90, %s92
      %p99 = scmp.eq.s32.totalorder %s19, 1
      %p100 = por %p98, %p99
      %p101 = scmp.ne.s32.totalorder %s92, %s93
      %p102 = scmp.eq.s32.totalorder %s19, 0
      %p103 = por %p101, %p102
      %p104 = scmp.ne.s32.totalorder %s92, %s93
      %p105 = scmp.eq.s32.totalorder %s20, 1
      %p106 = por %p104, %p105
      %p108 = scmp.ne.s32.totalorder %s93, %s107
      %p109 = scmp.eq.s32.totalorder %s20, 0
      %p110 = por %p108, %p109
      %s112 = sadd.s32 %s111, 1
      %p115 = scmp.eq.s32.totalorder %s14, 1
      %p116 = scmp.ne.s32.totalorder %s111, %s113
      %p117 = scmp.eq.s32.totalorder %s14, 0
      %p118 = por %p116, %p117
      %p119 = scmp.ne.s32.totalorder %s111, %s113
      %p120 = scmp.eq.s32.totalorder %s19, 1
      %p121 = por %p119, %p120
      %p122 = scmp.ne.s32.totalorder %s113, %s114
      %p123 = scmp.eq.s32.totalorder %s19, 0
      %p124 = por %p122, %p123
      %p125 = scmp.ne.s32.totalorder %s113, %s114
      %p126 = scmp.eq.s32.totalorder %s20, 1
      %p127 = por %p125, %p126
      %p129 = scmp.ne.s32.totalorder %s114, %s128
      %p130 = scmp.eq.s32.totalorder %s20, 0
      %p131 = por %p129, %p130
      %s132 = ssub.s32 %s14, %s21
      %p133 = scmp.eq.s32.totalorder %s132, 0
      %s135 = sadd.s32 %s134, 1
      %s136 = scalar_select %p133, %s134, %s135
      %p139 = pneg %p133
      %p140 = scmp.eq.s32.totalorder %s14, 1
      %p141 = por %p139, %p140
      %p142 = scmp.ne.s32.totalorder %s134, %s137
      %p143 = scmp.eq.s32.totalorder %s14, 0
      %p144 = por %p142, %p143
      %p145 = scmp.ne.s32.totalorder %s134, %s137
      %p146 = scmp.eq.s32.totalorder %s19, 1
      %p147 = por %p145, %p146
      %p148 = scmp.ne.s32.totalorder %s137, %s138
      %p149 = scmp.eq.s32.totalorder %s19, 0
      %p150 = por %p148, %p149
      %p151 = scmp.ne.s32.totalorder %s137, %s138
      %p152 = scmp.eq.s32.totalorder %s20, 1
      %p153 = por %p151, %p152
      %p155 = scmp.ne.s32.totalorder %s138, %s154
      %p156 = scmp.eq.s32.totalorder %s20, 0
      %p157 = por %p155, %p156
      %p158 = scmp.le.s32.totalorder 1, %s14
      %p159 = scmp.lt.s32.totalorder %s14, 3
      %p160 = pnand %p158, %p159
      %p161 = pneg %p160
      // Predicated region
      $region9: #{vit_forward.1} parent=5 // pred_check
        _
      $region10: #{vit_forward.1} parent=5 // pred_check_branch
        %163 = sbr.rel (%p160) target = $region12
      $region11: #{vit_forward.1} parent=5 // pred_region
        %s164 = ssub.s32 %s14, 1
        // Predicated region
        $region13: #{vit_forward.1} parent=11 // pred_check
          %p165 = pneg %p61
        $region14: #{vit_forward.1} parent=11 // pred_check_branch
          %167 = sbr.rel (%p165) target = $region16
        $region15: #{vit_forward.1} parent=11 // pred_region
          _
        $region16: #{vit_forward.1} parent=11 // pred_fallthru
          _
        // Predicated region
        $region17: #{vit_forward.1} parent=11 // pred_check
          %p168 = pneg %p82
        $region18: #{vit_forward.1} parent=11 // pred_check_branch
          %170 = sbr.rel (%p168) target = $region20
        $region19: #{vit_forward.1} parent=11 // pred_region
          _
        $region20: #{vit_forward.1} parent=11 // pred_fallthru
          _
        // Predicated region
        $region21: #{vit_forward.1} parent=11 // pred_check
          %p171 = pneg %p103
        $region22: #{vit_forward.1} parent=11 // pred_check_branch
          %173 = sbr.rel (%p171) target = $region24
        $region23: #{vit_forward.1} parent=11 // pred_region
          _
        $region24: #{vit_forward.1} parent=11 // pred_fallthru
          _
        // Predicated region
        $region25: #{vit_forward.1} parent=11 // pred_check
          %p174 = pneg %p124
        $region26: #{vit_forward.1} parent=11 // pred_check_branch
          %176 = sbr.rel (%p174) target = $region28
        $region27: #{vit_forward.1} parent=11 // pred_region
          _
        $region28: #{vit_forward.1} parent=11 // pred_fallthru
          _
      $region12: #{vit_forward.1} parent=5 // pred_fallthru
        _
      %p177 = scmp.lt.s32.totalorder %s14, 2
      // Predicated region
      $region29: #{vit_forward.1} parent=5 // pred_check
        %p178 = pneg %p177
      $region30: #{vit_forward.1} parent=5 // pred_check_branch
        %180 = sbr.rel (%p178) target = $region32
      $region31: #{vit_forward.1} parent=5 // pred_region
        // Predicated region
        $region33: #{vit_forward.1} parent=31 // pred_check
          %p181 = pneg %p34
        $region34: #{vit_forward.1} parent=31 // pred_check_branch
          %183 = sbr.rel (%p181) target = $region36
        $region35: #{vit_forward.1} parent=31 // pred_region
          %p184 = scmp.lt.s32.totalorder %s14, 1
          %s185 = scalar_select %p184, %s14, 1
          %s186 = smul.addr %s185, 2
          %s187 = smul.addr %s186, 4
          %s188 = scalar_lea.vmem %s0, %s187
        $region36: #{vit_forward.1} parent=31 // pred_fallthru
          _
      $region32: #{vit_forward.1} parent=5 // pred_fallthru
        _
      %p189 = scmp.le.s32.totalorder 1, %s14
      %p190 = scmp.lt.s32.totalorder %s14, 3
      %p191 = pnand %p189, %p190
      %p192 = pneg %p191
      // Predicated region
      $region37: #{vit_forward.1} parent=5 // pred_check
        _
      $region38: #{vit_forward.1} parent=5 // pred_check_branch
        %194 = sbr.rel (%p191) target = $region40
      $region39: #{vit_forward.1} parent=5 // pred_region
        %s195 = ssub.s32 %s14, 1
        %p196 = scmp.lt.s32.totalorder %s19, 1
        %s197 = scalar_select %p196, %s19, 1
        %s198 = smul.addr %s197, 2
        %s199 = smul.addr %s198, 4
        %s200 = scalar_lea.vmem %s0, %s199
        %p201 = pneg %p40
        %p202 = pneg %p37
        %p203 = pneg %p61
        %p204 = pneg %p58
        %p205 = pneg %p82
        %p206 = pneg %p79
        %p207 = pneg %p103
        %p208 = pneg %p100
        %p209 = pneg %p124
        %p210 = pneg %p121
        %p211 = pneg %p150
        %p212 = pneg %p147
        %s213 = sand.u32 %s137, 1
        %s214 = scalar_lea.sflag [#allocation3], %s213
        %s215 = sand.u32 %s137, 1
        %s216 = scalar_lea.vmem [#allocation2], %s215
        %p217 = scmp.lt.s32.totalorder %s19, 1
        %s218 = scalar_select %p217, %s19, 1
        %s219 = smul.addr %s218, 2
        %s220 = smul.addr %s219, 4
        %s221 = scalar_lea.vmem %s0, %s220
        %v222 = vld [vmem:[%s1] sm:$0xff]
        %v223 = vld [vmem:[%s1 + $0x8] sm:$0xff]
        %v224 = vld [vmem:[%s1 + $0x10] sm:$0xff]
        %v225 = vld [vmem:[%s1 + $0x18] sm:$0xff]
        %v226 = vld [vmem:[%s1 + $0x20] sm:$0xff]
        %v227 = vld [vmem:[%s1 + $0x28] sm:$0xff]
        %v228 = vld [vmem:[%s1 + $0x30] sm:$0xff]
        %v229 = vld [vmem:[%s1 + $0x38] sm:$0xff]
        %v230 = vld [vmem:[%s1 + $0x40] sm:$0xff]
        %v231 = vld [vmem:[%s1 + $0x48] sm:$0xff]
        %v232 = vld [vmem:[%s1 + $0x50] sm:$0xff]
        %v233 = vld [vmem:[%s1 + $0x58] sm:$0xff]
        %v234 = vld [vmem:[%s1 + $0x60] sm:$0xff]
        %v235 = vld [vmem:[%s1 + $0x68] sm:$0xff]
        %v236 = vld [vmem:[%s1 + $0x70] sm:$0xff]
        %v237 = vld [vmem:[%s1 + $0x78] sm:$0xff]
        %v238 = vld [vmem:[%s1 + $0x80] sm:$0xff]
        %v239 = vld [vmem:[%s1 + $0x88] sm:$0xff]
        %v240 = vld [vmem:[%s1 + $0x90] sm:$0xff]
        %v241 = vld [vmem:[%s1 + $0x98] sm:$0xff]
        %v242 = vld [vmem:[%s1 + $0xa0] sm:$0xff]
        %v243 = vld [vmem:[%s1 + $0xa8] sm:$0xff]
        %v244 = vld [vmem:[%s1 + $0xb0] sm:$0xff]
        %v245 = vld [vmem:[%s1 + $0xb8] sm:$0xff]
        %v246 = vld [vmem:[%s221] sm:$0xff]
        %v247 = vld [vmem:[%s4] sm:$0x1]
        %v248 = vlaneseq
        %v249 = vshrl.u32 %v248, 7
        %v250 = vsub.s32 0, %v249
        %v251 = vrot.slane %v247, %v250
        %v253 = vcombine.high %v246, %v246
        %vm254 = vcmask 523264
        %v255 = vsel %vm254, %v253, 0
        %257 = vmatprep.subr.mxu0 0.0
        %258 = vmatpush1.msra.mxu0 %v237
        %259 = vmatprep.subr.mxu0 0.0
        %260 = vmatpush1.msra.mxu0 %v236
        %261 = vmatprep.subr.mxu0 0.0
        %262 = vmatpush1.msra.mxu0 %v235
        %263 = vmatprep.subr.mxu0 0.0
        %264 = vmatpush1.msra.mxu0 %v234
        %265 = vmatprep.subr.mxu0 0.0
        %266 = vmatpush1.msra.mxu0 %v233
        %267 = vmatprep.subr.mxu0 0.0
        %268 = vmatpush1.msra.mxu0 %v232
        %269 = vmatprep.subr.mxu0 0.0
        %270 = vmatpush1.msra.mxu0 %v231
        %271 = vmatprep.subr.mxu0 0.0
        %272 = vmatpush1.msra.mxu0 %v230
        %273 = vmatprep.subr.mxu0 0.0
        %274 = vmatpush1.msra.mxu0 %v229
        %275 = vmatprep.subr.mxu0 0.0
        %276 = vmatpush1.msra.mxu0 %v228
        %277 = vmatprep.subr.mxu0 0.0
        %278 = vmatpush1.msra.mxu0 %v227
        %279 = vmatprep.subr.mxu0 0.0
        %280 = vmatpush1.msra.mxu0 %v226
        %281 = vmatprep.subr.mxu0 0.0
        %282 = vmatpush1.msra.mxu0 %v225
        %283 = vmatprep.subr.mxu0 0.0
        %284 = vmatpush1.msra.mxu0 %v224
        %285 = vmatprep.subr.mxu0 0.0
        %286 = vmatpush1.msra.mxu0 %v223
        %287 = vmatprep.subr.mxu0 0.0
        %288 = vmatpush1.msra.mxu0 %v222
        %289 = vmatprep.subr.mxu0 0.0
        %290 = vmatpush2.msra.mxu0 0.0
        %291 = vmatprep.subr.mxu0 0.0
        %292 = vmatpush2.msra.mxu0 0.0
        %293 = vmatprep.subr.mxu0 0.0
        %294 = vmatpush2.msra.mxu0 0.0
        %295 = vmatprep.subr.mxu0 0.0
        %296 = vmatpush2.msra.mxu0 0.0
        %297 = vmatprep.subr.mxu0 0.0
        %298 = vmatpush2.msra.mxu0 0.0
        %299 = vmatprep.subr.mxu0 0.0
        %300 = vmatpush2.msra.mxu0 0.0
        %301 = vmatprep.subr.mxu0 0.0
        %302 = vmatpush2.msra.mxu0 0.0
        %303 = vmatprep.subr.mxu0 0.0
        %304 = vmatpush2.msra.mxu0 0.0
        %305 = vmatprep.subr.mxu0 0.0
        %306 = vmatpush2.msra.mxu0 %v245
        %307 = vmatprep.subr.mxu0 0.0
        %308 = vmatpush2.msra.mxu0 %v244
        %309 = vmatprep.subr.mxu0 0.0
        %310 = vmatpush2.msra.mxu0 %v243
        %311 = vmatprep.subr.mxu0 0.0
        %312 = vmatpush2.msra.mxu0 %v242
        %313 = vmatprep.subr.mxu0 0.0
        %314 = vmatpush2.msra.mxu0 %v241
        %315 = vmatprep.subr.mxu0 0.0
        %316 = vmatpush2.msra.mxu0 %v240
        %317 = vmatprep.subr.mxu0 0.0
        %318 = vmatpush2.msra.mxu0 %v239
        %319 = vmatprep.subr.mxu0 0.0
        %320 = vmatpush2.msra.mxu0 %v238
        %321 = vmatprep.mubr.f32.mxu0 %v255
        %322 = vmatmul.mubr.f32.gmra.mxu0 %v246
        %v323 = vpop.f32.mrf.mxu0
        %v324 = vadd.f32 %v251, %v323
        %v325 = vpop.f32.mrf.mxu0
        %326 = vdwg.mxu0
        %v327 = vlaneseq
        %v328 = vshrl.u32 %v327, 7
        %v329 = vlaneseq
        %v330 = vand.u32 %v329, 127
        %v331 = vadd.s32 %v330, 1
        %vm332 = vcmp.eq.s32.totalorder %v328, %v331
        %v333 = vsel %vm332, 1, 0
        %v334 = vcvt.s32.f32 %v333
        %vm335 = vcmask 31744
        %v337 = vsel %vm335, %v334, 0
        %vm339 = vcmask 1043456
        %v341 = vsel %vm339, %v324, 0
        %343 = vmatprep.subr.mxu0 0.0
        %344 = vmatpush1.msra.mxu0 0.0
        %345 = vmatprep.subr.mxu0 0.0
        %346 = vmatpush1.msra.mxu0 0.0
        %347 = vmatprep.subr.mxu0 0.0
        %348 = vmatpush1.msra.mxu0 0.0
        %349 = vmatprep.subr.mxu0 0.0
        %350 = vmatpush1.msra.mxu0 0.0
        %351 = vmatprep.subr.mxu0 0.0
        %352 = vmatpush1.msra.mxu0 0.0
        %353 = vmatprep.subr.mxu0 0.0
        %354 = vmatpush1.msra.mxu0 0.0
        %355 = vmatprep.subr.mxu0 0.0
        %356 = vmatpush1.msra.mxu0 0.0
        %357 = vmatprep.subr.mxu0 0.0
        %358 = vmatpush1.msra.mxu0 0.0
        %359 = vmatprep.subr.mxu0 0.0
        %360 = vmatpush1.msra.mxu0 0.0
        %361 = vmatprep.subr.mxu0 0.0
        %362 = vmatpush1.msra.mxu0 0.0
        %363 = vmatprep.subr.mxu0 0.0
        %364 = vmatpush1.msra.mxu0 0.0
        %365 = vmatprep.subr.mxu0 0.0
        %366 = vmatpush1.msra.mxu0 0.0
        %367 = vmatprep.subr.mxu0 0.0
        %368 = vmatpush1.msra.mxu0 0.0
        %369 = vmatprep.subr.mxu0 0.0
        %370 = vmatpush1.msra.mxu0 0.0
        %371 = vmatprep.subr.mxu0 0.0
        %372 = vmatpush1.msra.mxu0 0.0
        %373 = vmatprep.subr.mxu0 0.0
        %374 = vmatpush1.msra.mxu0 %v341
        %375 = vmatprep.subr.mxu0 0.0
        %376 = vmatpush2.msra.mxu0 0.0
        %377 = vmatprep.subr.mxu0 0.0
        %378 = vmatpush2.msra.mxu0 0.0
        %379 = vmatprep.subr.mxu0 0.0
        %380 = vmatpush2.msra.mxu0 0.0
        %381 = vmatprep.subr.mxu0 0.0
        %382 = vmatpush2.msra.mxu0 0.0
        %383 = vmatprep.subr.mxu0 0.0
        %384 = vmatpush2.msra.mxu0 0.0
        %385 = vmatprep.subr.mxu0 0.0
        %386 = vmatpush2.msra.mxu0 0.0
        %387 = vmatprep.subr.mxu0 0.0
        %388 = vmatpush2.msra.mxu0 0.0
        %389 = vmatprep.subr.mxu0 0.0
        %390 = vmatpush2.msra.mxu0 0.0
        %391 = vmatprep.subr.mxu0 0.0
        %392 = vmatpush2.msra.mxu0 0.0
        %393 = vmatprep.subr.mxu0 0.0
        %394 = vmatpush2.msra.mxu0 0.0
        %395 = vmatprep.subr.mxu0 0.0
        %396 = vmatpush2.msra.mxu0 0.0
        %397 = vmatprep.subr.mxu0 0.0
        %398 = vmatpush2.msra.mxu0 0.0
        %399 = vmatprep.subr.mxu0 0.0
        %400 = vmatpush2.msra.mxu0 0.0
        %401 = vmatprep.subr.mxu0 0.0
        %402 = vmatpush2.msra.mxu0 0.0
        %403 = vmatprep.subr.mxu0 0.0
        %404 = vmatpush2.msra.mxu0 0.0
        %405 = vmatprep.subr.mxu0 0.0
        %406 = vmatpush2.msra.mxu0 0.0
        %407 = vmatprep.mubr.f32.mxu0 0.0
        %408 = vmatmul.mubr.f32.gmra.mxu0 %v337
        %v409 = vpop.f32.mrf.mxu0
        %v410 = vadd.f32 0.0, %v409
        %v411 = vpop.f32.mrf.mxu0
        %412 = vdwg.mxu0
        %vm413 = vcmp.eq.s32.totalorder %v328, 0
        %v414 = vld [vmem:[%s4 + $0x1] sm:$0x1]
        %v415 = vsel %vm413, 1, 0
        %vm416 = vcmp.eq.s32.totalorder %v415, 1
        %v417 = vlaneseq
        %v418 = vshrl.u32 %v417, 7
        %v419 = vsub.s32 0, %v418
        %v420 = vrot.slane %v414, %v419
        %v421 = vsel %vm416, %v420, %v410
        %v422 = vld [vmem:[%s4 + $0x2] sm:$0x1]
        %v423 = vlaneseq
        %v424 = vshrl.u32 %v423, 7
        %v425 = vsub.s32 0, %v424
        %v426 = vrot.slane %v422, %v425
        %v427 = vadd.f32 %v421, %v426
        %vm428 = vcmp.lt.s32.totalorder %v330, 5
        %v429 = vsel %vm428, 0.0, -1e+30
        %v430 = vld [vmem:[%s4 + $0x6] sm:$0x1]
        %v431 = vld [vmem:[%s4 + $0x7] sm:$0x1]
        %v432 = vsel %vm254, %v427, 0.0
        %433 = vadd.xlane.f32.xlu0 %v432
        %v434 = vpop.xlane.xlu0 %433
        %v435 = vrcp.pop 64.0
        %v436 = vmul.f32 %v434, %v435
        %v437 = vsub.f32 %v427, %v436
        %v438 = vmul.f32 %v437, %v437
        %v439 = vsel %vm254, %v438, 0.0
        %440 = vadd.xlane.f32.xlu0 %v439
        %v441 = vpop.xlane.xlu0 %440
        %v442 = vmul.f32 %v441, %v435
        %v443 = vadd.f32 %v442, 1e-05
        %v444 = vrsqrt.pop %v443
        %v445 = vmul.f32 %v437, %v444
        %v446 = vlaneseq
        %v447 = vshrl.u32 %v446, 7
        %v448 = vsub.s32 0, %v447
        %v449 = vrot.slane %v430, %v448
        %v450 = vmul.f32 %v445, %v449
        %v451 = vlaneseq
        %v452 = vshrl.u32 %v451, 7
        %v453 = vsub.s32 0, %v452
        %v454 = vrot.slane %v431, %v453
        %v455 = vadd.f32 %v450, %v454
        %v456 = vld [vmem:[%s2] sm:$0xff]
        %v457 = vld [vmem:[%s2 + $0x8] sm:$0xff]
        %v458 = vld [vmem:[%s2 + $0x10] sm:$0xff]
        %v459 = vld [vmem:[%s2 + $0x18] sm:$0xff]
        %v460 = vld [vmem:[%s2 + $0x20] sm:$0xff]
        %v461 = vld [vmem:[%s2 + $0x28] sm:$0xff]
        %v462 = vld [vmem:[%s2 + $0x30] sm:$0xff]
        %v463 = vld [vmem:[%s2 + $0x38] sm:$0xff]
        %v465 = vsel %vm254, %v455, 0
        %467 = vmatprep.subr.mxu0 0.0
        %468 = vmatpush1.msra.mxu0 0.0
        %469 = vmatprep.subr.mxu0 0.0
        %470 = vmatpush1.msra.mxu0 0.0
        %471 = vmatprep.subr.mxu0 0.0
        %472 = vmatpush1.msra.mxu0 0.0
        %473 = vmatprep.subr.mxu0 0.0
        %474 = vmatpush1.msra.mxu0 0.0
        %475 = vmatprep.subr.mxu0 0.0
        %476 = vmatpush1.msra.mxu0 0.0
        %477 = vmatprep.subr.mxu0 0.0
        %478 = vmatpush1.msra.mxu0 0.0
        %479 = vmatprep.subr.mxu0 0.0
        %480 = vmatpush1.msra.mxu0 0.0
        %481 = vmatprep.subr.mxu0 0.0
        %482 = vmatpush1.msra.mxu0 0.0
        %483 = vmatprep.subr.mxu0 0.0
        %484 = vmatpush1.msra.mxu0 %v463
        %485 = vmatprep.subr.mxu0 0.0
        %486 = vmatpush1.msra.mxu0 %v462
        %487 = vmatprep.subr.mxu0 0.0
        %488 = vmatpush1.msra.mxu0 %v461
        %489 = vmatprep.subr.mxu0 0.0
        %490 = vmatpush1.msra.mxu0 %v460
        %491 = vmatprep.subr.mxu0 0.0
        %492 = vmatpush1.msra.mxu0 %v459
        %493 = vmatprep.subr.mxu0 0.0
        %494 = vmatpush1.msra.mxu0 %v458
        %495 = vmatprep.subr.mxu0 0.0
        %496 = vmatpush1.msra.mxu0 %v457
        %497 = vmatprep.subr.mxu0 0.0
        %498 = vmatpush1.msra.mxu0 %v456
        %499 = vmatprep.subr.mxu0 0.0
        %500 = vmatpush2.msra.mxu0 0.0
        %501 = vmatprep.subr.mxu0 0.0
        %502 = vmatpush2.msra.mxu0 0.0
        %503 = vmatprep.subr.mxu0 0.0
        %504 = vmatpush2.msra.mxu0 0.0
        %505 = vmatprep.subr.mxu0 0.0
        %506 = vmatpush2.msra.mxu0 0.0
        %507 = vmatprep.subr.mxu0 0.0
        %508 = vmatpush2.msra.mxu0 0.0
        %509 = vmatprep.subr.mxu0 0.0
        %510 = vmatpush2.msra.mxu0 0.0
        %511 = vmatprep.subr.mxu0 0.0
        %512 = vmatpush2.msra.mxu0 0.0
        %513 = vmatprep.subr.mxu0 0.0
        %514 = vmatpush2.msra.mxu0 0.0
        %515 = vmatprep.subr.mxu0 0.0
        %516 = vmatpush2.msra.mxu0 0.0
        %517 = vmatprep.subr.mxu0 0.0
        %518 = vmatpush2.msra.mxu0 0.0
        %519 = vmatprep.subr.mxu0 0.0
        %520 = vmatpush2.msra.mxu0 0.0
        %521 = vmatprep.subr.mxu0 0.0
        %522 = vmatpush2.msra.mxu0 0.0
        %523 = vmatprep.subr.mxu0 0.0
        %524 = vmatpush2.msra.mxu0 0.0
        %525 = vmatprep.subr.mxu0 0.0
        %526 = vmatpush2.msra.mxu0 0.0
        %527 = vmatprep.subr.mxu0 0.0
        %528 = vmatpush2.msra.mxu0 0.0
        %529 = vmatprep.subr.mxu0 0.0
        %530 = vmatpush2.msra.mxu0 0.0
        %531 = vmatprep.mubr.f32.mxu0 0.0
        %532 = vmatmul.mubr.f32.gmra.mxu0 %v465
        %v533 = vpop.f32.mrf.mxu0
        %v534 = vadd.f32 0.0, %v533
        %v535 = vpop.f32.mrf.mxu0
        %536 = vdwg.mxu0
        %s537 = scalar_lea.vmem %s2, 64
        %v538 = vld [vmem:[%s537] sm:$0xff]
        %v539 = vld [vmem:[%s537 + $0x8] sm:$0xff]
        %v540 = vld [vmem:[%s537 + $0x10] sm:$0xff]
        %v541 = vld [vmem:[%s537 + $0x18] sm:$0xff]
        %v542 = vld [vmem:[%s537 + $0x20] sm:$0xff]
        %v543 = vld [vmem:[%s537 + $0x28] sm:$0xff]
        %v544 = vld [vmem:[%s537 + $0x30] sm:$0xff]
        %v545 = vld [vmem:[%s537 + $0x38] sm:$0xff]
        %546 = vmatprep.subr.mxu0 0.0
        %547 = vmatpush1.msra.mxu0 0.0
        %548 = vmatprep.subr.mxu0 0.0
        %549 = vmatpush1.msra.mxu0 0.0
        %550 = vmatprep.subr.mxu0 0.0
        %551 = vmatpush1.msra.mxu0 0.0
        %552 = vmatprep.subr.mxu0 0.0
        %553 = vmatpush1.msra.mxu0 0.0
        %554 = vmatprep.subr.mxu0 0.0
        %555 = vmatpush1.msra.mxu0 0.0
        %556 = vmatprep.subr.mxu0 0.0
        %557 = vmatpush1.msra.mxu0 0.0
        %558 = vmatprep.subr.mxu0 0.0
        %559 = vmatpush1.msra.mxu0 0.0
        %560 = vmatprep.subr.mxu0 0.0
        %561 = vmatpush1.msra.mxu0 0.0
        %562 = vmatprep.subr.mxu0 0.0
        %563 = vmatpush1.msra.mxu0 %v545
        %564 = vmatprep.subr.mxu0 0.0
        %565 = vmatpush1.msra.mxu0 %v544
        %566 = vmatprep.subr.mxu0 0.0
        %567 = vmatpush1.msra.mxu0 %v543
        %568 = vmatprep.subr.mxu0 0.0
        %569 = vmatpush1.msra.mxu0 %v542
        %570 = vmatprep.subr.mxu0 0.0
        %571 = vmatpush1.msra.mxu0 %v541
        %572 = vmatprep.subr.mxu0 0.0
        %573 = vmatpush1.msra.mxu0 %v540
        %574 = vmatprep.subr.mxu0 0.0
        %575 = vmatpush1.msra.mxu0 %v539
        %576 = vmatprep.subr.mxu0 0.0
        %577 = vmatpush1.msra.mxu0 %v538
        %578 = vmatprep.subr.mxu0 0.0
        %579 = vmatpush2.msra.mxu0 0.0
        %580 = vmatprep.subr.mxu0 0.0
        %581 = vmatpush2.msra.mxu0 0.0
        %582 = vmatprep.subr.mxu0 0.0
        %583 = vmatpush2.msra.mxu0 0.0
        %584 = vmatprep.subr.mxu0 0.0
        %585 = vmatpush2.msra.mxu0 0.0
        %586 = vmatprep.subr.mxu0 0.0
        %587 = vmatpush2.msra.mxu0 0.0
        %588 = vmatprep.subr.mxu0 0.0
        %589 = vmatpush2.msra.mxu0 0.0
        %590 = vmatprep.subr.mxu0 0.0
        %591 = vmatpush2.msra.mxu0 0.0
        %592 = vmatprep.subr.mxu0 0.0
        %593 = vmatpush2.msra.mxu0 0.0
        %594 = vmatprep.subr.mxu0 0.0
        %595 = vmatpush2.msra.mxu0 0.0
        %596 = vmatprep.subr.mxu0 0.0
        %597 = vmatpush2.msra.mxu0 0.0
        %598 = vmatprep.subr.mxu0 0.0
        %599 = vmatpush2.msra.mxu0 0.0
        %600 = vmatprep.subr.mxu0 0.0
        %601 = vmatpush2.msra.mxu0 0.0
        %602 = vmatprep.subr.mxu0 0.0
        %603 = vmatpush2.msra.mxu0 0.0
        %604 = vmatprep.subr.mxu0 0.0
        %605 = vmatpush2.msra.mxu0 0.0
        %606 = vmatprep.subr.mxu0 0.0
        %607 = vmatpush2.msra.mxu0 0.0
        %608 = vmatprep.subr.mxu0 0.0
        %609 = vmatpush2.msra.mxu0 0.0
        %610 = vmatprep.mubr.f32.mxu0 0.0
        %611 = vmatmul.mubr.f32.gmra.mxu0 %v465
        %v612 = vpop.f32.mrf.mxu0
        %v613 = vadd.f32 0.0, %v612
        %v614 = vpop.f32.mrf.mxu0
        %615 = vdwg.mxu0
        %s616 = scalar_lea.vmem %s2, 128
        %v617 = vld [vmem:[%s616] sm:$0xff]
        %v618 = vld [vmem:[%s616 + $0x8] sm:$0xff]
        %v619 = vld [vmem:[%s616 + $0x10] sm:$0xff]
        %v620 = vld [vmem:[%s616 + $0x18] sm:$0xff]
        %v621 = vld [vmem:[%s616 + $0x20] sm:$0xff]
        %v622 = vld [vmem:[%s616 + $0x28] sm:$0xff]
        %v623 = vld [vmem:[%s616 + $0x30] sm:$0xff]
        %v624 = vld [vmem:[%s616 + $0x38] sm:$0xff]
        %625 = vmatprep.subr.mxu0 0.0
        %626 = vmatpush1.msra.mxu0 0.0
        %627 = vmatprep.subr.mxu0 0.0
        %628 = vmatpush1.msra.mxu0 0.0
        %629 = vmatprep.subr.mxu0 0.0
        %630 = vmatpush1.msra.mxu0 0.0
        %631 = vmatprep.subr.mxu0 0.0
        %632 = vmatpush1.msra.mxu0 0.0
        %633 = vmatprep.subr.mxu0 0.0
        %634 = vmatpush1.msra.mxu0 0.0
        %635 = vmatprep.subr.mxu0 0.0
        %636 = vmatpush1.msra.mxu0 0.0
        %637 = vmatprep.subr.mxu0 0.0
        %638 = vmatpush1.msra.mxu0 0.0
        %639 = vmatprep.subr.mxu0 0.0
        %640 = vmatpush1.msra.mxu0 0.0
        %641 = vmatprep.subr.mxu0 0.0
        %642 = vmatpush1.msra.mxu0 %v624
        %643 = vmatprep.subr.mxu0 0.0
        %644 = vmatpush1.msra.mxu0 %v623
        %645 = vmatprep.subr.mxu0 0.0
        %646 = vmatpush1.msra.mxu0 %v622
        %647 = vmatprep.subr.mxu0 0.0
        %648 = vmatpush1.msra.mxu0 %v621
        %649 = vmatprep.subr.mxu0 0.0
        %650 = vmatpush1.msra.mxu0 %v620
        %651 = vmatprep.subr.mxu0 0.0
        %652 = vmatpush1.msra.mxu0 %v619
        %653 = vmatprep.subr.mxu0 0.0
        %654 = vmatpush1.msra.mxu0 %v618
        %655 = vmatprep.subr.mxu0 0.0
        %656 = vmatpush1.msra.mxu0 %v617
        %657 = vmatprep.subr.mxu0 0.0
        %658 = vmatpush2.msra.mxu0 0.0
        %659 = vmatprep.subr.mxu0 0.0
        %660 = vmatpush2.msra.mxu0 0.0
        %661 = vmatprep.subr.mxu0 0.0
        %662 = vmatpush2.msra.mxu0 0.0
        %663 = vmatprep.subr.mxu0 0.0
        %664 = vmatpush2.msra.mxu0 0.0
        %665 = vmatprep.subr.mxu0 0.0
        %666 = vmatpush2.msra.mxu0 0.0
        %667 = vmatprep.subr.mxu0 0.0
        %668 = vmatpush2.msra.mxu0 0.0
        %669 = vmatprep.subr.mxu0 0.0
        %670 = vmatpush2.msra.mxu0 0.0
        %671 = vmatprep.subr.mxu0 0.0
        %672 = vmatpush2.msra.mxu0 0.0
        %673 = vmatprep.subr.mxu0 0.0
        %674 = vmatpush2.msra.mxu0 0.0
        %675 = vmatprep.subr.mxu0 0.0
        %676 = vmatpush2.msra.mxu0 0.0
        %677 = vmatprep.subr.mxu0 0.0
        %678 = vmatpush2.msra.mxu0 0.0
        %679 = vmatprep.subr.mxu0 0.0
        %680 = vmatpush2.msra.mxu0 0.0
        %681 = vmatprep.subr.mxu0 0.0
        %682 = vmatpush2.msra.mxu0 0.0
        %683 = vmatprep.subr.mxu0 0.0
        %684 = vmatpush2.msra.mxu0 0.0
        %685 = vmatprep.subr.mxu0 0.0
        %686 = vmatpush2.msra.mxu0 0.0
        %687 = vmatprep.subr.mxu0 0.0
        %688 = vmatpush2.msra.mxu0 0.0
        %689 = vmatprep.mubr.f32.mxu0 0.0
        %690 = vmatmul.mubr.f32.gmra.mxu0 %v465
        %v691 = vpop.f32.mrf.mxu0
        %v692 = vadd.f32 0.0, %v691
        %v693 = vpop.f32.mrf.mxu0
        %694 = vdwg.mxu0
        %vm695 = vcmask 130048
        %v697 = vsel %vm695, %v534, 0
        %v700 = vsel %vm695, %v613, 0
        %702 = vmatprep.subr.mxu0 0.0
        %703 = vmatpush1.xpose.msra.mxu0 0.0
        %704 = vmatprep.subr.mxu0 0.0
        %705 = vmatpush1.xpose.msra.mxu0 0.0
        %706 = vmatprep.subr.mxu0 0.0
        %707 = vmatpush1.xpose.msra.mxu0 0.0
        %708 = vmatprep.subr.mxu0 0.0
        %709 = vmatpush1.xpose.msra.mxu0 0.0
        %710 = vmatprep.subr.mxu0 0.0
        %711 = vmatpush1.xpose.msra.mxu0 0.0
        %712 = vmatprep.subr.mxu0 0.0
        %713 = vmatpush1.xpose.msra.mxu0 0.0
        %714 = vmatprep.subr.mxu0 0.0
        %715 = vmatpush1.xpose.msra.mxu0 0.0
        %716 = vmatprep.subr.mxu0 0.0
        %717 = vmatpush1.xpose.msra.mxu0 0.0
        %718 = vmatprep.subr.mxu0 0.0
        %719 = vmatpush1.xpose.msra.mxu0 0.0
        %720 = vmatprep.subr.mxu0 0.0
        %721 = vmatpush1.xpose.msra.mxu0 0.0
        %722 = vmatprep.subr.mxu0 0.0
        %723 = vmatpush1.xpose.msra.mxu0 0.0
        %724 = vmatprep.subr.mxu0 0.0
        %725 = vmatpush1.xpose.msra.mxu0 0.0
        %726 = vmatprep.subr.mxu0 0.0
        %727 = vmatpush1.xpose.msra.mxu0 0.0
        %728 = vmatprep.subr.mxu0 0.0
        %729 = vmatpush1.xpose.msra.mxu0 0.0
        %730 = vmatprep.subr.mxu0 0.0
        %731 = vmatpush1.xpose.msra.mxu0 0.0
        %732 = vmatprep.subr.mxu0 0.0
        %733 = vmatpush1.xpose.msra.mxu0 %v700
        %734 = vmatprep.subr.mxu0 0.0
        %735 = vmatpush2.xpose.msra.mxu0 0.0
        %736 = vmatprep.subr.mxu0 0.0
        %737 = vmatpush2.xpose.msra.mxu0 0.0
        %738 = vmatprep.subr.mxu0 0.0
        %739 = vmatpush2.xpose.msra.mxu0 0.0
        %740 = vmatprep.subr.mxu0 0.0
        %741 = vmatpush2.xpose.msra.mxu0 0.0
        %742 = vmatprep.subr.mxu0 0.0
        %743 = vmatpush2.xpose.msra.mxu0 0.0
        %744 = vmatprep.subr.mxu0 0.0
        %745 = vmatpush2.xpose.msra.mxu0 0.0
        %746 = vmatprep.subr.mxu0 0.0
        %747 = vmatpush2.xpose.msra.mxu0 0.0
        %748 = vmatprep.subr.mxu0 0.0
        %749 = vmatpush2.xpose.msra.mxu0 0.0
        %750 = vmatprep.subr.mxu0 0.0
        %751 = vmatpush2.xpose.msra.mxu0 0.0
        %752 = vmatprep.subr.mxu0 0.0
        %753 = vmatpush2.xpose.msra.mxu0 0.0
        %754 = vmatprep.subr.mxu0 0.0
        %755 = vmatpush2.xpose.msra.mxu0 0.0
        %756 = vmatprep.subr.mxu0 0.0
        %757 = vmatpush2.xpose.msra.mxu0 0.0
        %758 = vmatprep.subr.mxu0 0.0
        %759 = vmatpush2.xpose.msra.mxu0 0.0
        %760 = vmatprep.subr.mxu0 0.0
        %761 = vmatpush2.xpose.msra.mxu0 0.0
        %762 = vmatprep.subr.mxu0 0.0
        %763 = vmatpush2.xpose.msra.mxu0 0.0
        %764 = vmatprep.subr.mxu0 0.0
        %765 = vmatpush2.xpose.msra.mxu0 0.0
        %766 = vmatprep.mubr.f32.mxu0 0.0
        %767 = vmatmul.mubr.f32.gmra.mxu0 %v697
        %v768 = vpop.f32.mrf.mxu0
        %v769 = vadd.f32 %v429, %v768
        %v770 = vpop.f32.mrf.mxu0
        %771 = vdwg.mxu0
        %vm772 = vcmask 64512
        %v773 = vsel %vm772, %v769, -inf
        %774 = vmax.xlane.f32.xlu0 %v773
        %v775 = vpop.xlane.xlu0 %774
        %v776 = vsub.f32 %v769, %v775
        %v777 = vmul.f32 %v776, 1.442695
        %v778 = vpow.pop %v777
        %v779 = vsel %vm772, %v778, 0.0
        %780 = vadd.xlane.f32.xlu0 %v779
        %v781 = vpop.xlane.xlu0 %780
        %v782 = vrcp.pop %v781
        %v783 = vmul.f32 %v778, %v782
        %v785 = vsel %vm772, %v783, 0
        %787 = vmatprep.subr.mxu0 0.0
        %788 = vmatpush1.msra.mxu0 0.0
        %789 = vmatprep.subr.mxu0 0.0
        %790 = vmatpush1.msra.mxu0 0.0
        %791 = vmatprep.subr.mxu0 0.0
        %792 = vmatpush1.msra.mxu0 0.0
        %793 = vmatprep.subr.mxu0 0.0
        %794 = vmatpush1.msra.mxu0 0.0
        %795 = vmatprep.subr.mxu0 0.0
        %796 = vmatpush1.msra.mxu0 0.0
        %797 = vmatprep.subr.mxu0 0.0
        %798 = vmatpush1.msra.mxu0 0.0
        %799 = vmatprep.subr.mxu0 0.0
        %800 = vmatpush1.msra.mxu0 0.0
        %801 = vmatprep.subr.mxu0 0.0
        %802 = vmatpush1.msra.mxu0 0.0
        %803 = vmatprep.subr.mxu0 0.0
        %804 = vmatpush1.msra.mxu0 0.0
        %805 = vmatprep.subr.mxu0 0.0
        %806 = vmatpush1.msra.mxu0 0.0
        %807 = vmatprep.subr.mxu0 0.0
        %808 = vmatpush1.msra.mxu0 0.0
        %809 = vmatprep.subr.mxu0 0.0
        %810 = vmatpush1.msra.mxu0 0.0
        %811 = vmatprep.subr.mxu0 0.0
        %812 = vmatpush1.msra.mxu0 0.0
        %813 = vmatprep.subr.mxu0 0.0
        %814 = vmatpush1.msra.mxu0 0.0
        %815 = vmatprep.subr.mxu0 0.0
        %816 = vmatpush1.msra.mxu0 0.0
        %817 = vmatprep.subr.mxu0 0.0
        %818 = vmatpush1.msra.mxu0 %v692
        %819 = vmatprep.subr.mxu0 0.0
        %820 = vmatpush2.msra.mxu0 0.0
        %821 = vmatprep.subr.mxu0 0.0
        %822 = vmatpush2.msra.mxu0 0.0
        %823 = vmatprep.subr.mxu0 0.0
        %824 = vmatpush2.msra.mxu0 0.0
        %825 = vmatprep.subr.mxu0 0.0
        %826 = vmatpush2.msra.mxu0 0.0
        %827 = vmatprep.subr.mxu0 0.0
        %828 = vmatpush2.msra.mxu0 0.0
        %829 = vmatprep.subr.mxu0 0.0
        %830 = vmatpush2.msra.mxu0 0.0
        %831 = vmatprep.subr.mxu0 0.0
        %832 = vmatpush2.msra.mxu0 0.0
        %833 = vmatprep.subr.mxu0 0.0
        %834 = vmatpush2.msra.mxu0 0.0
        %835 = vmatprep.subr.mxu0 0.0
        %836 = vmatpush2.msra.mxu0 0.0
        %837 = vmatprep.subr.mxu0 0.0
        %838 = vmatpush2.msra.mxu0 0.0
        %839 = vmatprep.subr.mxu0 0.0
        %840 = vmatpush2.msra.mxu0 0.0
        %841 = vmatprep.subr.mxu0 0.0
        %842 = vmatpush2.msra.mxu0 0.0
        %843 = vmatprep.subr.mxu0 0.0
        %844 = vmatpush2.msra.mxu0 0.0
        %845 = vmatprep.subr.mxu0 0.0
        %846 = vmatpush2.msra.mxu0 0.0
        %847 = vmatprep.subr.mxu0 0.0
        %848 = vmatpush2.msra.mxu0 0.0
        %849 = vmatprep.subr.mxu0 0.0
        %850 = vmatpush2.msra.mxu0 0.0
        %851 = vmatprep.mubr.f32.mxu0 0.0
        %852 = vmatmul.mubr.f32.gmra.mxu0 %v785
        %v853 = vpop.f32.mrf.mxu0
        %v854 = vadd.f32 0.0, %v853
        %v855 = vpop.f32.mrf.mxu0
        %856 = vdwg.mxu0
        %s857 = scalar_lea.vmem %s2, 192
        %v858 = vld [vmem:[%s857] sm:$0xff]
        %v859 = vld [vmem:[%s857 + $0x8] sm:$0xff]
        %v860 = vld [vmem:[%s857 + $0x10] sm:$0xff]
        %v861 = vld [vmem:[%s857 + $0x18] sm:$0xff]
        %v862 = vld [vmem:[%s857 + $0x20] sm:$0xff]
        %v863 = vld [vmem:[%s857 + $0x28] sm:$0xff]
        %v864 = vld [vmem:[%s857 + $0x30] sm:$0xff]
        %v865 = vld [vmem:[%s857 + $0x38] sm:$0xff]
        %866 = vmatprep.subr.mxu0 0.0
        %867 = vmatpush1.msra.mxu0 0.0
        %868 = vmatprep.subr.mxu0 0.0
        %869 = vmatpush1.msra.mxu0 0.0
        %870 = vmatprep.subr.mxu0 0.0
        %871 = vmatpush1.msra.mxu0 0.0
        %872 = vmatprep.subr.mxu0 0.0
        %873 = vmatpush1.msra.mxu0 0.0
        %874 = vmatprep.subr.mxu0 0.0
        %875 = vmatpush1.msra.mxu0 0.0
        %876 = vmatprep.subr.mxu0 0.0
        %877 = vmatpush1.msra.mxu0 0.0
        %878 = vmatprep.subr.mxu0 0.0
        %879 = vmatpush1.msra.mxu0 0.0
        %880 = vmatprep.subr.mxu0 0.0
        %881 = vmatpush1.msra.mxu0 0.0
        %882 = vmatprep.subr.mxu0 0.0
        %883 = vmatpush1.msra.mxu0 %v865
        %884 = vmatprep.subr.mxu0 0.0
        %885 = vmatpush1.msra.mxu0 %v864
        %886 = vmatprep.subr.mxu0 0.0
        %887 = vmatpush1.msra.mxu0 %v863
        %888 = vmatprep.subr.mxu0 0.0
        %889 = vmatpush1.msra.mxu0 %v862
        %890 = vmatprep.subr.mxu0 0.0
        %891 = vmatpush1.msra.mxu0 %v861
        %892 = vmatprep.subr.mxu0 0.0
        %893 = vmatpush1.msra.mxu0 %v860
        %894 = vmatprep.subr.mxu0 0.0
        %895 = vmatpush1.msra.mxu0 %v859
        %896 = vmatprep.subr.mxu0 0.0
        %897 = vmatpush1.msra.mxu0 %v858
        %898 = vmatprep.subr.mxu0 0.0
        %899 = vmatpush2.msra.mxu0 0.0
        %900 = vmatprep.subr.mxu0 0.0
        %901 = vmatpush2.msra.mxu0 0.0
        %902 = vmatprep.subr.mxu0 0.0
        %903 = vmatpush2.msra.mxu0 0.0
        %904 = vmatprep.subr.mxu0 0.0
        %905 = vmatpush2.msra.mxu0 0.0
        %906 = vmatprep.subr.mxu0 0.0
        %907 = vmatpush2.msra.mxu0 0.0
        %908 = vmatprep.subr.mxu0 0.0
        %909 = vmatpush2.msra.mxu0 0.0
        %910 = vmatprep.subr.mxu0 0.0
        %911 = vmatpush2.msra.mxu0 0.0
        %912 = vmatprep.subr.mxu0 0.0
        %913 = vmatpush2.msra.mxu0 0.0
        %914 = vmatprep.subr.mxu0 0.0
        %915 = vmatpush2.msra.mxu0 0.0
        %916 = vmatprep.subr.mxu0 0.0
        %917 = vmatpush2.msra.mxu0 0.0
        %918 = vmatprep.subr.mxu0 0.0
        %919 = vmatpush2.msra.mxu0 0.0
        %920 = vmatprep.subr.mxu0 0.0
        %921 = vmatpush2.msra.mxu0 0.0
        %922 = vmatprep.subr.mxu0 0.0
        %923 = vmatpush2.msra.mxu0 0.0
        %924 = vmatprep.subr.mxu0 0.0
        %925 = vmatpush2.msra.mxu0 0.0
        %926 = vmatprep.subr.mxu0 0.0
        %927 = vmatpush2.msra.mxu0 0.0
        %928 = vmatprep.subr.mxu0 0.0
        %929 = vmatpush2.msra.mxu0 0.0
        %930 = vmatprep.mubr.f32.mxu0 0.0
        %931 = vmatmul.mubr.f32.gmra.mxu0 %v465
        %v932 = vpop.f32.mrf.mxu0
        %v933 = vadd.f32 0.0, %v932
        %v934 = vpop.f32.mrf.mxu0
        %935 = vdwg.mxu0
        %s936 = scalar_lea.vmem %s2, 256
        %v937 = vld [vmem:[%s936] sm:$0xff]
        %v938 = vld [vmem:[%s936 + $0x8] sm:$0xff]
        %v939 = vld [vmem:[%s936 + $0x10] sm:$0xff]
        %v940 = vld [vmem:[%s936 + $0x18] sm:$0xff]
        %v941 = vld [vmem:[%s936 + $0x20] sm:$0xff]
        %v942 = vld [vmem:[%s936 + $0x28] sm:$0xff]
        %v943 = vld [vmem:[%s936 + $0x30] sm:$0xff]
        %v944 = vld [vmem:[%s936 + $0x38] sm:$0xff]
        %945 = vmatprep.subr.mxu0 0.0
        %946 = vmatpush1.msra.mxu0 0.0
        %947 = vmatprep.subr.mxu0 0.0
        %948 = vmatpush1.msra.mxu0 0.0
        %949 = vmatprep.subr.mxu0 0.0
        %950 = vmatpush1.msra.mxu0 0.0
        %951 = vmatprep.subr.mxu0 0.0
        %952 = vmatpush1.msra.mxu0 0.0
        %953 = vmatprep.subr.mxu0 0.0
        %954 = vmatpush1.msra.mxu0 0.0
        %955 = vmatprep.subr.mxu0 0.0
        %956 = vmatpush1.msra.mxu0 0.0
        %957 = vmatprep.subr.mxu0 0.0
        %958 = vmatpush1.msra.mxu0 0.0
        %959 = vmatprep.subr.mxu0 0.0
        %960 = vmatpush1.msra.mxu0 0.0
        %961 = vmatprep.subr.mxu0 0.0
        %962 = vmatpush1.msra.mxu0 %v944
        %963 = vmatprep.subr.mxu0 0.0
        %964 = vmatpush1.msra.mxu0 %v943
        %965 = vmatprep.subr.mxu0 0.0
        %966 = vmatpush1.msra.mxu0 %v942
        %967 = vmatprep.subr.mxu0 0.0
        %968 = vmatpush1.msra.mxu0 %v941
        %969 = vmatprep.subr.mxu0 0.0
        %970 = vmatpush1.msra.mxu0 %v940
        %971 = vmatprep.subr.mxu0 0.0
        %972 = vmatpush1.msra.mxu0 %v939
        %973 = vmatprep.subr.mxu0 0.0
        %974 = vmatpush1.msra.mxu0 %v938
        %975 = vmatprep.subr.mxu0 0.0
        %976 = vmatpush1.msra.mxu0 %v937
        %977 = vmatprep.subr.mxu0 0.0
        %978 = vmatpush2.msra.mxu0 0.0
        %979 = vmatprep.subr.mxu0 0.0
        %980 = vmatpush2.msra.mxu0 0.0
        %981 = vmatprep.subr.mxu0 0.0
        %982 = vmatpush2.msra.mxu0 0.0
        %983 = vmatprep.subr.mxu0 0.0
        %984 = vmatpush2.msra.mxu0 0.0
        %985 = vmatprep.subr.mxu0 0.0
        %986 = vmatpush2.msra.mxu0 0.0
        %987 = vmatprep.subr.mxu0 0.0
        %988 = vmatpush2.msra.mxu0 0.0
        %989 = vmatprep.subr.mxu0 0.0
        %990 = vmatpush2.msra.mxu0 0.0
        %991 = vmatprep.subr.mxu0 0.0
        %992 = vmatpush2.msra.mxu0 0.0
        %993 = vmatprep.subr.mxu0 0.0
        %994 = vmatpush2.msra.mxu0 0.0
        %995 = vmatprep.subr.mxu0 0.0
        %996 = vmatpush2.msra.mxu0 0.0
        %997 = vmatprep.subr.mxu0 0.0
        %998 = vmatpush2.msra.mxu0 0.0
        %999 = vmatprep.subr.mxu0 0.0
        %1000 = vmatpush2.msra.mxu0 0.0
        %1001 = vmatprep.subr.mxu0 0.0
        %1002 = vmatpush2.msra.mxu0 0.0
        %1003 = vmatprep.subr.mxu0 0.0
        %1004 = vmatpush2.msra.mxu0 0.0
        %1005 = vmatprep.subr.mxu0 0.0
        %1006 = vmatpush2.msra.mxu0 0.0
        %1007 = vmatprep.subr.mxu0 0.0
        %1008 = vmatpush2.msra.mxu0 0.0
        %1009 = vmatprep.mubr.f32.mxu0 0.0
        %1010 = vmatmul.mubr.f32.gmra.mxu0 %v465
        %v1011 = vpop.f32.mrf.mxu0
        %v1012 = vadd.f32 0.0, %v1011
        %v1013 = vpop.f32.mrf.mxu0
        %1014 = vdwg.mxu0
        %s1015 = scalar_lea.vmem %s2, 320
        %v1016 = vld [vmem:[%s1015] sm:$0xff]
        %v1017 = vld [vmem:[%s1015 + $0x8] sm:$0xff]
        %v1018 = vld [vmem:[%s1015 + $0x10] sm:$0xff]
        %v1019 = vld [vmem:[%s1015 + $0x18] sm:$0xff]
        %v1020 = vld [vmem:[%s1015 + $0x20] sm:$0xff]
        %v1021 = vld [vmem:[%s1015 + $0x28] sm:$0xff]
        %v1022 = vld [vmem:[%s1015 + $0x30] sm:$0xff]
        %v1023 = vld [vmem:[%s1015 + $0x38] sm:$0xff]
        %1024 = vmatprep.subr.mxu0 0.0
        %1025 = vmatpush1.msra.mxu0 0.0
        %1026 = vmatprep.subr.mxu0 0.0
        %1027 = vmatpush1.msra.mxu0 0.0
        %1028 = vmatprep.subr.mxu0 0.0
        %1029 = vmatpush1.msra.mxu0 0.0
        %1030 = vmatprep.subr.mxu0 0.0
        %1031 = vmatpush1.msra.mxu0 0.0
        %1032 = vmatprep.subr.mxu0 0.0
        %1033 = vmatpush1.msra.mxu0 0.0
        %1034 = vmatprep.subr.mxu0 0.0
        %1035 = vmatpush1.msra.mxu0 0.0
        %1036 = vmatprep.subr.mxu0 0.0
        %1037 = vmatpush1.msra.mxu0 0.0
        %1038 = vmatprep.subr.mxu0 0.0
        %1039 = vmatpush1.msra.mxu0 0.0
        %1040 = vmatprep.subr.mxu0 0.0
        %1041 = vmatpush1.msra.mxu0 %v1023
        %1042 = vmatprep.subr.mxu0 0.0
        %1043 = vmatpush1.msra.mxu0 %v1022
        %1044 = vmatprep.subr.mxu0 0.0
        %1045 = vmatpush1.msra.mxu0 %v1021
        %1046 = vmatprep.subr.mxu0 0.0
        %1047 = vmatpush1.msra.mxu0 %v1020
        %1048 = vmatprep.subr.mxu0 0.0
        %1049 = vmatpush1.msra.mxu0 %v1019
        %1050 = vmatprep.subr.mxu0 0.0
        %1051 = vmatpush1.msra.mxu0 %v1018
        %1052 = vmatprep.subr.mxu0 0.0
        %1053 = vmatpush1.msra.mxu0 %v1017
        %1054 = vmatprep.subr.mxu0 0.0
        %1055 = vmatpush1.msra.mxu0 %v1016
        %1056 = vmatprep.subr.mxu0 0.0
        %1057 = vmatpush2.msra.mxu0 0.0
        %1058 = vmatprep.subr.mxu0 0.0
        %1059 = vmatpush2.msra.mxu0 0.0
        %1060 = vmatprep.subr.mxu0 0.0
        %1061 = vmatpush2.msra.mxu0 0.0
        %1062 = vmatprep.subr.mxu0 0.0
        %1063 = vmatpush2.msra.mxu0 0.0
        %1064 = vmatprep.subr.mxu0 0.0
        %1065 = vmatpush2.msra.mxu0 0.0
        %1066 = vmatprep.subr.mxu0 0.0
        %1067 = vmatpush2.msra.mxu0 0.0
        %1068 = vmatprep.subr.mxu0 0.0
        %1069 = vmatpush2.msra.mxu0 0.0
        %1070 = vmatprep.subr.mxu0 0.0
        %1071 = vmatpush2.msra.mxu0 0.0
        %1072 = vmatprep.subr.mxu0 0.0
        %1073 = vmatpush2.msra.mxu0 0.0
        %1074 = vmatprep.subr.mxu0 0.0
        %1075 = vmatpush2.msra.mxu0 0.0
        %1076 = vmatprep.subr.mxu0 0.0
        %1077 = vmatpush2.msra.mxu0 0.0
        %1078 = vmatprep.subr.mxu0 0.0
        %1079 = vmatpush2.msra.mxu0 0.0
        %1080 = vmatprep.subr.mxu0 0.0
        %1081 = vmatpush2.msra.mxu0 0.0
        %1082 = vmatprep.subr.mxu0 0.0
        %1083 = vmatpush2.msra.mxu0 0.0
        %1084 = vmatprep.subr.mxu0 0.0
        %1085 = vmatpush2.msra.mxu0 0.0
        %1086 = vmatprep.subr.mxu0 0.0
        %1087 = vmatpush2.msra.mxu0 0.0
        %1088 = vmatprep.mubr.f32.mxu0 0.0
        %1089 = vmatmul.mubr.f32.gmra.mxu0 %v465
        %v1090 = vpop.f32.mrf.mxu0
        %v1091 = vadd.f32 0.0, %v1090
        %v1092 = vpop.f32.mrf.mxu0
        %1093 = vdwg.mxu0
        %v1095 = vsel %vm695, %v933, 0
        %v1098 = vsel %vm695, %v1012, 0
        %1100 = vmatprep.subr.mxu0 0.0
        %1101 = vmatpush1.xpose.msra.mxu0 0.0
        %1102 = vmatprep.subr.mxu0 0.0
        %1103 = vmatpush1.xpose.msra.mxu0 0.0
        %1104 = vmatprep.subr.mxu0 0.0
        %1105 = vmatpush1.xpose.msra.mxu0 0.0
        %1106 = vmatprep.subr.mxu0 0.0
        %1107 = vmatpush1.xpose.msra.mxu0 0.0
        %1108 = vmatprep.subr.mxu0 0.0
        %1109 = vmatpush1.xpose.msra.mxu0 0.0
        %1110 = vmatprep.subr.mxu0 0.0
        %1111 = vmatpush1.xpose.msra.mxu0 0.0
        %1112 = vmatprep.subr.mxu0 0.0
        %1113 = vmatpush1.xpose.msra.mxu0 0.0
        %1114 = vmatprep.subr.mxu0 0.0
        %1115 = vmatpush1.xpose.msra.mxu0 0.0
        %1116 = vmatprep.subr.mxu0 0.0
        %1117 = vmatpush1.xpose.msra.mxu0 0.0
        %1118 = vmatprep.subr.mxu0 0.0
        %1119 = vmatpush1.xpose.msra.mxu0 0.0
        %1120 = vmatprep.subr.mxu0 0.0
        %1121 = vmatpush1.xpose.msra.mxu0 0.0
        %1122 = vmatprep.subr.mxu0 0.0
        %1123 = vmatpush1.xpose.msra.mxu0 0.0
        %1124 = vmatprep.subr.mxu0 0.0
        %1125 = vmatpush1.xpose.msra.mxu0 0.0
        %1126 = vmatprep.subr.mxu0 0.0
        %1127 = vmatpush1.xpose.msra.mxu0 0.0
        %1128 = vmatprep.subr.mxu0 0.0
        %1129 = vmatpush1.xpose.msra.mxu0 0.0
        %1130 = vmatprep.subr.mxu0 0.0
        %1131 = vmatpush1.xpose.msra.mxu0 %v1098
        %1132 = vmatprep.subr.mxu0 0.0
        %1133 = vmatpush2.xpose.msra.mxu0 0.0
        %1134 = vmatprep.subr.mxu0 0.0
        %1135 = vmatpush2.xpose.msra.mxu0 0.0
        %1136 = vmatprep.subr.mxu0 0.0
        %1137 = vmatpush2.xpose.msra.mxu0 0.0
        %1138 = vmatprep.subr.mxu0 0.0
        %1139 = vmatpush2.xpose.msra.mxu0 0.0
        %1140 = vmatprep.subr.mxu0 0.0
        %1141 = vmatpush2.xpose.msra.mxu0 0.0
        %1142 = vmatprep.subr.mxu0 0.0
        %1143 = vmatpush2.xpose.msra.mxu0 0.0
        %1144 = vmatprep.subr.mxu0 0.0
        %1145 = vmatpush2.xpose.msra.mxu0 0.0
        %1146 = vmatprep.subr.mxu0 0.0
        %1147 = vmatpush2.xpose.msra.mxu0 0.0
        %1148 = vmatprep.subr.mxu0 0.0
        %1149 = vmatpush2.xpose.msra.mxu0 0.0
        %1150 = vmatprep.subr.mxu0 0.0
        %1151 = vmatpush2.xpose.msra.mxu0 0.0
        %1152 = vmatprep.subr.mxu0 0.0
        %1153 = vmatpush2.xpose.msra.mxu0 0.0
        %1154 = vmatprep.subr.mxu0 0.0
        %1155 = vmatpush2.xpose.msra.mxu0 0.0
        %1156 = vmatprep.subr.mxu0 0.0
        %1157 = vmatpush2.xpose.msra.mxu0 0.0
        %1158 = vmatprep.subr.mxu0 0.0
        %1159 = vmatpush2.xpose.msra.mxu0 0.0
        %1160 = vmatprep.subr.mxu0 0.0
        %1161 = vmatpush2.xpose.msra.mxu0 0.0
        %1162 = vmatprep.subr.mxu0 0.0
        %1163 = vmatpush2.xpose.msra.mxu0 0.0
        %1164 = vmatprep.mubr.f32.mxu0 0.0
        %1165 = vmatmul.mubr.f32.gmra.mxu0 %v1095
        %v1166 = vpop.f32.mrf.mxu0
        %v1167 = vadd.f32 %v429, %v1166
        %v1168 = vpop.f32.mrf.mxu0
        %1169 = vdwg.mxu0
        %v1170 = vsel %vm772, %v1167, -inf
        %1171 = vmax.xlane.f32.xlu0 %v1170
        %v1172 = vpop.xlane.xlu0 %1171
        %v1173 = vsub.f32 %v1167, %v1172
        %v1174 = vmul.f32 %v1173, 1.442695
        %v1175 = vpow.pop %v1174
        %v1176 = vsel %vm772, %v1175, 0.0
        %1177 = vadd.xlane.f32.xlu0 %v1176
        %v1178 = vpop.xlane.xlu0 %1177
        %v1179 = vrcp.pop %v1178
        %v1180 = vmul.f32 %v1175, %v1179
        %v1182 = vsel %vm772, %v1180, 0
        %1184 = vmatprep.subr.mxu0 0.0
        %1185 = vmatpush1.msra.mxu0 0.0
        %1186 = vmatprep.subr.mxu0 0.0
        %1187 = vmatpush1.msra.mxu0 0.0
        %1188 = vmatprep.subr.mxu0 0.0
        %1189 = vmatpush1.msra.mxu0 0.0
        %1190 = vmatprep.subr.mxu0 0.0
        %1191 = vmatpush1.msra.mxu0 0.0
        %1192 = vmatprep.subr.mxu0 0.0
        %1193 = vmatpush1.msra.mxu0 0.0
        %1194 = vmatprep.subr.mxu0 0.0
        %1195 = vmatpush1.msra.mxu0 0.0
        %1196 = vmatprep.subr.mxu0 0.0
        %1197 = vmatpush1.msra.mxu0 0.0
        %1198 = vmatprep.subr.mxu0 0.0
        %1199 = vmatpush1.msra.mxu0 0.0
        %1200 = vmatprep.subr.mxu0 0.0
        %1201 = vmatpush1.msra.mxu0 0.0
        %1202 = vmatprep.subr.mxu0 0.0
        %1203 = vmatpush1.msra.mxu0 0.0
        %1204 = vmatprep.subr.mxu0 0.0
        %1205 = vmatpush1.msra.mxu0 0.0
        %1206 = vmatprep.subr.mxu0 0.0
        %1207 = vmatpush1.msra.mxu0 0.0
        %1208 = vmatprep.subr.mxu0 0.0
        %1209 = vmatpush1.msra.mxu0 0.0
        %1210 = vmatprep.subr.mxu0 0.0
        %1211 = vmatpush1.msra.mxu0 0.0
        %1212 = vmatprep.subr.mxu0 0.0
        %1213 = vmatpush1.msra.mxu0 0.0
        %1214 = vmatprep.subr.mxu0 0.0
        %1215 = vmatpush1.msra.mxu0 %v1091
        %1216 = vmatprep.subr.mxu0 0.0
        %1217 = vmatpush2.msra.mxu0 0.0
        %1218 = vmatprep.subr.mxu0 0.0
        %1219 = vmatpush2.msra.mxu0 0.0
        %1220 = vmatprep.subr.mxu0 0.0
        %1221 = vmatpush2.msra.mxu0 0.0
        %1222 = vmatprep.subr.mxu0 0.0
        %1223 = vmatpush2.msra.mxu0 0.0
        %1224 = vmatprep.subr.mxu0 0.0
        %1225 = vmatpush2.msra.mxu0 0.0
        %1226 = vmatprep.subr.mxu0 0.0
        %1227 = vmatpush2.msra.mxu0 0.0
        %1228 = vmatprep.subr.mxu0 0.0
        %1229 = vmatpush2.msra.mxu0 0.0
        %1230 = vmatprep.subr.mxu0 0.0
        %1231 = vmatpush2.msra.mxu0 0.0
        %1232 = vmatprep.subr.mxu0 0.0
        %1233 = vmatpush2.msra.mxu0 0.0
        %1234 = vmatprep.subr.mxu0 0.0
        %1235 = vmatpush2.msra.mxu0 0.0
        %1236 = vmatprep.subr.mxu0 0.0
        %1237 = vmatpush2.msra.mxu0 0.0
        %1238 = vmatprep.subr.mxu0 0.0
        %1239 = vmatpush2.msra.mxu0 0.0
        %1240 = vmatprep.subr.mxu0 0.0
        %1241 = vmatpush2.msra.mxu0 0.0
        %1242 = vmatprep.subr.mxu0 0.0
        %1243 = vmatpush2.msra.mxu0 0.0
        %1244 = vmatprep.subr.mxu0 0.0
        %1245 = vmatpush2.msra.mxu0 0.0
        %1246 = vmatprep.subr.mxu0 0.0
        %1247 = vmatpush2.msra.mxu0 0.0
        %1248 = vmatprep.mubr.f32.mxu0 0.0
        %1249 = vmatmul.mubr.f32.gmra.mxu0 %v1182
        %v1250 = vpop.f32.mrf.mxu0
        %v1251 = vadd.f32 0.0, %v1250
        %v1252 = vpop.f32.mrf.mxu0
        %1253 = vdwg.mxu0
        %s1254 = scalar_lea.vmem %s2, 384
        %v1255 = vld [vmem:[%s1254] sm:$0xff]
        %v1256 = vld [vmem:[%s1254 + $0x8] sm:$0xff]
        %v1257 = vld [vmem:[%s1254 + $0x10] sm:$0xff]
        %v1258 = vld [vmem:[%s1254 + $0x18] sm:$0xff]
        %v1259 = vld [vmem:[%s1254 + $0x20] sm:$0xff]
        %v1260 = vld [vmem:[%s1254 + $0x28] sm:$0xff]
        %v1261 = vld [vmem:[%s1254 + $0x30] sm:$0xff]
        %v1262 = vld [vmem:[%s1254 + $0x38] sm:$0xff]
        %1263 = vmatprep.subr.mxu0 0.0
        %1264 = vmatpush1.msra.mxu0 0.0
        %1265 = vmatprep.subr.mxu0 0.0
        %1266 = vmatpush1.msra.mxu0 0.0
        %1267 = vmatprep.subr.mxu0 0.0
        %1268 = vmatpush1.msra.mxu0 0.0
        %1269 = vmatprep.subr.mxu0 0.0
        %1270 = vmatpush1.msra.mxu0 0.0
        %1271 = vmatprep.subr.mxu0 0.0
        %1272 = vmatpush1.msra.mxu0 0.0
        %1273 = vmatprep.subr.mxu0 0.0
        %1274 = vmatpush1.msra.mxu0 0.0
        %1275 = vmatprep.subr.mxu0 0.0
        %1276 = vmatpush1.msra.mxu0 0.0
        %1277 = vmatprep.subr.mxu0 0.0
        %1278 = vmatpush1.msra.mxu0 0.0
        %1279 = vmatprep.subr.mxu0 0.0
        %1280 = vmatpush1.msra.mxu0 %v1262
        %1281 = vmatprep.subr.mxu0 0.0
        %1282 = vmatpush1.msra.mxu0 %v1261
        %1283 = vmatprep.subr.mxu0 0.0
        %1284 = vmatpush1.msra.mxu0 %v1260
        %1285 = vmatprep.subr.mxu0 0.0
        %1286 = vmatpush1.msra.mxu0 %v1259
        %1287 = vmatprep.subr.mxu0 0.0
        %1288 = vmatpush1.msra.mxu0 %v1258
        %1289 = vmatprep.subr.mxu0 0.0
        %1290 = vmatpush1.msra.mxu0 %v1257
        %1291 = vmatprep.subr.mxu0 0.0
        %1292 = vmatpush1.msra.mxu0 %v1256
        %1293 = vmatprep.subr.mxu0 0.0
        %1294 = vmatpush1.msra.mxu0 %v1255
        %1295 = vmatprep.subr.mxu0 0.0
        %1296 = vmatpush2.msra.mxu0 0.0
        %1297 = vmatprep.subr.mxu0 0.0
        %1298 = vmatpush2.msra.mxu0 0.0
        %1299 = vmatprep.subr.mxu0 0.0
        %1300 = vmatpush2.msra.mxu0 0.0
        %1301 = vmatprep.subr.mxu0 0.0
        %1302 = vmatpush2.msra.mxu0 0.0
        %1303 = vmatprep.subr.mxu0 0.0
        %1304 = vmatpush2.msra.mxu0 0.0
        %1305 = vmatprep.subr.mxu0 0.0
        %1306 = vmatpush2.msra.mxu0 0.0
        %1307 = vmatprep.subr.mxu0 0.0
        %1308 = vmatpush2.msra.mxu0 0.0
        %1309 = vmatprep.subr.mxu0 0.0
        %1310 = vmatpush2.msra.mxu0 0.0
        %1311 = vmatprep.subr.mxu0 0.0
        %1312 = vmatpush2.msra.mxu0 0.0
        %1313 = vmatprep.subr.mxu0 0.0
        %1314 = vmatpush2.msra.mxu0 0.0
        %1315 = vmatprep.subr.mxu0 0.0
        %1316 = vmatpush2.msra.mxu0 0.0
        %1317 = vmatprep.subr.mxu0 0.0
        %1318 = vmatpush2.msra.mxu0 0.0
        %1319 = vmatprep.subr.mxu0 0.0
        %1320 = vmatpush2.msra.mxu0 0.0
        %1321 = vmatprep.subr.mxu0 0.0
        %1322 = vmatpush2.msra.mxu0 0.0
        %1323 = vmatprep.subr.mxu0 0.0
        %1324 = vmatpush2.msra.mxu0 0.0
        %1325 = vmatprep.subr.mxu0 0.0
        %1326 = vmatpush2.msra.mxu0 0.0
        %1327 = vmatprep.mubr.f32.mxu0 0.0
        %1328 = vmatmul.mubr.f32.gmra.mxu0 %v465
        %v1329 = vpop.f32.mrf.mxu0
        %v1330 = vadd.f32 0.0, %v1329
        %v1331 = vpop.f32.mrf.mxu0
        %1332 = vdwg.mxu0
        %s1333 = scalar_lea.vmem %s2, 448
        %v1334 = vld [vmem:[%s1333] sm:$0xff]
        %v1335 = vld [vmem:[%s1333 + $0x8] sm:$0xff]
        %v1336 = vld [vmem:[%s1333 + $0x10] sm:$0xff]
        %v1337 = vld [vmem:[%s1333 + $0x18] sm:$0xff]
        %v1338 = vld [vmem:[%s1333 + $0x20] sm:$0xff]
        %v1339 = vld [vmem:[%s1333 + $0x28] sm:$0xff]
        %v1340 = vld [vmem:[%s1333 + $0x30] sm:$0xff]
        %v1341 = vld [vmem:[%s1333 + $0x38] sm:$0xff]
        %1342 = vmatprep.subr.mxu0 0.0
        %1343 = vmatpush1.msra.mxu0 0.0
        %1344 = vmatprep.subr.mxu0 0.0
        %1345 = vmatpush1.msra.mxu0 0.0
        %1346 = vmatprep.subr.mxu0 0.0
        %1347 = vmatpush1.msra.mxu0 0.0
        %1348 = vmatprep.subr.mxu0 0.0
        %1349 = vmatpush1.msra.mxu0 0.0
        %1350 = vmatprep.subr.mxu0 0.0
        %1351 = vmatpush1.msra.mxu0 0.0
        %1352 = vmatprep.subr.mxu0 0.0
        %1353 = vmatpush1.msra.mxu0 0.0
        %1354 = vmatprep.subr.mxu0 0.0
        %1355 = vmatpush1.msra.mxu0 0.0
        %1356 = vmatprep.subr.mxu0 0.0
        %1357 = vmatpush1.msra.mxu0 0.0
        %1358 = vmatprep.subr.mxu0 0.0
        %1359 = vmatpush1.msra.mxu0 %v1341
        %1360 = vmatprep.subr.mxu0 0.0
        %1361 = vmatpush1.msra.mxu0 %v1340
        %1362 = vmatprep.subr.mxu0 0.0
        %1363 = vmatpush1.msra.mxu0 %v1339
        %1364 = vmatprep.subr.mxu0 0.0
        %1365 = vmatpush1.msra.mxu0 %v1338
        %1366 = vmatprep.subr.mxu0 0.0
        %1367 = vmatpush1.msra.mxu0 %v1337
        %1368 = vmatprep.subr.mxu0 0.0
        %1369 = vmatpush1.msra.mxu0 %v1336
        %1370 = vmatprep.subr.mxu0 0.0
        %1371 = vmatpush1.msra.mxu0 %v1335
        %1372 = vmatprep.subr.mxu0 0.0
        %1373 = vmatpush1.msra.mxu0 %v1334
        %1374 = vmatprep.subr.mxu0 0.0
        %1375 = vmatpush2.msra.mxu0 0.0
        %1376 = vmatprep.subr.mxu0 0.0
        %1377 = vmatpush2.msra.mxu0 0.0
        %1378 = vmatprep.subr.mxu0 0.0
        %1379 = vmatpush2.msra.mxu0 0.0
        %1380 = vmatprep.subr.mxu0 0.0
        %1381 = vmatpush2.msra.mxu0 0.0
        %1382 = vmatprep.subr.mxu0 0.0
        %1383 = vmatpush2.msra.mxu0 0.0
        %1384 = vmatprep.subr.mxu0 0.0
        %1385 = vmatpush2.msra.mxu0 0.0
        %1386 = vmatprep.subr.mxu0 0.0
        %1387 = vmatpush2.msra.mxu0 0.0
        %1388 = vmatprep.subr.mxu0 0.0
        %1389 = vmatpush2.msra.mxu0 0.0
        %1390 = vmatprep.subr.mxu0 0.0
        %1391 = vmatpush2.msra.mxu0 0.0
        %1392 = vmatprep.subr.mxu0 0.0
        %1393 = vmatpush2.msra.mxu0 0.0
        %1394 = vmatprep.subr.mxu0 0.0
        %1395 = vmatpush2.msra.mxu0 0.0
        %1396 = vmatprep.subr.mxu0 0.0
        %1397 = vmatpush2.msra.mxu0 0.0
        %1398 = vmatprep.subr.mxu0 0.0
        %1399 = vmatpush2.msra.mxu0 0.0
        %1400 = vmatprep.subr.mxu0 0.0
        %1401 = vmatpush2.msra.mxu0 0.0
        %1402 = vmatprep.subr.mxu0 0.0
        %1403 = vmatpush2.msra.mxu0 0.0
        %1404 = vmatprep.subr.mxu0 0.0
        %1405 = vmatpush2.msra.mxu0 0.0
        %1406 = vmatprep.mubr.f32.mxu0 0.0
        %1407 = vmatmul.mubr.f32.gmra.mxu0 %v465
        %v1408 = vpop.f32.mrf.mxu0
        %v1409 = vadd.f32 0.0, %v1408
        %v1410 = vpop.f32.mrf.mxu0
        %1411 = vdwg.mxu0
        %s1412 = scalar_lea.vmem %s2, 512
        %v1413 = vld [vmem:[%s1412] sm:$0xff]
        %v1414 = vld [vmem:[%s1412 + $0x8] sm:$0xff]
        %v1415 = vld [vmem:[%s1412 + $0x10] sm:$0xff]
        %v1416 = vld [vmem:[%s1412 + $0x18] sm:$0xff]
        %v1417 = vld [vmem:[%s1412 + $0x20] sm:$0xff]
        %v1418 = vld [vmem:[%s1412 + $0x28] sm:$0xff]
        %v1419 = vld [vmem:[%s1412 + $0x30] sm:$0xff]
        %v1420 = vld [vmem:[%s1412 + $0x38] sm:$0xff]
        %1421 = vmatprep.subr.mxu0 0.0
        %1422 = vmatpush1.msra.mxu0 0.0
        %1423 = vmatprep.subr.mxu0 0.0
        %1424 = vmatpush1.msra.mxu0 0.0
        %1425 = vmatprep.subr.mxu0 0.0
        %1426 = vmatpush1.msra.mxu0 0.0
        %1427 = vmatprep.subr.mxu0 0.0
        %1428 = vmatpush1.msra.mxu0 0.0
        %1429 = vmatprep.subr.mxu0 0.0
        %1430 = vmatpush1.msra.mxu0 0.0
        %1431 = vmatprep.subr.mxu0 0.0
        %1432 = vmatpush1.msra.mxu0 0.0
        %1433 = vmatprep.subr.mxu0 0.0
        %1434 = vmatpush1.msra.mxu0 0.0
        %1435 = vmatprep.subr.mxu0 0.0
        %1436 = vmatpush1.msra.mxu0 0.0
        %1437 = vmatprep.subr.mxu0 0.0
        %1438 = vmatpush1.msra.mxu0 %v1420
        %1439 = vmatprep.subr.mxu0 0.0
        %1440 = vmatpush1.msra.mxu0 %v1419
        %1441 = vmatprep.subr.mxu0 0.0
        %1442 = vmatpush1.msra.mxu0 %v1418
        %1443 = vmatprep.subr.mxu0 0.0
        %1444 = vmatpush1.msra.mxu0 %v1417
        %1445 = vmatprep.subr.mxu0 0.0
        %1446 = vmatpush1.msra.mxu0 %v1416
        %1447 = vmatprep.subr.mxu0 0.0
        %1448 = vmatpush1.msra.mxu0 %v1415
        %1449 = vmatprep.subr.mxu0 0.0
        %1450 = vmatpush1.msra.mxu0 %v1414
        %1451 = vmatprep.subr.mxu0 0.0
        %1452 = vmatpush1.msra.mxu0 %v1413
        %1453 = vmatprep.subr.mxu0 0.0
        %1454 = vmatpush2.msra.mxu0 0.0
        %1455 = vmatprep.subr.mxu0 0.0
        %1456 = vmatpush2.msra.mxu0 0.0
        %1457 = vmatprep.subr.mxu0 0.0
        %1458 = vmatpush2.msra.mxu0 0.0
        %1459 = vmatprep.subr.mxu0 0.0
        %1460 = vmatpush2.msra.mxu0 0.0
        %1461 = vmatprep.subr.mxu0 0.0
        %1462 = vmatpush2.msra.mxu0 0.0
        %1463 = vmatprep.subr.mxu0 0.0
        %1464 = vmatpush2.msra.mxu0 0.0
        %1465 = vmatprep.subr.mxu0 0.0
        %1466 = vmatpush2.msra.mxu0 0.0
        %1467 = vmatprep.subr.mxu0 0.0
        %1468 = vmatpush2.msra.mxu0 0.0
        %1469 = vmatprep.subr.mxu0 0.0
        %1470 = vmatpush2.msra.mxu0 0.0
        %1471 = vmatprep.subr.mxu0 0.0
        %1472 = vmatpush2.msra.mxu0 0.0
        %1473 = vmatprep.subr.mxu0 0.0
        %1474 = vmatpush2.msra.mxu0 0.0
        %1475 = vmatprep.subr.mxu0 0.0
        %1476 = vmatpush2.msra.mxu0 0.0
        %1477 = vmatprep.subr.mxu0 0.0
        %1478 = vmatpush2.msra.mxu0 0.0
        %1479 = vmatprep.subr.mxu0 0.0
        %1480 = vmatpush2.msra.mxu0 0.0
        %1481 = vmatprep.subr.mxu0 0.0
        %1482 = vmatpush2.msra.mxu0 0.0
        %1483 = vmatprep.subr.mxu0 0.0
        %1484 = vmatpush2.msra.mxu0 0.0
        %1485 = vmatprep.mubr.f32.mxu0 0.0
        %1486 = vmatmul.mubr.f32.gmra.mxu0 %v465
        %v1487 = vpop.f32.mrf.mxu0
        %v1488 = vadd.f32 0.0, %v1487
        %v1489 = vpop.f32.mrf.mxu0
        %1490 = vdwg.mxu0
        %v1492 = vsel %vm695, %v1330, 0
        %v1495 = vsel %vm695, %v1409, 0
        %1497 = vmatprep.subr.mxu0 0.0
        %1498 = vmatpush1.xpose.msra.mxu0 0.0
        %1499 = vmatprep.subr.mxu0 0.0
        %1500 = vmatpush1.xpose.msra.mxu0 0.0
        %1501 = vmatprep.subr.mxu0 0.0
        %1502 = vmatpush1.xpose.msra.mxu0 0.0
        %1503 = vmatprep.subr.mxu0 0.0
        %1504 = vmatpush1.xpose.msra.mxu0 0.0
        %1505 = vmatprep.subr.mxu0 0.0
        %1506 = vmatpush1.xpose.msra.mxu0 0.0
        %1507 = vmatprep.subr.mxu0 0.0
        %1508 = vmatpush1.xpose.msra.mxu0 0.0
        %1509 = vmatprep.subr.mxu0 0.0
        %1510 = vmatpush1.xpose.msra.mxu0 0.0
        %1511 = vmatprep.subr.mxu0 0.0
        %1512 = vmatpush1.xpose.msra.mxu0 0.0
        %1513 = vmatprep.subr.mxu0 0.0
        %1514 = vmatpush1.xpose.msra.mxu0 0.0
        %1515 = vmatprep.subr.mxu0 0.0
        %1516 = vmatpush1.xpose.msra.mxu0 0.0
        %1517 = vmatprep.subr.mxu0 0.0
        %1518 = vmatpush1.xpose.msra.mxu0 0.0
        %1519 = vmatprep.subr.mxu0 0.0
        %1520 = vmatpush1.xpose.msra.mxu0 0.0
        %1521 = vmatprep.subr.mxu0 0.0
        %1522 = vmatpush1.xpose.msra.mxu0 0.0
        %1523 = vmatprep.subr.mxu0 0.0
        %1524 = vmatpush1.xpose.msra.mxu0 0.0
        %1525 = vmatprep.subr.mxu0 0.0
        %1526 = vmatpush1.xpose.msra.mxu0 0.0
        %1527 = vmatprep.subr.mxu0 0.0
        %1528 = vmatpush1.xpose.msra.mxu0 %v1495
        %1529 = vmatprep.subr.mxu0 0.0
        %1530 = vmatpush2.xpose.msra.mxu0 0.0
        %1531 = vmatprep.subr.mxu0 0.0
        %1532 = vmatpush2.xpose.msra.mxu0 0.0
        %1533 = vmatprep.subr.mxu0 0.0
        %1534 = vmatpush2.xpose.msra.mxu0 0.0
        %1535 = vmatprep.subr.mxu0 0.0
        %1536 = vmatpush2.xpose.msra.mxu0 0.0
        %1537 = vmatprep.subr.mxu0 0.0
        %1538 = vmatpush2.xpose.msra.mxu0 0.0
        %1539 = vmatprep.subr.mxu0 0.0
        %1540 = vmatpush2.xpose.msra.mxu0 0.0
        %1541 = vmatprep.subr.mxu0 0.0
        %1542 = vmatpush2.xpose.msra.mxu0 0.0
        %1543 = vmatprep.subr.mxu0 0.0
        %1544 = vmatpush2.xpose.msra.mxu0 0.0
        %1545 = vmatprep.subr.mxu0 0.0
        %1546 = vmatpush2.xpose.msra.mxu0 0.0
        %1547 = vmatprep.subr.mxu0 0.0
        %1548 = vmatpush2.xpose.msra.mxu0 0.0
        %1549 = vmatprep.subr.mxu0 0.0
        %1550 = vmatpush2.xpose.msra.mxu0 0.0
        %1551 = vmatprep.subr.mxu0 0.0
        %1552 = vmatpush2.xpose.msra.mxu0 0.0
        %1553 = vmatprep.subr.mxu0 0.0
        %1554 = vmatpush2.xpose.msra.mxu0 0.0
        %1555 = vmatprep.subr.mxu0 0.0
        %1556 = vmatpush2.xpose.msra.mxu0 0.0
        %1557 = vmatprep.subr.mxu0 0.0
        %1558 = vmatpush2.xpose.msra.mxu0 0.0
        %1559 = vmatprep.subr.mxu0 0.0
        %1560 = vmatpush2.xpose.msra.mxu0 0.0
        %1561 = vmatprep.mubr.f32.mxu0 0.0
        %1562 = vmatmul.mubr.f32.gmra.mxu0 %v1492
        %v1563 = vpop.f32.mrf.mxu0
        %v1564 = vadd.f32 %v429, %v1563
        %v1565 = vpop.f32.mrf.mxu0
        %1566 = vdwg.mxu0
        %v1567 = vsel %vm772, %v1564, -inf
        %1568 = vmax.xlane.f32.xlu0 %v1567
        %v1569 = vpop.xlane.xlu0 %1568
        %v1570 = vsub.f32 %v1564, %v1569
        %v1571 = vmul.f32 %v1570, 1.442695
        %v1572 = vpow.pop %v1571
        %v1573 = vsel %vm772, %v1572, 0.0
        %1574 = vadd.xlane.f32.xlu0 %v1573
        %v1575 = vpop.xlane.xlu0 %1574
        %v1576 = vrcp.pop %v1575
        %v1577 = vmul.f32 %v1572, %v1576
        %v1579 = vsel %vm772, %v1577, 0
        %1581 = vmatprep.subr.mxu0 0.0
        %1582 = vmatpush1.msra.mxu0 0.0
        %1583 = vmatprep.subr.mxu0 0.0
        %1584 = vmatpush1.msra.mxu0 0.0
        %1585 = vmatprep.subr.mxu0 0.0
        %1586 = vmatpush1.msra.mxu0 0.0
        %1587 = vmatprep.subr.mxu0 0.0
        %1588 = vmatpush1.msra.mxu0 0.0
        %1589 = vmatprep.subr.mxu0 0.0
        %1590 = vmatpush1.msra.mxu0 0.0
        %1591 = vmatprep.subr.mxu0 0.0
        %1592 = vmatpush1.msra.mxu0 0.0
        %1593 = vmatprep.subr.mxu0 0.0
        %1594 = vmatpush1.msra.mxu0 0.0
        %1595 = vmatprep.subr.mxu0 0.0
        %1596 = vmatpush1.msra.mxu0 0.0
        %1597 = vmatprep.subr.mxu0 0.0
        %1598 = vmatpush1.msra.mxu0 0.0
        %1599 = vmatprep.subr.mxu0 0.0
        %1600 = vmatpush1.msra.mxu0 0.0
        %1601 = vmatprep.subr.mxu0 0.0
        %1602 = vmatpush1.msra.mxu0 0.0
        %1603 = vmatprep.subr.mxu0 0.0
        %1604 = vmatpush1.msra.mxu0 0.0
        %1605 = vmatprep.subr.mxu0 0.0
        %1606 = vmatpush1.msra.mxu0 0.0
        %1607 = vmatprep.subr.mxu0 0.0
        %1608 = vmatpush1.msra.mxu0 0.0
        %1609 = vmatprep.subr.mxu0 0.0
        %1610 = vmatpush1.msra.mxu0 0.0
        %1611 = vmatprep.subr.mxu0 0.0
        %1612 = vmatpush1.msra.mxu0 %v1488
        %1613 = vmatprep.subr.mxu0 0.0
        %1614 = vmatpush2.msra.mxu0 0.0
        %1615 = vmatprep.subr.mxu0 0.0
        %1616 = vmatpush2.msra.mxu0 0.0
        %1617 = vmatprep.subr.mxu0 0.0
        %1618 = vmatpush2.msra.mxu0 0.0
        %1619 = vmatprep.subr.mxu0 0.0
        %1620 = vmatpush2.msra.mxu0 0.0
        %1621 = vmatprep.subr.mxu0 0.0
        %1622 = vmatpush2.msra.mxu0 0.0
        %1623 = vmatprep.subr.mxu0 0.0
        %1624 = vmatpush2.msra.mxu0 0.0
        %1625 = vmatprep.subr.mxu0 0.0
        %1626 = vmatpush2.msra.mxu0 0.0
        %1627 = vmatprep.subr.mxu0 0.0
        %1628 = vmatpush2.msra.mxu0 0.0
        %1629 = vmatprep.subr.mxu0 0.0
        %1630 = vmatpush2.msra.mxu0 0.0
        %1631 = vmatprep.subr.mxu0 0.0
        %1632 = vmatpush2.msra.mxu0 0.0
        %1633 = vmatprep.subr.mxu0 0.0
        %1634 = vmatpush2.msra.mxu0 0.0
        %1635 = vmatprep.subr.mxu0 0.0
        %1636 = vmatpush2.msra.mxu0 0.0
        %1637 = vmatprep.subr.mxu0 0.0
        %1638 = vmatpush2.msra.mxu0 0.0
        %1639 = vmatprep.subr.mxu0 0.0
        %1640 = vmatpush2.msra.mxu0 0.0
        %1641 = vmatprep.subr.mxu0 0.0
        %1642 = vmatpush2.msra.mxu0 0.0
        %1643 = vmatprep.subr.mxu0 0.0
        %1644 = vmatpush2.msra.mxu0 0.0
        %1645 = vmatprep.mubr.f32.mxu0 0.0
        %1646 = vmatmul.mubr.f32.gmra.mxu0 %v1579
        %v1647 = vpop.f32.mrf.mxu0
        %v1648 = vadd.f32 0.0, %v1647
        %v1649 = vpop.f32.mrf.mxu0
        %1650 = vdwg.mxu0
        %s1651 = scalar_lea.vmem %s2, 576
        %v1652 = vld [vmem:[%s1651] sm:$0xff]
        %v1653 = vld [vmem:[%s1651 + $0x8] sm:$0xff]
        %v1654 = vld [vmem:[%s1651 + $0x10] sm:$0xff]
        %v1655 = vld [vmem:[%s1651 + $0x18] sm:$0xff]
        %v1656 = vld [vmem:[%s1651 + $0x20] sm:$0xff]
        %v1657 = vld [vmem:[%s1651 + $0x28] sm:$0xff]
        %v1658 = vld [vmem:[%s1651 + $0x30] sm:$0xff]
        %v1659 = vld [vmem:[%s1651 + $0x38] sm:$0xff]
        %1660 = vmatprep.subr.mxu0 0.0
        %1661 = vmatpush1.msra.mxu0 0.0
        %1662 = vmatprep.subr.mxu0 0.0
        %1663 = vmatpush1.msra.mxu0 0.0
        %1664 = vmatprep.subr.mxu0 0.0
        %1665 = vmatpush1.msra.mxu0 0.0
        %1666 = vmatprep.subr.mxu0 0.0
        %1667 = vmatpush1.msra.mxu0 0.0
        %1668 = vmatprep.subr.mxu0 0.0
        %1669 = vmatpush1.msra.mxu0 0.0
        %1670 = vmatprep.subr.mxu0 0.0
        %1671 = vmatpush1.msra.mxu0 0.0
        %1672 = vmatprep.subr.mxu0 0.0
        %1673 = vmatpush1.msra.mxu0 0.0
        %1674 = vmatprep.subr.mxu0 0.0
        %1675 = vmatpush1.msra.mxu0 0.0
        %1676 = vmatprep.subr.mxu0 0.0
        %1677 = vmatpush1.msra.mxu0 %v1659
        %1678 = vmatprep.subr.mxu0 0.0
        %1679 = vmatpush1.msra.mxu0 %v1658
        %1680 = vmatprep.subr.mxu0 0.0
        %1681 = vmatpush1.msra.mxu0 %v1657
        %1682 = vmatprep.subr.mxu0 0.0
        %1683 = vmatpush1.msra.mxu0 %v1656
        %1684 = vmatprep.subr.mxu0 0.0
        %1685 = vmatpush1.msra.mxu0 %v1655
        %1686 = vmatprep.subr.mxu0 0.0
        %1687 = vmatpush1.msra.mxu0 %v1654
        %1688 = vmatprep.subr.mxu0 0.0
        %1689 = vmatpush1.msra.mxu0 %v1653
        %1690 = vmatprep.subr.mxu0 0.0
        %1691 = vmatpush1.msra.mxu0 %v1652
        %1692 = vmatprep.subr.mxu0 0.0
        %1693 = vmatpush2.msra.mxu0 0.0
        %1694 = vmatprep.subr.mxu0 0.0
        %1695 = vmatpush2.msra.mxu0 0.0
        %1696 = vmatprep.subr.mxu0 0.0
        %1697 = vmatpush2.msra.mxu0 0.0
        %1698 = vmatprep.subr.mxu0 0.0
        %1699 = vmatpush2.msra.mxu0 0.0
        %1700 = vmatprep.subr.mxu0 0.0
        %1701 = vmatpush2.msra.mxu0 0.0
        %1702 = vmatprep.subr.mxu0 0.0
        %1703 = vmatpush2.msra.mxu0 0.0
        %1704 = vmatprep.subr.mxu0 0.0
        %1705 = vmatpush2.msra.mxu0 0.0
        %1706 = vmatprep.subr.mxu0 0.0
        %1707 = vmatpush2.msra.mxu0 0.0
        %1708 = vmatprep.subr.mxu0 0.0
        %1709 = vmatpush2.msra.mxu0 0.0
        %1710 = vmatprep.subr.mxu0 0.0
        %1711 = vmatpush2.msra.mxu0 0.0
        %1712 = vmatprep.subr.mxu0 0.0
        %1713 = vmatpush2.msra.mxu0 0.0
        %1714 = vmatprep.subr.mxu0 0.0
        %1715 = vmatpush2.msra.mxu0 0.0
        %1716 = vmatprep.subr.mxu0 0.0
        %1717 = vmatpush2.msra.mxu0 0.0
        %1718 = vmatprep.subr.mxu0 0.0
        %1719 = vmatpush2.msra.mxu0 0.0
        %1720 = vmatprep.subr.mxu0 0.0
        %1721 = vmatpush2.msra.mxu0 0.0
        %1722 = vmatprep.subr.mxu0 0.0
        %1723 = vmatpush2.msra.mxu0 0.0
        %1724 = vmatprep.mubr.f32.mxu0 0.0
        %1725 = vmatmul.mubr.f32.gmra.mxu0 %v465
        %v1726 = vpop.f32.mrf.mxu0
        %v1727 = vadd.f32 0.0, %v1726
        %v1728 = vpop.f32.mrf.mxu0
        %1729 = vdwg.mxu0
        %s1730 = scalar_lea.vmem %s2, 640
        %v1731 = vld [vmem:[%s1730] sm:$0xff]
        %v1732 = vld [vmem:[%s1730 + $0x8] sm:$0xff]
        %v1733 = vld [vmem:[%s1730 + $0x10] sm:$0xff]
        %v1734 = vld [vmem:[%s1730 + $0x18] sm:$0xff]
        %v1735 = vld [vmem:[%s1730 + $0x20] sm:$0xff]
        %v1736 = vld [vmem:[%s1730 + $0x28] sm:$0xff]
        %v1737 = vld [vmem:[%s1730 + $0x30] sm:$0xff]
        %v1738 = vld [vmem:[%s1730 + $0x38] sm:$0xff]
        %1739 = vmatprep.subr.mxu0 0.0
        %1740 = vmatpush1.msra.mxu0 0.0
        %1741 = vmatprep.subr.mxu0 0.0
        %1742 = vmatpush1.msra.mxu0 0.0
        %1743 = vmatprep.subr.mxu0 0.0
        %1744 = vmatpush1.msra.mxu0 0.0
        %1745 = vmatprep.subr.mxu0 0.0
        %1746 = vmatpush1.msra.mxu0 0.0
        %1747 = vmatprep.subr.mxu0 0.0
        %1748 = vmatpush1.msra.mxu0 0.0
        %1749 = vmatprep.subr.mxu0 0.0
        %1750 = vmatpush1.msra.mxu0 0.0
        %1751 = vmatprep.subr.mxu0 0.0
        %1752 = vmatpush1.msra.mxu0 0.0
        %1753 = vmatprep.subr.mxu0 0.0
        %1754 = vmatpush1.msra.mxu0 0.0
        %1755 = vmatprep.subr.mxu0 0.0
        %1756 = vmatpush1.msra.mxu0 %v1738
        %1757 = vmatprep.subr.mxu0 0.0
        %1758 = vmatpush1.msra.mxu0 %v1737
        %1759 = vmatprep.subr.mxu0 0.0
        %1760 = vmatpush1.msra.mxu0 %v1736
        %1761 = vmatprep.subr.mxu0 0.0
        %1762 = vmatpush1.msra.mxu0 %v1735
        %1763 = vmatprep.subr.mxu0 0.0
        %1764 = vmatpush1.msra.mxu0 %v1734
        %1765 = vmatprep.subr.mxu0 0.0
        %1766 = vmatpush1.msra.mxu0 %v1733
        %1767 = vmatprep.subr.mxu0 0.0
        %1768 = vmatpush1.msra.mxu0 %v1732
        %1769 = vmatprep.subr.mxu0 0.0
        %1770 = vmatpush1.msra.mxu0 %v1731
        %1771 = vmatprep.subr.mxu0 0.0
        %1772 = vmatpush2.msra.mxu0 0.0
        %1773 = vmatprep.subr.mxu0 0.0
        %1774 = vmatpush2.msra.mxu0 0.0
        %1775 = vmatprep.subr.mxu0 0.0
        %1776 = vmatpush2.msra.mxu0 0.0
        %1777 = vmatprep.subr.mxu0 0.0
        %1778 = vmatpush2.msra.mxu0 0.0
        %1779 = vmatprep.subr.mxu0 0.0
        %1780 = vmatpush2.msra.mxu0 0.0
        %1781 = vmatprep.subr.mxu0 0.0
        %1782 = vmatpush2.msra.mxu0 0.0
        %1783 = vmatprep.subr.mxu0 0.0
        %1784 = vmatpush2.msra.mxu0 0.0
        %1785 = vmatprep.subr.mxu0 0.0
        %1786 = vmatpush2.msra.mxu0 0.0
        %1787 = vmatprep.subr.mxu0 0.0
        %1788 = vmatpush2.msra.mxu0 0.0
        %1789 = vmatprep.subr.mxu0 0.0
        %1790 = vmatpush2.msra.mxu0 0.0
        %1791 = vmatprep.subr.mxu0 0.0
        %1792 = vmatpush2.msra.mxu0 0.0
        %1793 = vmatprep.subr.mxu0 0.0
        %1794 = vmatpush2.msra.mxu0 0.0
        %1795 = vmatprep.subr.mxu0 0.0
        %1796 = vmatpush2.msra.mxu0 0.0
        %1797 = vmatprep.subr.mxu0 0.0
        %1798 = vmatpush2.msra.mxu0 0.0
        %1799 = vmatprep.subr.mxu0 0.0
        %1800 = vmatpush2.msra.mxu0 0.0
        %1801 = vmatprep.subr.mxu0 0.0
        %1802 = vmatpush2.msra.mxu0 0.0
        %1803 = vmatprep.mubr.f32.mxu0 0.0
        %1804 = vmatmul.mubr.f32.gmra.mxu0 %v465
        %v1805 = vpop.f32.mrf.mxu0
        %v1806 = vadd.f32 0.0, %v1805
        %v1807 = vpop.f32.mrf.mxu0
        %1808 = vdwg.mxu0
        %s1809 = scalar_lea.vmem %s2, 704
        %v1810 = vld [vmem:[%s1809] sm:$0xff]
        %v1811 = vld [vmem:[%s1809 + $0x8] sm:$0xff]
        %v1812 = vld [vmem:[%s1809 + $0x10] sm:$0xff]
        %v1813 = vld [vmem:[%s1809 + $0x18] sm:$0xff]
        %v1814 = vld [vmem:[%s1809 + $0x20] sm:$0xff]
        %v1815 = vld [vmem:[%s1809 + $0x28] sm:$0xff]
        %v1816 = vld [vmem:[%s1809 + $0x30] sm:$0xff]
        %v1817 = vld [vmem:[%s1809 + $0x38] sm:$0xff]
        %1818 = vmatprep.subr.mxu0 0.0
        %1819 = vmatpush1.msra.mxu0 0.0
        %1820 = vmatprep.subr.mxu0 0.0
        %1821 = vmatpush1.msra.mxu0 0.0
        %1822 = vmatprep.subr.mxu0 0.0
        %1823 = vmatpush1.msra.mxu0 0.0
        %1824 = vmatprep.subr.mxu0 0.0
        %1825 = vmatpush1.msra.mxu0 0.0
        %1826 = vmatprep.subr.mxu0 0.0
        %1827 = vmatpush1.msra.mxu0 0.0
        %1828 = vmatprep.subr.mxu0 0.0
        %1829 = vmatpush1.msra.mxu0 0.0
        %1830 = vmatprep.subr.mxu0 0.0
        %1831 = vmatpush1.msra.mxu0 0.0
        %1832 = vmatprep.subr.mxu0 0.0
        %1833 = vmatpush1.msra.mxu0 0.0
        %1834 = vmatprep.subr.mxu0 0.0
        %1835 = vmatpush1.msra.mxu0 %v1817
        %1836 = vmatprep.subr.mxu0 0.0
        %1837 = vmatpush1.msra.mxu0 %v1816
        %1838 = vmatprep.subr.mxu0 0.0
        %1839 = vmatpush1.msra.mxu0 %v1815
        %1840 = vmatprep.subr.mxu0 0.0
        %1841 = vmatpush1.msra.mxu0 %v1814
        %1842 = vmatprep.subr.mxu0 0.0
        %1843 = vmatpush1.msra.mxu0 %v1813
        %1844 = vmatprep.subr.mxu0 0.0
        %1845 = vmatpush1.msra.mxu0 %v1812
        %1846 = vmatprep.subr.mxu0 0.0
        %1847 = vmatpush1.msra.mxu0 %v1811
        %1848 = vmatprep.subr.mxu0 0.0
        %1849 = vmatpush1.msra.mxu0 %v1810
        %1850 = vmatprep.subr.mxu0 0.0
        %1851 = vmatpush2.msra.mxu0 0.0
        %1852 = vmatprep.subr.mxu0 0.0
        %1853 = vmatpush2.msra.mxu0 0.0
        %1854 = vmatprep.subr.mxu0 0.0
        %1855 = vmatpush2.msra.mxu0 0.0
        %1856 = vmatprep.subr.mxu0 0.0
        %1857 = vmatpush2.msra.mxu0 0.0
        %1858 = vmatprep.subr.mxu0 0.0
        %1859 = vmatpush2.msra.mxu0 0.0
        %1860 = vmatprep.subr.mxu0 0.0
        %1861 = vmatpush2.msra.mxu0 0.0
        %1862 = vmatprep.subr.mxu0 0.0
        %1863 = vmatpush2.msra.mxu0 0.0
        %1864 = vmatprep.subr.mxu0 0.0
        %1865 = vmatpush2.msra.mxu0 0.0
        %1866 = vmatprep.subr.mxu0 0.0
        %1867 = vmatpush2.msra.mxu0 0.0
        %1868 = vmatprep.subr.mxu0 0.0
        %1869 = vmatpush2.msra.mxu0 0.0
        %1870 = vmatprep.subr.mxu0 0.0
        %1871 = vmatpush2.msra.mxu0 0.0
        %1872 = vmatprep.subr.mxu0 0.0
        %1873 = vmatpush2.msra.mxu0 0.0
        %1874 = vmatprep.subr.mxu0 0.0
        %1875 = vmatpush2.msra.mxu0 0.0
        %1876 = vmatprep.subr.mxu0 0.0
        %1877 = vmatpush2.msra.mxu0 0.0
        %1878 = vmatprep.subr.mxu0 0.0
        %1879 = vmatpush2.msra.mxu0 0.0
        %1880 = vmatprep.subr.mxu0 0.0
        %1881 = vmatpush2.msra.mxu0 0.0
        %1882 = vmatprep.mubr.f32.mxu0 0.0
        %1883 = vmatmul.mubr.f32.gmra.mxu0 %v465
        %v1884 = vpop.f32.mrf.mxu0
        %v1885 = vadd.f32 0.0, %v1884
        %v1886 = vpop.f32.mrf.mxu0
        %1887 = vdwg.mxu0
        %v1889 = vsel %vm695, %v1727, 0
        %v1892 = vsel %vm695, %v1806, 0
        %1894 = vmatprep.subr.mxu0 0.0
        %1895 = vmatpush1.xpose.msra.mxu0 0.0
        %1896 = vmatprep.subr.mxu0 0.0
        %1897 = vmatpush1.xpose.msra.mxu0 0.0
        %1898 = vmatprep.subr.mxu0 0.0
        %1899 = vmatpush1.xpose.msra.mxu0 0.0
        %1900 = vmatprep.subr.mxu0 0.0
        %1901 = vmatpush1.xpose.msra.mxu0 0.0
        %1902 = vmatprep.subr.mxu0 0.0
        %1903 = vmatpush1.xpose.msra.mxu0 0.0
        %1904 = vmatprep.subr.mxu0 0.0
        %1905 = vmatpush1.xpose.msra.mxu0 0.0
        %1906 = vmatprep.subr.mxu0 0.0
        %1907 = vmatpush1.xpose.msra.mxu0 0.0
        %1908 = vmatprep.subr.mxu0 0.0
        %1909 = vmatpush1.xpose.msra.mxu0 0.0
        %1910 = vmatprep.subr.mxu0 0.0
        %1911 = vmatpush1.xpose.msra.mxu0 0.0
        %1912 = vmatprep.subr.mxu0 0.0
        %1913 = vmatpush1.xpose.msra.mxu0 0.0
        %1914 = vmatprep.subr.mxu0 0.0
        %1915 = vmatpush1.xpose.msra.mxu0 0.0
        %1916 = vmatprep.subr.mxu0 0.0
        %1917 = vmatpush1.xpose.msra.mxu0 0.0
        %1918 = vmatprep.subr.mxu0 0.0
        %1919 = vmatpush1.xpose.msra.mxu0 0.0
        %1920 = vmatprep.subr.mxu0 0.0
        %1921 = vmatpush1.xpose.msra.mxu0 0.0
        %1922 = vmatprep.subr.mxu0 0.0
        %1923 = vmatpush1.xpose.msra.mxu0 0.0
        %1924 = vmatprep.subr.mxu0 0.0
        %1925 = vmatpush1.xpose.msra.mxu0 %v1892
        %1926 = vmatprep.subr.mxu0 0.0
        %1927 = vmatpush2.xpose.msra.mxu0 0.0
        %1928 = vmatprep.subr.mxu0 0.0
        %1929 = vmatpush2.xpose.msra.mxu0 0.0
        %1930 = vmatprep.subr.mxu0 0.0
        %1931 = vmatpush2.xpose.msra.mxu0 0.0
        %1932 = vmatprep.subr.mxu0 0.0
        %1933 = vmatpush2.xpose.msra.mxu0 0.0
        %1934 = vmatprep.subr.mxu0 0.0
        %1935 = vmatpush2.xpose.msra.mxu0 0.0
        %1936 = vmatprep.subr.mxu0 0.0
        %1937 = vmatpush2.xpose.msra.mxu0 0.0
        %1938 = vmatprep.subr.mxu0 0.0
        %1939 = vmatpush2.xpose.msra.mxu0 0.0
        %1940 = vmatprep.subr.mxu0 0.0
        %1941 = vmatpush2.xpose.msra.mxu0 0.0
        %1942 = vmatprep.subr.mxu0 0.0
        %1943 = vmatpush2.xpose.msra.mxu0 0.0
        %1944 = vmatprep.subr.mxu0 0.0
        %1945 = vmatpush2.xpose.msra.mxu0 0.0
        %1946 = vmatprep.subr.mxu0 0.0
        %1947 = vmatpush2.xpose.msra.mxu0 0.0
        %1948 = vmatprep.subr.mxu0 0.0
        %1949 = vmatpush2.xpose.msra.mxu0 0.0
        %1950 = vmatprep.subr.mxu0 0.0
        %1951 = vmatpush2.xpose.msra.mxu0 0.0
        %1952 = vmatprep.subr.mxu0 0.0
        %1953 = vmatpush2.xpose.msra.mxu0 0.0
        %1954 = vmatprep.subr.mxu0 0.0
        %1955 = vmatpush2.xpose.msra.mxu0 0.0
        %1956 = vmatprep.subr.mxu0 0.0
        %1957 = vmatpush2.xpose.msra.mxu0 0.0
        %1958 = vmatprep.mubr.f32.mxu0 0.0
        %1959 = vmatmul.mubr.f32.gmra.mxu0 %v1889
        %v1960 = vpop.f32.mrf.mxu0
        %v1961 = vadd.f32 %v429, %v1960
        %v1962 = vpop.f32.mrf.mxu0
        %1963 = vdwg.mxu0
        %v1964 = vsel %vm772, %v1961, -inf
        %1965 = vmax.xlane.f32.xlu0 %v1964
        %v1966 = vpop.xlane.xlu0 %1965
        %v1967 = vsub.f32 %v1961, %v1966
        %v1968 = vmul.f32 %v1967, 1.442695
        %v1969 = vpow.pop %v1968
        %v1970 = vsel %vm772, %v1969, 0.0
        %1971 = vadd.xlane.f32.xlu0 %v1970
        %v1972 = vpop.xlane.xlu0 %1971
        %v1973 = vrcp.pop %v1972
        %v1974 = vmul.f32 %v1969, %v1973
        %v1976 = vsel %vm772, %v1974, 0
        %1978 = vmatprep.subr.mxu0 0.0
        %1979 = vmatpush1.msra.mxu0 0.0
        %1980 = vmatprep.subr.mxu0 0.0
        %1981 = vmatpush1.msra.mxu0 0.0
        %1982 = vmatprep.subr.mxu0 0.0
        %1983 = vmatpush1.msra.mxu0 0.0
        %1984 = vmatprep.subr.mxu0 0.0
        %1985 = vmatpush1.msra.mxu0 0.0
        %1986 = vmatprep.subr.mxu0 0.0
        %1987 = vmatpush1.msra.mxu0 0.0
        %1988 = vmatprep.subr.mxu0 0.0
        %1989 = vmatpush1.msra.mxu0 0.0
        %1990 = vmatprep.subr.mxu0 0.0
        %1991 = vmatpush1.msra.mxu0 0.0
        %1992 = vmatprep.subr.mxu0 0.0
        %1993 = vmatpush1.msra.mxu0 0.0
        %1994 = vmatprep.subr.mxu0 0.0
        %1995 = vmatpush1.msra.mxu0 0.0
        %1996 = vmatprep.subr.mxu0 0.0
        %1997 = vmatpush1.msra.mxu0 0.0
        %1998 = vmatprep.subr.mxu0 0.0
        %1999 = vmatpush1.msra.mxu0 0.0
        %2000 = vmatprep.subr.mxu0 0.0
        %2001 = vmatpush1.msra.mxu0 0.0
        %2002 = vmatprep.subr.mxu0 0.0
        %2003 = vmatpush1.msra.mxu0 0.0
        %2004 = vmatprep.subr.mxu0 0.0
        %2005 = vmatpush1.msra.mxu0 0.0
        %2006 = vmatprep.subr.mxu0 0.0
        %2007 = vmatpush1.msra.mxu0 0.0
        %2008 = vmatprep.subr.mxu0 0.0
        %2009 = vmatpush1.msra.mxu0 %v1885
        %2010 = vmatprep.subr.mxu0 0.0
        %2011 = vmatpush2.msra.mxu0 0.0
        %2012 = vmatprep.subr.mxu0 0.0
        %2013 = vmatpush2.msra.mxu0 0.0
        %2014 = vmatprep.subr.mxu0 0.0
        %2015 = vmatpush2.msra.mxu0 0.0
        %2016 = vmatprep.subr.mxu0 0.0
        %2017 = vmatpush2.msra.mxu0 0.0
        %2018 = vmatprep.subr.mxu0 0.0
        %2019 = vmatpush2.msra.mxu0 0.0
        %2020 = vmatprep.subr.mxu0 0.0
        %2021 = vmatpush2.msra.mxu0 0.0
        %2022 = vmatprep.subr.mxu0 0.0
        %2023 = vmatpush2.msra.mxu0 0.0
        %2024 = vmatprep.subr.mxu0 0.0
        %2025 = vmatpush2.msra.mxu0 0.0
        %2026 = vmatprep.subr.mxu0 0.0
        %2027 = vmatpush2.msra.mxu0 0.0
        %2028 = vmatprep.subr.mxu0 0.0
        %2029 = vmatpush2.msra.mxu0 0.0
        %2030 = vmatprep.subr.mxu0 0.0
        %2031 = vmatpush2.msra.mxu0 0.0
        %2032 = vmatprep.subr.mxu0 0.0
        %2033 = vmatpush2.msra.mxu0 0.0
        %2034 = vmatprep.subr.mxu0 0.0
        %2035 = vmatpush2.msra.mxu0 0.0
        %2036 = vmatprep.subr.mxu0 0.0
        %2037 = vmatpush2.msra.mxu0 0.0
        %2038 = vmatprep.subr.mxu0 0.0
        %2039 = vmatpush2.msra.mxu0 0.0
        %2040 = vmatprep.subr.mxu0 0.0
        %2041 = vmatpush2.msra.mxu0 0.0
        %2042 = vmatprep.mubr.f32.mxu0 0.0
        %2043 = vmatmul.mubr.f32.gmra.mxu0 %v1976
        %v2044 = vpop.f32.mrf.mxu0
        %v2045 = vadd.f32 0.0, %v2044
        %v2046 = vpop.f32.mrf.mxu0
        %2047 = vdwg.mxu0
        %2049 = vrot.lane.b32.xlu0 %v1251, 16
        %v2050 = vpop.permute.xlu0 %2049
        %2053 = vrot.lane.b32.xlu0 %v1648, 32
        %v2054 = vpop.permute.xlu0 %2053
        %2057 = vrot.lane.b32.xlu0 %v2045, 48
        %v2058 = vpop.permute.xlu0 %2057
        %v2060 = vsel %vm695, %v854, %v2050
        %vm2061 = vcmask 261120
        %v2062 = vsel %vm2061, %v2060, %v2054
        %vm2063 = vcmask 392192
        %v2064 = vsel %vm2063, %v2062, %v2058
        %v2065 = vld [vmem:[%s1 + $0xc0] sm:$0xff]
        %v2066 = vld [vmem:[%s1 + $0xc8] sm:$0xff]
        %v2067 = vld [vmem:[%s1 + $0xd0] sm:$0xff]
        %v2068 = vld [vmem:[%s1 + $0xd8] sm:$0xff]
        %v2069 = vld [vmem:[%s1 + $0xe0] sm:$0xff]
        %v2070 = vld [vmem:[%s1 + $0xe8] sm:$0xff]
        %v2071 = vld [vmem:[%s1 + $0xf0] sm:$0xff]
        %v2072 = vld [vmem:[%s1 + $0xf8] sm:$0xff]
        %v2074 = vsel %vm254, %v2064, 0
        %2076 = vmatprep.subr.mxu0 0.0
        %2077 = vmatpush1.msra.mxu0 0.0
        %2078 = vmatprep.subr.mxu0 0.0
        %2079 = vmatpush1.msra.mxu0 0.0
        %2080 = vmatprep.subr.mxu0 0.0
        %2081 = vmatpush1.msra.mxu0 0.0
        %2082 = vmatprep.subr.mxu0 0.0
        %2083 = vmatpush1.msra.mxu0 0.0
        %2084 = vmatprep.subr.mxu0 0.0
        %2085 = vmatpush1.msra.mxu0 0.0
        %2086 = vmatprep.subr.mxu0 0.0
        %2087 = vmatpush1.msra.mxu0 0.0
        %2088 = vmatprep.subr.mxu0 0.0
        %2089 = vmatpush1.msra.mxu0 0.0
        %2090 = vmatprep.subr.mxu0 0.0
        %2091 = vmatpush1.msra.mxu0 0.0
        %2092 = vmatprep.subr.mxu0 0.0
        %2093 = vmatpush1.msra.mxu0 %v2072
        %2094 = vmatprep.subr.mxu0 0.0
        %2095 = vmatpush1.msra.mxu0 %v2071
        %2096 = vmatprep.subr.mxu0 0.0
        %2097 = vmatpush1.msra.mxu0 %v2070
        %2098 = vmatprep.subr.mxu0 0.0
        %2099 = vmatpush1.msra.mxu0 %v2069
        %2100 = vmatprep.subr.mxu0 0.0
        %2101 = vmatpush1.msra.mxu0 %v2068
        %2102 = vmatprep.subr.mxu0 0.0
        %2103 = vmatpush1.msra.mxu0 %v2067
        %2104 = vmatprep.subr.mxu0 0.0
        %2105 = vmatpush1.msra.mxu0 %v2066
        %2106 = vmatprep.subr.mxu0 0.0
        %2107 = vmatpush1.msra.mxu0 %v2065
        %2108 = vmatprep.subr.mxu0 0.0
        %2109 = vmatpush2.msra.mxu0 0.0
        %2110 = vmatprep.subr.mxu0 0.0
        %2111 = vmatpush2.msra.mxu0 0.0
        %2112 = vmatprep.subr.mxu0 0.0
        %2113 = vmatpush2.msra.mxu0 0.0
        %2114 = vmatprep.subr.mxu0 0.0
        %2115 = vmatpush2.msra.mxu0 0.0
        %2116 = vmatprep.subr.mxu0 0.0
        %2117 = vmatpush2.msra.mxu0 0.0
        %2118 = vmatprep.subr.mxu0 0.0
        %2119 = vmatpush2.msra.mxu0 0.0
        %2120 = vmatprep.subr.mxu0 0.0
        %2121 = vmatpush2.msra.mxu0 0.0
        %2122 = vmatprep.subr.mxu0 0.0
        %2123 = vmatpush2.msra.mxu0 0.0
        %2124 = vmatprep.subr.mxu0 0.0
        %2125 = vmatpush2.msra.mxu0 0.0
        %2126 = vmatprep.subr.mxu0 0.0
        %2127 = vmatpush2.msra.mxu0 0.0
        %2128 = vmatprep.subr.mxu0 0.0
        %2129 = vmatpush2.msra.mxu0 0.0
        %2130 = vmatprep.subr.mxu0 0.0
        %2131 = vmatpush2.msra.mxu0 0.0
        %2132 = vmatprep.subr.mxu0 0.0
        %2133 = vmatpush2.msra.mxu0 0.0
        %2134 = vmatprep.subr.mxu0 0.0
        %2135 = vmatpush2.msra.mxu0 0.0
        %2136 = vmatprep.subr.mxu0 0.0
        %2137 = vmatpush2.msra.mxu0 0.0
        %2138 = vmatprep.subr.mxu0 0.0
        %2139 = vmatpush2.msra.mxu0 0.0
        %2140 = vmatprep.mubr.f32.mxu0 0.0
        %2141 = vmatmul.mubr.f32.gmra.mxu0 %v2074
        %v2142 = vpop.f32.mrf.mxu0
        %v2143 = vadd.f32 0.0, %v2142
        %v2144 = vpop.f32.mrf.mxu0
        %2145 = vdwg.mxu0
        %v2146 = vadd.f32 %v427, %v2143
        %v2147 = vld [vmem:[%s4 + $0x8] sm:$0x1]
        %v2148 = vlaneseq
        %v2149 = vshrl.u32 %v2148, 7
        %v2150 = vsub.s32 0, %v2149
        %v2151 = vrot.slane %v2147, %v2150
        %v2152 = vadd.f32 %v2146, %v2151
        %v2153 = vld [vmem:[%s4 + $0x9] sm:$0x1]
        %v2154 = vld [vmem:[%s4 + $0xa] sm:$0x1]
        %v2155 = vsel %vm254, %v2152, 0.0
        %2156 = vadd.xlane.f32.xlu0 %v2155
        %v2157 = vpop.xlane.xlu0 %2156
        %v2158 = vmul.f32 %v2157, %v435
        %v2159 = vsub.f32 %v2152, %v2158
        %v2160 = vmul.f32 %v2159, %v2159
        %v2161 = vsel %vm254, %v2160, 0.0
        %2162 = vadd.xlane.f32.xlu0 %v2161
        %v2163 = vpop.xlane.xlu0 %2162
        %v2164 = vmul.f32 %v2163, %v435
        %v2165 = vadd.f32 %v2164, 1e-05
        %v2166 = vrsqrt.pop %v2165
        %v2167 = vmul.f32 %v2159, %v2166
        %v2168 = vlaneseq
        %v2169 = vshrl.u32 %v2168, 7
        %v2170 = vsub.s32 0, %v2169
        %v2171 = vrot.slane %v2153, %v2170
        %v2172 = vmul.f32 %v2167, %v2171
        %v2173 = vlaneseq
        %v2174 = vshrl.u32 %v2173, 7
        %v2175 = vsub.s32 0, %v2174
        %v2176 = vrot.slane %v2154, %v2175
        %v2177 = vadd.f32 %v2172, %v2176
        %v2178 = vld [vmem:[%s3] sm:$0xff]
        %v2179 = vld [vmem:[%s3 + $0x8] sm:$0xff]
        %v2180 = vld [vmem:[%s3 + $0x10] sm:$0xff]
        %v2181 = vld [vmem:[%s3 + $0x18] sm:$0xff]
        %v2182 = vld [vmem:[%s3 + $0x20] sm:$0xff]
        %v2183 = vld [vmem:[%s3 + $0x28] sm:$0xff]
        %v2184 = vld [vmem:[%s3 + $0x30] sm:$0xff]
        %v2185 = vld [vmem:[%s3 + $0x38] sm:$0xff]
        %v2186 = vld [vmem:[%s4 + $0xb] sm:$0x1]
        %v2187 = vlaneseq
        %v2188 = vshrl.u32 %v2187, 7
        %v2189 = vsub.s32 0, %v2188
        %v2190 = vrot.slane %v2186, %v2189
        %v2192 = vsel %vm254, %v2177, 0
        %2194 = vmatprep.subr.mxu0 0.0
        %2195 = vmatpush1.msra.mxu0 0.0
        %2196 = vmatprep.subr.mxu0 0.0
        %2197 = vmatpush1.msra.mxu0 0.0
        %2198 = vmatprep.subr.mxu0 0.0
        %2199 = vmatpush1.msra.mxu0 0.0
        %2200 = vmatprep.subr.mxu0 0.0
        %2201 = vmatpush1.msra.mxu0 0.0
        %2202 = vmatprep.subr.mxu0 0.0
        %2203 = vmatpush1.msra.mxu0 0.0
        %2204 = vmatprep.subr.mxu0 0.0
        %2205 = vmatpush1.msra.mxu0 0.0
        %2206 = vmatprep.subr.mxu0 0.0
        %2207 = vmatpush1.msra.mxu0 0.0
        %2208 = vmatprep.subr.mxu0 0.0
        %2209 = vmatpush1.msra.mxu0 0.0
        %2210 = vmatprep.subr.mxu0 0.0
        %2211 = vmatpush1.msra.mxu0 %v2185
        %2212 = vmatprep.subr.mxu0 0.0
        %2213 = vmatpush1.msra.mxu0 %v2184
        %2214 = vmatprep.subr.mxu0 0.0
        %2215 = vmatpush1.msra.mxu0 %v2183
        %2216 = vmatprep.subr.mxu0 0.0
        %2217 = vmatpush1.msra.mxu0 %v2182
        %2218 = vmatprep.subr.mxu0 0.0
        %2219 = vmatpush1.msra.mxu0 %v2181
        %2220 = vmatprep.subr.mxu0 0.0
        %2221 = vmatpush1.msra.mxu0 %v2180
        %2222 = vmatprep.subr.mxu0 0.0
        %2223 = vmatpush1.msra.mxu0 %v2179
        %2224 = vmatprep.subr.mxu0 0.0
        %2225 = vmatpush1.msra.mxu0 %v2178
        %2226 = vmatprep.subr.mxu0 0.0
        %2227 = vmatpush2.msra.mxu0 0.0
        %2228 = vmatprep.subr.mxu0 0.0
        %2229 = vmatpush2.msra.mxu0 0.0
        %2230 = vmatprep.subr.mxu0 0.0
        %2231 = vmatpush2.msra.mxu0 0.0
        %2232 = vmatprep.subr.mxu0 0.0
        %2233 = vmatpush2.msra.mxu0 0.0
        %2234 = vmatprep.subr.mxu0 0.0
        %2235 = vmatpush2.msra.mxu0 0.0
        %2236 = vmatprep.subr.mxu0 0.0
        %2237 = vmatpush2.msra.mxu0 0.0
        %2238 = vmatprep.subr.mxu0 0.0
        %2239 = vmatpush2.msra.mxu0 0.0
        %2240 = vmatprep.subr.mxu0 0.0
        %2241 = vmatpush2.msra.mxu0 0.0
        %2242 = vmatprep.subr.mxu0 0.0
        %2243 = vmatpush2.msra.mxu0 0.0
        %2244 = vmatprep.subr.mxu0 0.0
        %2245 = vmatpush2.msra.mxu0 0.0
        %2246 = vmatprep.subr.mxu0 0.0
        %2247 = vmatpush2.msra.mxu0 0.0
        %2248 = vmatprep.subr.mxu0 0.0
        %2249 = vmatpush2.msra.mxu0 0.0
        %2250 = vmatprep.subr.mxu0 0.0
        %2251 = vmatpush2.msra.mxu0 0.0
        %2252 = vmatprep.subr.mxu0 0.0
        %2253 = vmatpush2.msra.mxu0 0.0
        %2254 = vmatprep.subr.mxu0 0.0
        %2255 = vmatpush2.msra.mxu0 0.0
        %2256 = vmatprep.subr.mxu0 0.0
        %2257 = vmatpush2.msra.mxu0 0.0
        %2258 = vmatprep.mubr.f32.mxu0 0.0
        %2259 = vmatmul.mubr.f32.gmra.mxu0 %v2192
        %v2260 = vpop.f32.mrf.mxu0
        %v2261 = vadd.f32 %v2190, %v2260
        %v2262 = vpop.f32.mrf.mxu0
        %2263 = vdwg.mxu0
        %v2264 = vmul.f32 %v2261, 0.5
        %v2265 = vmul.f32 %v2261, 0.70710677
        %vm2266 = vcmp.ge.f32.partialorder %v2265, 0.0
        %v2267 = vsel %vm2266, 1.0, -1.0
        %v2268 = vand.u32 2147483647, %v2265
        %v2269 = vmul.f32 %v2268, 0.3275911
        %v2270 = vadd.f32 %v2269, 1.0
        %v2271 = vrcp.pop %v2270
        %v2272 = vmul.f32 1.0, %v2271
        %v2273 = vmul.f32 %v2272, 1.0614054
        %v2274 = vadd.f32 %v2273, -1.4531521
        %v2275 = vmul.f32 %v2274, %v2272
        %v2276 = vadd.f32 %v2275, 1.4214138
        %v2277 = vmul.f32 %v2276, %v2272
        %v2278 = vadd.f32 %v2277, -0.28449672
        %v2279 = vmul.f32 %v2278, %v2272
        %v2280 = vadd.f32 %v2279, 0.2548296
        %v2281 = vmul.f32 %v2280, %v2272
        %v2282 = vsub.f32 0.0, %v2268
        %v2283 = vmul.f32 %v2282, %v2268
        %v2284 = vmul.f32 %v2283, 1.442695
        %v2285 = vpow.pop %v2284
        %v2286 = vmul.f32 %v2281, %v2285
        %v2287 = vsub.f32 1.0, %v2286
        %v2288 = vmul.f32 %v2267, %v2287
        %v2289 = vadd.f32 %v2288, 1.0
        %v2290 = vmul.f32 %v2264, %v2289
        %v2291 = vld [vmem:[%s1 + $0x140] sm:$0xff]
        %v2292 = vld [vmem:[%s1 + $0x148] sm:$0xff]
        %v2293 = vld [vmem:[%s1 + $0x150] sm:$0xff]
        %v2294 = vld [vmem:[%s1 + $0x158] sm:$0xff]
        %v2295 = vld [vmem:[%s1 + $0x160] sm:$0xff]
        %v2296 = vld [vmem:[%s1 + $0x168] sm:$0xff]
        %v2297 = vld [vmem:[%s1 + $0x170] sm:$0xff]
        %v2298 = vld [vmem:[%s1 + $0x178] sm:$0xff]
        %v2299 = vld [vmem:[%s1 + $0x180] sm:$0xff]
        %v2300 = vld [vmem:[%s1 + $0x188] sm:$0xff]
        %v2301 = vld [vmem:[%s1 + $0x190] sm:$0xff]
        %v2302 = vld [vmem:[%s1 + $0x198] sm:$0xff]
        %v2303 = vld [vmem:[%s1 + $0x1a0] sm:$0xff]
        %v2304 = vld [vmem:[%s1 + $0x1a8] sm:$0xff]
        %v2305 = vld [vmem:[%s1 + $0x1b0] sm:$0xff]
        %v2306 = vld [vmem:[%s1 + $0x1b8] sm:$0xff]
        %2307 = vmatprep.subr.mxu0 0.0
        %2308 = vmatpush1.msra.mxu0 %v2306
        %2309 = vmatprep.subr.mxu0 0.0
        %2310 = vmatpush1.msra.mxu0 %v2305
        %2311 = vmatprep.subr.mxu0 0.0
        %2312 = vmatpush1.msra.mxu0 %v2304
        %2313 = vmatprep.subr.mxu0 0.0
        %2314 = vmatpush1.msra.mxu0 %v2303
        %2315 = vmatprep.subr.mxu0 0.0
        %2316 = vmatpush1.msra.mxu0 %v2302
        %2317 = vmatprep.subr.mxu0 0.0
        %2318 = vmatpush1.msra.mxu0 %v2301
        %2319 = vmatprep.subr.mxu0 0.0
        %2320 = vmatpush1.msra.mxu0 %v2300
        %2321 = vmatprep.subr.mxu0 0.0
        %2322 = vmatpush1.msra.mxu0 %v2299
        %2323 = vmatprep.subr.mxu0 0.0
        %2324 = vmatpush1.msra.mxu0 %v2298
        %2325 = vmatprep.subr.mxu0 0.0
        %2326 = vmatpush1.msra.mxu0 %v2297
        %2327 = vmatprep.subr.mxu0 0.0
        %2328 = vmatpush1.msra.mxu0 %v2296
        %2329 = vmatprep.subr.mxu0 0.0
        %2330 = vmatpush1.msra.mxu0 %v2295
        %2331 = vmatprep.subr.mxu0 0.0
        %2332 = vmatpush1.msra.mxu0 %v2294
        %2333 = vmatprep.subr.mxu0 0.0
        %2334 = vmatpush1.msra.mxu0 %v2293
        %2335 = vmatprep.subr.mxu0 0.0
        %2336 = vmatpush1.msra.mxu0 %v2292
        %2337 = vmatprep.subr.mxu0 0.0
        %2338 = vmatpush1.msra.mxu0 %v2291
        %2339 = vmatprep.subr.mxu0 0.0
        %2340 = vmatpush2.msra.mxu0 0.0
        %2341 = vmatprep.subr.mxu0 0.0
        %2342 = vmatpush2.msra.mxu0 0.0
        %2343 = vmatprep.subr.mxu0 0.0
        %2344 = vmatpush2.msra.mxu0 0.0
        %2345 = vmatprep.subr.mxu0 0.0
        %2346 = vmatpush2.msra.mxu0 0.0
        %2347 = vmatprep.subr.mxu0 0.0
        %2348 = vmatpush2.msra.mxu0 0.0
        %2349 = vmatprep.subr.mxu0 0.0
        %2350 = vmatpush2.msra.mxu0 0.0
        %2351 = vmatprep.subr.mxu0 0.0
        %2352 = vmatpush2.msra.mxu0 0.0
        %2353 = vmatprep.subr.mxu0 0.0
        %2354 = vmatpush2.msra.mxu0 0.0
        %2355 = vmatprep.subr.mxu0 0.0
        %2356 = vmatpush2.msra.mxu0 0.0
        %2357 = vmatprep.subr.mxu0 0.0
        %2358 = vmatpush2.msra.mxu0 0.0
        %2359 = vmatprep.subr.mxu0 0.0
        %2360 = vmatpush2.msra.mxu0 0.0
        %2361 = vmatprep.subr.mxu0 0.0
        %2362 = vmatpush2.msra.mxu0 0.0
        %2363 = vmatprep.subr.mxu0 0.0
        %2364 = vmatpush2.msra.mxu0 0.0
        %2365 = vmatprep.subr.mxu0 0.0
        %2366 = vmatpush2.msra.mxu0 0.0
        %2367 = vmatprep.subr.mxu0 0.0
        %2368 = vmatpush2.msra.mxu0 0.0
        %2369 = vmatprep.subr.mxu0 0.0
        %2370 = vmatpush2.msra.mxu0 0.0
        %2371 = vmatprep.mubr.f32.mxu0 0.0
        %2372 = vmatmul.mubr.f32.gmra.mxu0 %v2290
        %v2373 = vpop.f32.mrf.mxu0
        %v2374 = vadd.f32 0.0, %v2373
        %v2375 = vpop.f32.mrf.mxu0
        %2376 = vdwg.mxu0
        %v2377 = vadd.f32 %v2152, %v2374
        %v2378 = vld [vmem:[%s4 + $0xc] sm:$0x1]
        %v2379 = vlaneseq
        %v2380 = vshrl.u32 %v2379, 7
        %v2381 = vsub.s32 0, %v2380
        %v2382 = vrot.slane %v2378, %v2381
        %v2383 = vadd.f32 %v2377, %v2382
        %v2384 = vld [vmem:[%s4 + $0xd] sm:$0x1]
        %v2385 = vld [vmem:[%s4 + $0xe] sm:$0x1]
        %v2386 = vsel %vm254, %v2383, 0.0
        %2387 = vadd.xlane.f32.xlu0 %v2386
        %v2388 = vpop.xlane.xlu0 %2387
        %v2389 = vmul.f32 %v2388, %v435
        %v2390 = vsub.f32 %v2383, %v2389
        %v2391 = vmul.f32 %v2390, %v2390
        %v2392 = vsel %vm254, %v2391, 0.0
        %2393 = vadd.xlane.f32.xlu0 %v2392
        %v2394 = vpop.xlane.xlu0 %2393
        %v2395 = vmul.f32 %v2394, %v435
        %v2396 = vadd.f32 %v2395, 1e-05
        %v2397 = vrsqrt.pop %v2396
        %v2398 = vmul.f32 %v2390, %v2397
        %v2399 = vlaneseq
        %v2400 = vshrl.u32 %v2399, 7
        %v2401 = vsub.s32 0, %v2400
        %v2402 = vrot.slane %v2384, %v2401
        %v2403 = vmul.f32 %v2398, %v2402
        %v2404 = vlaneseq
        %v2405 = vshrl.u32 %v2404, 7
        %v2406 = vsub.s32 0, %v2405
        %v2407 = vrot.slane %v2385, %v2406
        %v2408 = vadd.f32 %v2403, %v2407
        %s2409 = scalar_lea.vmem %s2, 768
        %v2410 = vld [vmem:[%s2409] sm:$0xff]
        %v2411 = vld [vmem:[%s2409 + $0x8] sm:$0xff]
        %v2412 = vld [vmem:[%s2409 + $0x10] sm:$0xff]
        %v2413 = vld [vmem:[%s2409 + $0x18] sm:$0xff]
        %v2414 = vld [vmem:[%s2409 + $0x20] sm:$0xff]
        %v2415 = vld [vmem:[%s2409 + $0x28] sm:$0xff]
        %v2416 = vld [vmem:[%s2409 + $0x30] sm:$0xff]
        %v2417 = vld [vmem:[%s2409 + $0x38] sm:$0xff]
        %v2419 = vsel %vm254, %v2408, 0
        %2421 = vmatprep.subr.mxu0 0.0
        %2422 = vmatpush1.msra.mxu0 0.0
        %2423 = vmatprep.subr.mxu0 0.0
        %2424 = vmatpush1.msra.mxu0 0.0
        %2425 = vmatprep.subr.mxu0 0.0
        %2426 = vmatpush1.msra.mxu0 0.0
        %2427 = vmatprep.subr.mxu0 0.0
        %2428 = vmatpush1.msra.mxu0 0.0
        %2429 = vmatprep.subr.mxu0 0.0
        %2430 = vmatpush1.msra.mxu0 0.0
        %2431 = vmatprep.subr.mxu0 0.0
        %2432 = vmatpush1.msra.mxu0 0.0
        %2433 = vmatprep.subr.mxu0 0.0
        %2434 = vmatpush1.msra.mxu0 0.0
        %2435 = vmatprep.subr.mxu0 0.0
        %2436 = vmatpush1.msra.mxu0 0.0
        %2437 = vmatprep.subr.mxu0 0.0
        %2438 = vmatpush1.msra.mxu0 %v2417
        %2439 = vmatprep.subr.mxu0 0.0
        %2440 = vmatpush1.msra.mxu0 %v2416
        %2441 = vmatprep.subr.mxu0 0.0
        %2442 = vmatpush1.msra.mxu0 %v2415
        %2443 = vmatprep.subr.mxu0 0.0
        %2444 = vmatpush1.msra.mxu0 %v2414
        %2445 = vmatprep.subr.mxu0 0.0
        %2446 = vmatpush1.msra.mxu0 %v2413
        %2447 = vmatprep.subr.mxu0 0.0
        %2448 = vmatpush1.msra.mxu0 %v2412
        %2449 = vmatprep.subr.mxu0 0.0
        %2450 = vmatpush1.msra.mxu0 %v2411
        %2451 = vmatprep.subr.mxu0 0.0
        %2452 = vmatpush1.msra.mxu0 %v2410
        %2453 = vmatprep.subr.mxu0 0.0
        %2454 = vmatpush2.msra.mxu0 0.0
        %2455 = vmatprep.subr.mxu0 0.0
        %2456 = vmatpush2.msra.mxu0 0.0
        %2457 = vmatprep.subr.mxu0 0.0
        %2458 = vmatpush2.msra.mxu0 0.0
        %2459 = vmatprep.subr.mxu0 0.0
        %2460 = vmatpush2.msra.mxu0 0.0
        %2461 = vmatprep.subr.mxu0 0.0
        %2462 = vmatpush2.msra.mxu0 0.0
        %2463 = vmatprep.subr.mxu0 0.0
        %2464 = vmatpush2.msra.mxu0 0.0
        %2465 = vmatprep.subr.mxu0 0.0
        %2466 = vmatpush2.msra.mxu0 0.0
        %2467 = vmatprep.subr.mxu0 0.0
        %2468 = vmatpush2.msra.mxu0 0.0
        %2469 = vmatprep.subr.mxu0 0.0
        %2470 = vmatpush2.msra.mxu0 0.0
        %2471 = vmatprep.subr.mxu0 0.0
        %2472 = vmatpush2.msra.mxu0 0.0
        %2473 = vmatprep.subr.mxu0 0.0
        %2474 = vmatpush2.msra.mxu0 0.0
        %2475 = vmatprep.subr.mxu0 0.0
        %2476 = vmatpush2.msra.mxu0 0.0
        %2477 = vmatprep.subr.mxu0 0.0
        %2478 = vmatpush2.msra.mxu0 0.0
        %2479 = vmatprep.subr.mxu0 0.0
        %2480 = vmatpush2.msra.mxu0 0.0
        %2481 = vmatprep.subr.mxu0 0.0
        %2482 = vmatpush2.msra.mxu0 0.0
        %2483 = vmatprep.subr.mxu0 0.0
        %2484 = vmatpush2.msra.mxu0 0.0
        %2485 = vmatprep.mubr.f32.mxu0 0.0
        %2486 = vmatmul.mubr.f32.gmra.mxu0 %v2419
        %v2487 = vpop.f32.mrf.mxu0
        %v2488 = vadd.f32 0.0, %v2487
        %v2489 = vpop.f32.mrf.mxu0
        %2490 = vdwg.mxu0
        %s2491 = scalar_lea.vmem %s2, 832
        %v2492 = vld [vmem:[%s2491] sm:$0xff]
        %v2493 = vld [vmem:[%s2491 + $0x8] sm:$0xff]
        %v2494 = vld [vmem:[%s2491 + $0x10] sm:$0xff]
        %v2495 = vld [vmem:[%s2491 + $0x18] sm:$0xff]
        %v2496 = vld [vmem:[%s2491 + $0x20] sm:$0xff]
        %v2497 = vld [vmem:[%s2491 + $0x28] sm:$0xff]
        %v2498 = vld [vmem:[%s2491 + $0x30] sm:$0xff]
        %v2499 = vld [vmem:[%s2491 + $0x38] sm:$0xff]
        %2500 = vmatprep.subr.mxu0 0.0
        %2501 = vmatpush1.msra.mxu0 0.0
        %2502 = vmatprep.subr.mxu0 0.0
        %2503 = vmatpush1.msra.mxu0 0.0
        %2504 = vmatprep.subr.mxu0 0.0
        %2505 = vmatpush1.msra.mxu0 0.0
        %2506 = vmatprep.subr.mxu0 0.0
        %2507 = vmatpush1.msra.mxu0 0.0
        %2508 = vmatprep.subr.mxu0 0.0
        %2509 = vmatpush1.msra.mxu0 0.0
        %2510 = vmatprep.subr.mxu0 0.0
        %2511 = vmatpush1.msra.mxu0 0.0
        %2512 = vmatprep.subr.mxu0 0.0
        %2513 = vmatpush1.msra.mxu0 0.0
        %2514 = vmatprep.subr.mxu0 0.0
        %2515 = vmatpush1.msra.mxu0 0.0
        %2516 = vmatprep.subr.mxu0 0.0
        %2517 = vmatpush1.msra.mxu0 %v2499
        %2518 = vmatprep.subr.mxu0 0.0
        %2519 = vmatpush1.msra.mxu0 %v2498
        %2520 = vmatprep.subr.mxu0 0.0
        %2521 = vmatpush1.msra.mxu0 %v2497
        %2522 = vmatprep.subr.mxu0 0.0
        %2523 = vmatpush1.msra.mxu0 %v2496
        %2524 = vmatprep.subr.mxu0 0.0
        %2525 = vmatpush1.msra.mxu0 %v2495
        %2526 = vmatprep.subr.mxu0 0.0
        %2527 = vmatpush1.msra.mxu0 %v2494
        %2528 = vmatprep.subr.mxu0 0.0
        %2529 = vmatpush1.msra.mxu0 %v2493
        %2530 = vmatprep.subr.mxu0 0.0
        %2531 = vmatpush1.msra.mxu0 %v2492
        %2532 = vmatprep.subr.mxu0 0.0
        %2533 = vmatpush2.msra.mxu0 0.0
        %2534 = vmatprep.subr.mxu0 0.0
        %2535 = vmatpush2.msra.mxu0 0.0
        %2536 = vmatprep.subr.mxu0 0.0
        %2537 = vmatpush2.msra.mxu0 0.0
        %2538 = vmatprep.subr.mxu0 0.0
        %2539 = vmatpush2.msra.mxu0 0.0
        %2540 = vmatprep.subr.mxu0 0.0
        %2541 = vmatpush2.msra.mxu0 0.0
        %2542 = vmatprep.subr.mxu0 0.0
        %2543 = vmatpush2.msra.mxu0 0.0
        %2544 = vmatprep.subr.mxu0 0.0
        %2545 = vmatpush2.msra.mxu0 0.0
        %2546 = vmatprep.subr.mxu0 0.0
        %2547 = vmatpush2.msra.mxu0 0.0
        %2548 = vmatprep.subr.mxu0 0.0
        %2549 = vmatpush2.msra.mxu0 0.0
        %2550 = vmatprep.subr.mxu0 0.0
        %2551 = vmatpush2.msra.mxu0 0.0
        %2552 = vmatprep.subr.mxu0 0.0
        %2553 = vmatpush2.msra.mxu0 0.0
        %2554 = vmatprep.subr.mxu0 0.0
        %2555 = vmatpush2.msra.mxu0 0.0
        %2556 = vmatprep.subr.mxu0 0.0
        %2557 = vmatpush2.msra.mxu0 0.0
        %2558 = vmatprep.subr.mxu0 0.0
        %2559 = vmatpush2.msra.mxu0 0.0
        %2560 = vmatprep.subr.mxu0 0.0
        %2561 = vmatpush2.msra.mxu0 0.0
        %2562 = vmatprep.subr.mxu0 0.0
        %2563 = vmatpush2.msra.mxu0 0.0
        %2564 = vmatprep.mubr.f32.mxu0 0.0
        %2565 = vmatmul.mubr.f32.gmra.mxu0 %v2419
        %v2566 = vpop.f32.mrf.mxu0
        %v2567 = vadd.f32 0.0, %v2566
        %v2568 = vpop.f32.mrf.mxu0
        %2569 = vdwg.mxu0
        %s2570 = scalar_lea.vmem %s2, 896
        %v2571 = vld [vmem:[%s2570] sm:$0xff]
        %v2572 = vld [vmem:[%s2570 + $0x8] sm:$0xff]
        %v2573 = vld [vmem:[%s2570 + $0x10] sm:$0xff]
        %v2574 = vld [vmem:[%s2570 + $0x18] sm:$0xff]
        %v2575 = vld [vmem:[%s2570 + $0x20] sm:$0xff]
        %v2576 = vld [vmem:[%s2570 + $0x28] sm:$0xff]
        %v2577 = vld [vmem:[%s2570 + $0x30] sm:$0xff]
        %v2578 = vld [vmem:[%s2570 + $0x38] sm:$0xff]
        %2579 = vmatprep.subr.mxu0 0.0
        %2580 = vmatpush1.msra.mxu0 0.0
        %2581 = vmatprep.subr.mxu0 0.0
        %2582 = vmatpush1.msra.mxu0 0.0
        %2583 = vmatprep.subr.mxu0 0.0
        %2584 = vmatpush1.msra.mxu0 0.0
        %2585 = vmatprep.subr.mxu0 0.0
        %2586 = vmatpush1.msra.mxu0 0.0
        %2587 = vmatprep.subr.mxu0 0.0
        %2588 = vmatpush1.msra.mxu0 0.0
        %2589 = vmatprep.subr.mxu0 0.0
        %2590 = vmatpush1.msra.mxu0 0.0
        %2591 = vmatprep.subr.mxu0 0.0
        %2592 = vmatpush1.msra.mxu0 0.0
        %2593 = vmatprep.subr.mxu0 0.0
        %2594 = vmatpush1.msra.mxu0 0.0
        %2595 = vmatprep.subr.mxu0 0.0
        %2596 = vmatpush1.msra.mxu0 %v2578
        %2597 = vmatprep.subr.mxu0 0.0
        %2598 = vmatpush1.msra.mxu0 %v2577
        %2599 = vmatprep.subr.mxu0 0.0
        %2600 = vmatpush1.msra.mxu0 %v2576
        %2601 = vmatprep.subr.mxu0 0.0
        %2602 = vmatpush1.msra.mxu0 %v2575
        %2603 = vmatprep.subr.mxu0 0.0
        %2604 = vmatpush1.msra.mxu0 %v2574
        %2605 = vmatprep.subr.mxu0 0.0
        %2606 = vmatpush1.msra.mxu0 %v2573
        %2607 = vmatprep.subr.mxu0 0.0
        %2608 = vmatpush1.msra.mxu0 %v2572
        %2609 = vmatprep.subr.mxu0 0.0
        %2610 = vmatpush1.msra.mxu0 %v2571
        %2611 = vmatprep.subr.mxu0 0.0
        %2612 = vmatpush2.msra.mxu0 0.0
        %2613 = vmatprep.subr.mxu0 0.0
        %2614 = vmatpush2.msra.mxu0 0.0
        %2615 = vmatprep.subr.mxu0 0.0
        %2616 = vmatpush2.msra.mxu0 0.0
        %2617 = vmatprep.subr.mxu0 0.0
        %2618 = vmatpush2.msra.mxu0 0.0
        %2619 = vmatprep.subr.mxu0 0.0
        %2620 = vmatpush2.msra.mxu0 0.0
        %2621 = vmatprep.subr.mxu0 0.0
        %2622 = vmatpush2.msra.mxu0 0.0
        %2623 = vmatprep.subr.mxu0 0.0
        %2624 = vmatpush2.msra.mxu0 0.0
        %2625 = vmatprep.subr.mxu0 0.0
        %2626 = vmatpush2.msra.mxu0 0.0
        %2627 = vmatprep.subr.mxu0 0.0
        %2628 = vmatpush2.msra.mxu0 0.0
        %2629 = vmatprep.subr.mxu0 0.0
        %2630 = vmatpush2.msra.mxu0 0.0
        %2631 = vmatprep.subr.mxu0 0.0
        %2632 = vmatpush2.msra.mxu0 0.0
        %2633 = vmatprep.subr.mxu0 0.0
        %2634 = vmatpush2.msra.mxu0 0.0
        %2635 = vmatprep.subr.mxu0 0.0
        %2636 = vmatpush2.msra.mxu0 0.0
        %2637 = vmatprep.subr.mxu0 0.0
        %2638 = vmatpush2.msra.mxu0 0.0
        %2639 = vmatprep.subr.mxu0 0.0
        %2640 = vmatpush2.msra.mxu0 0.0
        %2641 = vmatprep.subr.mxu0 0.0
        %2642 = vmatpush2.msra.mxu0 0.0
        %2643 = vmatprep.mubr.f32.mxu0 0.0
        %2644 = vmatmul.mubr.f32.gmra.mxu0 %v2419
        %v2645 = vpop.f32.mrf.mxu0
        %v2646 = vadd.f32 0.0, %v2645
        %v2647 = vpop.f32.mrf.mxu0
        %2648 = vdwg.mxu0
        %v2650 = vsel %vm695, %v2488, 0
        %v2653 = vsel %vm695, %v2567, 0
        %2655 = vmatprep.subr.mxu0 0.0
        %2656 = vmatpush1.xpose.msra.mxu0 0.0
        %2657 = vmatprep.subr.mxu0 0.0
        %2658 = vmatpush1.xpose.msra.mxu0 0.0
        %2659 = vmatprep.subr.mxu0 0.0
        %2660 = vmatpush1.xpose.msra.mxu0 0.0
        %2661 = vmatprep.subr.mxu0 0.0
        %2662 = vmatpush1.xpose.msra.mxu0 0.0
        %2663 = vmatprep.subr.mxu0 0.0
        %2664 = vmatpush1.xpose.msra.mxu0 0.0
        %2665 = vmatprep.subr.mxu0 0.0
        %2666 = vmatpush1.xpose.msra.mxu0 0.0
        %2667 = vmatprep.subr.mxu0 0.0
        %2668 = vmatpush1.xpose.msra.mxu0 0.0
        %2669 = vmatprep.subr.mxu0 0.0
        %2670 = vmatpush1.xpose.msra.mxu0 0.0
        %2671 = vmatprep.subr.mxu0 0.0
        %2672 = vmatpush1.xpose.msra.mxu0 0.0
        %2673 = vmatprep.subr.mxu0 0.0
        %2674 = vmatpush1.xpose.msra.mxu0 0.0
        %2675 = vmatprep.subr.mxu0 0.0
        %2676 = vmatpush1.xpose.msra.mxu0 0.0
        %2677 = vmatprep.subr.mxu0 0.0
        %2678 = vmatpush1.xpose.msra.mxu0 0.0
        %2679 = vmatprep.subr.mxu0 0.0
        %2680 = vmatpush1.xpose.msra.mxu0 0.0
        %2681 = vmatprep.subr.mxu0 0.0
        %2682 = vmatpush1.xpose.msra.mxu0 0.0
        %2683 = vmatprep.subr.mxu0 0.0
        %2684 = vmatpush1.xpose.msra.mxu0 0.0
        %2685 = vmatprep.subr.mxu0 0.0
        %2686 = vmatpush1.xpose.msra.mxu0 %v2653
        %2687 = vmatprep.subr.mxu0 0.0
        %2688 = vmatpush2.xpose.msra.mxu0 0.0
        %2689 = vmatprep.subr.mxu0 0.0
        %2690 = vmatpush2.xpose.msra.mxu0 0.0
        %2691 = vmatprep.subr.mxu0 0.0
        %2692 = vmatpush2.xpose.msra.mxu0 0.0
        %2693 = vmatprep.subr.mxu0 0.0
        %2694 = vmatpush2.xpose.msra.mxu0 0.0
        %2695 = vmatprep.subr.mxu0 0.0
        %2696 = vmatpush2.xpose.msra.mxu0 0.0
        %2697 = vmatprep.subr.mxu0 0.0
        %2698 = vmatpush2.xpose.msra.mxu0 0.0
        %2699 = vmatprep.subr.mxu0 0.0
        %2700 = vmatpush2.xpose.msra.mxu0 0.0
        %2701 = vmatprep.subr.mxu0 0.0
        %2702 = vmatpush2.xpose.msra.mxu0 0.0
        %2703 = vmatprep.subr.mxu0 0.0
        %2704 = vmatpush2.xpose.msra.mxu0 0.0
        %2705 = vmatprep.subr.mxu0 0.0
        %2706 = vmatpush2.xpose.msra.mxu0 0.0
        %2707 = vmatprep.subr.mxu0 0.0
        %2708 = vmatpush2.xpose.msra.mxu0 0.0
        %2709 = vmatprep.subr.mxu0 0.0
        %2710 = vmatpush2.xpose.msra.mxu0 0.0
        %2711 = vmatprep.subr.mxu0 0.0
        %2712 = vmatpush2.xpose.msra.mxu0 0.0
        %2713 = vmatprep.subr.mxu0 0.0
        %2714 = vmatpush2.xpose.msra.mxu0 0.0
        %2715 = vmatprep.subr.mxu0 0.0
        %2716 = vmatpush2.xpose.msra.mxu0 0.0
        %2717 = vmatprep.subr.mxu0 0.0
        %2718 = vmatpush2.xpose.msra.mxu0 0.0
        %2719 = vmatprep.mubr.f32.mxu0 0.0
        %2720 = vmatmul.mubr.f32.gmra.mxu0 %v2650
        %v2721 = vpop.f32.mrf.mxu0
        %v2722 = vadd.f32 %v429, %v2721
        %v2723 = vpop.f32.mrf.mxu0
        %2724 = vdwg.mxu0
        %v2725 = vsel %vm772, %v2722, -inf
        %2726 = vmax.xlane.f32.xlu0 %v2725
        %v2727 = vpop.xlane.xlu0 %2726
        %v2728 = vsub.f32 %v2722, %v2727
        %v2729 = vmul.f32 %v2728, 1.442695
        %v2730 = vpow.pop %v2729
        %v2731 = vsel %vm772, %v2730, 0.0
        %2732 = vadd.xlane.f32.xlu0 %v2731
        %v2733 = vpop.xlane.xlu0 %2732
        %v2734 = vrcp.pop %v2733
        %v2735 = vmul.f32 %v2730, %v2734
        %v2737 = vsel %vm772, %v2735, 0
        %2739 = vmatprep.subr.mxu0 0.0
        %2740 = vmatpush1.msra.mxu0 0.0
        %2741 = vmatprep.subr.mxu0 0.0
        %2742 = vmatpush1.msra.mxu0 0.0
        %2743 = vmatprep.subr.mxu0 0.0
        %2744 = vmatpush1.msra.mxu0 0.0
        %2745 = vmatprep.subr.mxu0 0.0
        %2746 = vmatpush1.msra.mxu0 0.0
        %2747 = vmatprep.subr.mxu0 0.0
        %2748 = vmatpush1.msra.mxu0 0.0
        %2749 = vmatprep.subr.mxu0 0.0
        %2750 = vmatpush1.msra.mxu0 0.0
        %2751 = vmatprep.subr.mxu0 0.0
        %2752 = vmatpush1.msra.mxu0 0.0
        %2753 = vmatprep.subr.mxu0 0.0
        %2754 = vmatpush1.msra.mxu0 0.0
        %2755 = vmatprep.subr.mxu0 0.0
        %2756 = vmatpush1.msra.mxu0 0.0
        %2757 = vmatprep.subr.mxu0 0.0
        %2758 = vmatpush1.msra.mxu0 0.0
        %2759 = vmatprep.subr.mxu0 0.0
        %2760 = vmatpush1.msra.mxu0 0.0
        %2761 = vmatprep.subr.mxu0 0.0
        %2762 = vmatpush1.msra.mxu0 0.0
        %2763 = vmatprep.subr.mxu0 0.0
        %2764 = vmatpush1.msra.mxu0 0.0
        %2765 = vmatprep.subr.mxu0 0.0
        %2766 = vmatpush1.msra.mxu0 0.0
        %2767 = vmatprep.subr.mxu0 0.0
        %2768 = vmatpush1.msra.mxu0 0.0
        %2769 = vmatprep.subr.mxu0 0.0
        %2770 = vmatpush1.msra.mxu0 %v2646
        %2771 = vmatprep.subr.mxu0 0.0
        %2772 = vmatpush2.msra.mxu0 0.0
        %2773 = vmatprep.subr.mxu0 0.0
        %2774 = vmatpush2.msra.mxu0 0.0
        %2775 = vmatprep.subr.mxu0 0.0
        %2776 = vmatpush2.msra.mxu0 0.0
        %2777 = vmatprep.subr.mxu0 0.0
        %2778 = vmatpush2.msra.mxu0 0.0
        %2779 = vmatprep.subr.mxu0 0.0
        %2780 = vmatpush2.msra.mxu0 0.0
        %2781 = vmatprep.subr.mxu0 0.0
        %2782 = vmatpush2.msra.mxu0 0.0
        %2783 = vmatprep.subr.mxu0 0.0
        %2784 = vmatpush2.msra.mxu0 0.0
        %2785 = vmatprep.subr.mxu0 0.0
        %2786 = vmatpush2.msra.mxu0 0.0
        %2787 = vmatprep.subr.mxu0 0.0
        %2788 = vmatpush2.msra.mxu0 0.0
        %2789 = vmatprep.subr.mxu0 0.0
        %2790 = vmatpush2.msra.mxu0 0.0
        %2791 = vmatprep.subr.mxu0 0.0
        %2792 = vmatpush2.msra.mxu0 0.0
        %2793 = vmatprep.subr.mxu0 0.0
        %2794 = vmatpush2.msra.mxu0 0.0
        %2795 = vmatprep.subr.mxu0 0.0
        %2796 = vmatpush2.msra.mxu0 0.0
        %2797 = vmatprep.subr.mxu0 0.0
        %2798 = vmatpush2.msra.mxu0 0.0
        %2799 = vmatprep.subr.mxu0 0.0
        %2800 = vmatpush2.msra.mxu0 0.0
        %2801 = vmatprep.subr.mxu0 0.0
        %2802 = vmatpush2.msra.mxu0 0.0
        %2803 = vmatprep.mubr.f32.mxu0 0.0
        %2804 = vmatmul.mubr.f32.gmra.mxu0 %v2737
        %v2805 = vpop.f32.mrf.mxu0
        %v2806 = vadd.f32 0.0, %v2805
        %v2807 = vpop.f32.mrf.mxu0
        %2808 = vdwg.mxu0
        %s2809 = scalar_lea.vmem %s2, 960
        %v2810 = vld [vmem:[%s2809] sm:$0xff]
        %v2811 = vld [vmem:[%s2809 + $0x8] sm:$0xff]
        %v2812 = vld [vmem:[%s2809 + $0x10] sm:$0xff]
        %v2813 = vld [vmem:[%s2809 + $0x18] sm:$0xff]
        %v2814 = vld [vmem:[%s2809 + $0x20] sm:$0xff]
        %v2815 = vld [vmem:[%s2809 + $0x28] sm:$0xff]
        %v2816 = vld [vmem:[%s2809 + $0x30] sm:$0xff]
        %v2817 = vld [vmem:[%s2809 + $0x38] sm:$0xff]
        %2818 = vmatprep.subr.mxu0 0.0
        %2819 = vmatpush1.msra.mxu0 0.0
        %2820 = vmatprep.subr.mxu0 0.0
        %2821 = vmatpush1.msra.mxu0 0.0
        %2822 = vmatprep.subr.mxu0 0.0
        %2823 = vmatpush1.msra.mxu0 0.0
        %2824 = vmatprep.subr.mxu0 0.0
        %2825 = vmatpush1.msra.mxu0 0.0
        %2826 = vmatprep.subr.mxu0 0.0
        %2827 = vmatpush1.msra.mxu0 0.0
        %2828 = vmatprep.subr.mxu0 0.0
        %2829 = vmatpush1.msra.mxu0 0.0
        %2830 = vmatprep.subr.mxu0 0.0
        %2831 = vmatpush1.msra.mxu0 0.0
        %2832 = vmatprep.subr.mxu0 0.0
        %2833 = vmatpush1.msra.mxu0 0.0
        %2834 = vmatprep.subr.mxu0 0.0
        %2835 = vmatpush1.msra.mxu0 %v2817
        %2836 = vmatprep.subr.mxu0 0.0
        %2837 = vmatpush1.msra.mxu0 %v2816
        %2838 = vmatprep.subr.mxu0 0.0
        %2839 = vmatpush1.msra.mxu0 %v2815
        %2840 = vmatprep.subr.mxu0 0.0
        %2841 = vmatpush1.msra.mxu0 %v2814
        %2842 = vmatprep.subr.mxu0 0.0
        %2843 = vmatpush1.msra.mxu0 %v2813
        %2844 = vmatprep.subr.mxu0 0.0
        %2845 = vmatpush1.msra.mxu0 %v2812
        %2846 = vmatprep.subr.mxu0 0.0
        %2847 = vmatpush1.msra.mxu0 %v2811
        %2848 = vmatprep.subr.mxu0 0.0
        %2849 = vmatpush1.msra.mxu0 %v2810
        %2850 = vmatprep.subr.mxu0 0.0
        %2851 = vmatpush2.msra.mxu0 0.0
        %2852 = vmatprep.subr.mxu0 0.0
        %2853 = vmatpush2.msra.mxu0 0.0
        %2854 = vmatprep.subr.mxu0 0.0
        %2855 = vmatpush2.msra.mxu0 0.0
        %2856 = vmatprep.subr.mxu0 0.0
        %2857 = vmatpush2.msra.mxu0 0.0
        %2858 = vmatprep.subr.mxu0 0.0
        %2859 = vmatpush2.msra.mxu0 0.0
        %2860 = vmatprep.subr.mxu0 0.0
        %2861 = vmatpush2.msra.mxu0 0.0
        %2862 = vmatprep.subr.mxu0 0.0
        %2863 = vmatpush2.msra.mxu0 0.0
        %2864 = vmatprep.subr.mxu0 0.0
        %2865 = vmatpush2.msra.mxu0 0.0
        %2866 = vmatprep.subr.mxu0 0.0
        %2867 = vmatpush2.msra.mxu0 0.0
        %2868 = vmatprep.subr.mxu0 0.0
        %2869 = vmatpush2.msra.mxu0 0.0
        %2870 = vmatprep.subr.mxu0 0.0
        %2871 = vmatpush2.msra.mxu0 0.0
        %2872 = vmatprep.subr.mxu0 0.0
        %2873 = vmatpush2.msra.mxu0 0.0
        %2874 = vmatprep.subr.mxu0 0.0
        %2875 = vmatpush2.msra.mxu0 0.0
        %2876 = vmatprep.subr.mxu0 0.0
        %2877 = vmatpush2.msra.mxu0 0.0
        %2878 = vmatprep.subr.mxu0 0.0
        %2879 = vmatpush2.msra.mxu0 0.0
        %2880 = vmatprep.subr.mxu0 0.0
        %2881 = vmatpush2.msra.mxu0 0.0
        %2882 = vmatprep.mubr.f32.mxu0 0.0
        %2883 = vmatmul.mubr.f32.gmra.mxu0 %v2419
        %v2884 = vpop.f32.mrf.mxu0
        %v2885 = vadd.f32 0.0, %v2884
        %v2886 = vpop.f32.mrf.mxu0
        %2887 = vdwg.mxu0
        %s2888 = scalar_lea.vmem %s2, 1024
        %v2889 = vld [vmem:[%s2888] sm:$0xff]
        %v2890 = vld [vmem:[%s2888 + $0x8] sm:$0xff]
        %v2891 = vld [vmem:[%s2888 + $0x10] sm:$0xff]
        %v2892 = vld [vmem:[%s2888 + $0x18] sm:$0xff]
        %v2893 = vld [vmem:[%s2888 + $0x20] sm:$0xff]
        %v2894 = vld [vmem:[%s2888 + $0x28] sm:$0xff]
        %v2895 = vld [vmem:[%s2888 + $0x30] sm:$0xff]
        %v2896 = vld [vmem:[%s2888 + $0x38] sm:$0xff]
        %2897 = vmatprep.subr.mxu0 0.0
        %2898 = vmatpush1.msra.mxu0 0.0
        %2899 = vmatprep.subr.mxu0 0.0
        %2900 = vmatpush1.msra.mxu0 0.0
        %2901 = vmatprep.subr.mxu0 0.0
        %2902 = vmatpush1.msra.mxu0 0.0
        %2903 = vmatprep.subr.mxu0 0.0
        %2904 = vmatpush1.msra.mxu0 0.0
        %2905 = vmatprep.subr.mxu0 0.0
        %2906 = vmatpush1.msra.mxu0 0.0
        %2907 = vmatprep.subr.mxu0 0.0
        %2908 = vmatpush1.msra.mxu0 0.0
        %2909 = vmatprep.subr.mxu0 0.0
        %2910 = vmatpush1.msra.mxu0 0.0
        %2911 = vmatprep.subr.mxu0 0.0
        %2912 = vmatpush1.msra.mxu0 0.0
        %2913 = vmatprep.subr.mxu0 0.0
        %2914 = vmatpush1.msra.mxu0 %v2896
        %2915 = vmatprep.subr.mxu0 0.0
        %2916 = vmatpush1.msra.mxu0 %v2895
        %2917 = vmatprep.subr.mxu0 0.0
        %2918 = vmatpush1.msra.mxu0 %v2894
        %2919 = vmatprep.subr.mxu0 0.0
        %2920 = vmatpush1.msra.mxu0 %v2893
        %2921 = vmatprep.subr.mxu0 0.0
        %2922 = vmatpush1.msra.mxu0 %v2892
        %2923 = vmatprep.subr.mxu0 0.0
        %2924 = vmatpush1.msra.mxu0 %v2891
        %2925 = vmatprep.subr.mxu0 0.0
        %2926 = vmatpush1.msra.mxu0 %v2890
        %2927 = vmatprep.subr.mxu0 0.0
        %2928 = vmatpush1.msra.mxu0 %v2889
        %2929 = vmatprep.subr.mxu0 0.0
        %2930 = vmatpush2.msra.mxu0 0.0
        %2931 = vmatprep.subr.mxu0 0.0
        %2932 = vmatpush2.msra.mxu0 0.0
        %2933 = vmatprep.subr.mxu0 0.0
        %2934 = vmatpush2.msra.mxu0 0.0
        %2935 = vmatprep.subr.mxu0 0.0
        %2936 = vmatpush2.msra.mxu0 0.0
        %2937 = vmatprep.subr.mxu0 0.0
        %2938 = vmatpush2.msra.mxu0 0.0
        %2939 = vmatprep.subr.mxu0 0.0
        %2940 = vmatpush2.msra.mxu0 0.0
        %2941 = vmatprep.subr.mxu0 0.0
        %2942 = vmatpush2.msra.mxu0 0.0
        %2943 = vmatprep.subr.mxu0 0.0
        %2944 = vmatpush2.msra.mxu0 0.0
        %2945 = vmatprep.subr.mxu0 0.0
        %2946 = vmatpush2.msra.mxu0 0.0
        %2947 = vmatprep.subr.mxu0 0.0
        %2948 = vmatpush2.msra.mxu0 0.0
        %2949 = vmatprep.subr.mxu0 0.0
        %2950 = vmatpush2.msra.mxu0 0.0
        %2951 = vmatprep.subr.mxu0 0.0
        %2952 = vmatpush2.msra.mxu0 0.0
        %2953 = vmatprep.subr.mxu0 0.0
        %2954 = vmatpush2.msra.mxu0 0.0
        %2955 = vmatprep.subr.mxu0 0.0
        %2956 = vmatpush2.msra.mxu0 0.0
        %2957 = vmatprep.subr.mxu0 0.0
        %2958 = vmatpush2.msra.mxu0 0.0
        %2959 = vmatprep.subr.mxu0 0.0
        %2960 = vmatpush2.msra.mxu0 0.0
        %2961 = vmatprep.mubr.f32.mxu0 0.0
        %2962 = vmatmul.mubr.f32.gmra.mxu0 %v2419
        %v2963 = vpop.f32.mrf.mxu0
        %v2964 = vadd.f32 0.0, %v2963
        %v2965 = vpop.f32.mrf.mxu0
        %2966 = vdwg.mxu0
        %s2967 = scalar_lea.vmem %s2, 1088
        %v2968 = vld [vmem:[%s2967] sm:$0xff]
        %v2969 = vld [vmem:[%s2967 + $0x8] sm:$0xff]
        %v2970 = vld [vmem:[%s2967 + $0x10] sm:$0xff]
        %v2971 = vld [vmem:[%s2967 + $0x18] sm:$0xff]
        %v2972 = vld [vmem:[%s2967 + $0x20] sm:$0xff]
        %v2973 = vld [vmem:[%s2967 + $0x28] sm:$0xff]
        %v2974 = vld [vmem:[%s2967 + $0x30] sm:$0xff]
        %v2975 = vld [vmem:[%s2967 + $0x38] sm:$0xff]
        %2976 = vmatprep.subr.mxu0 0.0
        %2977 = vmatpush1.msra.mxu0 0.0
        %2978 = vmatprep.subr.mxu0 0.0
        %2979 = vmatpush1.msra.mxu0 0.0
        %2980 = vmatprep.subr.mxu0 0.0
        %2981 = vmatpush1.msra.mxu0 0.0
        %2982 = vmatprep.subr.mxu0 0.0
        %2983 = vmatpush1.msra.mxu0 0.0
        %2984 = vmatprep.subr.mxu0 0.0
        %2985 = vmatpush1.msra.mxu0 0.0
        %2986 = vmatprep.subr.mxu0 0.0
        %2987 = vmatpush1.msra.mxu0 0.0
        %2988 = vmatprep.subr.mxu0 0.0
        %2989 = vmatpush1.msra.mxu0 0.0
        %2990 = vmatprep.subr.mxu0 0.0
        %2991 = vmatpush1.msra.mxu0 0.0
        %2992 = vmatprep.subr.mxu0 0.0
        %2993 = vmatpush1.msra.mxu0 %v2975
        %2994 = vmatprep.subr.mxu0 0.0
        %2995 = vmatpush1.msra.mxu0 %v2974
        %2996 = vmatprep.subr.mxu0 0.0
        %2997 = vmatpush1.msra.mxu0 %v2973
        %2998 = vmatprep.subr.mxu0 0.0
        %2999 = vmatpush1.msra.mxu0 %v2972
        %3000 = vmatprep.subr.mxu0 0.0
        %3001 = vmatpush1.msra.mxu0 %v2971
        %3002 = vmatprep.subr.mxu0 0.0
        %3003 = vmatpush1.msra.mxu0 %v2970
        %3004 = vmatprep.subr.mxu0 0.0
        %3005 = vmatpush1.msra.mxu0 %v2969
        %3006 = vmatprep.subr.mxu0 0.0
        %3007 = vmatpush1.msra.mxu0 %v2968
        %3008 = vmatprep.subr.mxu0 0.0
        %3009 = vmatpush2.msra.mxu0 0.0
        %3010 = vmatprep.subr.mxu0 0.0
        %3011 = vmatpush2.msra.mxu0 0.0
        %3012 = vmatprep.subr.mxu0 0.0
        %3013 = vmatpush2.msra.mxu0 0.0
        %3014 = vmatprep.subr.mxu0 0.0
        %3015 = vmatpush2.msra.mxu0 0.0
        %3016 = vmatprep.subr.mxu0 0.0
        %3017 = vmatpush2.msra.mxu0 0.0
        %3018 = vmatprep.subr.mxu0 0.0
        %3019 = vmatpush2.msra.mxu0 0.0
        %3020 = vmatprep.subr.mxu0 0.0
        %3021 = vmatpush2.msra.mxu0 0.0
        %3022 = vmatprep.subr.mxu0 0.0
        %3023 = vmatpush2.msra.mxu0 0.0
        %3024 = vmatprep.subr.mxu0 0.0
        %3025 = vmatpush2.msra.mxu0 0.0
        %3026 = vmatprep.subr.mxu0 0.0
        %3027 = vmatpush2.msra.mxu0 0.0
        %3028 = vmatprep.subr.mxu0 0.0
        %3029 = vmatpush2.msra.mxu0 0.0
        %3030 = vmatprep.subr.mxu0 0.0
        %3031 = vmatpush2.msra.mxu0 0.0
        %3032 = vmatprep.subr.mxu0 0.0
        %3033 = vmatpush2.msra.mxu0 0.0
        %3034 = vmatprep.subr.mxu0 0.0
        %3035 = vmatpush2.msra.mxu0 0.0
        %3036 = vmatprep.subr.mxu0 0.0
        %3037 = vmatpush2.msra.mxu0 0.0
        %3038 = vmatprep.subr.mxu0 0.0
        %3039 = vmatpush2.msra.mxu0 0.0
        %3040 = vmatprep.mubr.f32.mxu0 0.0
        %3041 = vmatmul.mubr.f32.gmra.mxu0 %v2419
        %v3042 = vpop.f32.mrf.mxu0
        %v3043 = vadd.f32 0.0, %v3042
        %v3044 = vpop.f32.mrf.mxu0
        %3045 = vdwg.mxu0
        %v3047 = vsel %vm695, %v2885, 0
        %v3050 = vsel %vm695, %v2964, 0
        %3052 = vmatprep.subr.mxu0 0.0
        %3053 = vmatpush1.xpose.msra.mxu0 0.0
        %3054 = vmatprep.subr.mxu0 0.0
        %3055 = vmatpush1.xpose.msra.mxu0 0.0
        %3056 = vmatprep.subr.mxu0 0.0
        %3057 = vmatpush1.xpose.msra.mxu0 0.0
        %3058 = vmatprep.subr.mxu0 0.0
        %3059 = vmatpush1.xpose.msra.mxu0 0.0
        %3060 = vmatprep.subr.mxu0 0.0
        %3061 = vmatpush1.xpose.msra.mxu0 0.0
        %3062 = vmatprep.subr.mxu0 0.0
        %3063 = vmatpush1.xpose.msra.mxu0 0.0
        %3064 = vmatprep.subr.mxu0 0.0
        %3065 = vmatpush1.xpose.msra.mxu0 0.0
        %3066 = vmatprep.subr.mxu0 0.0
        %3067 = vmatpush1.xpose.msra.mxu0 0.0
        %3068 = vmatprep.subr.mxu0 0.0
        %3069 = vmatpush1.xpose.msra.mxu0 0.0
        %3070 = vmatprep.subr.mxu0 0.0
        %3071 = vmatpush1.xpose.msra.mxu0 0.0
        %3072 = vmatprep.subr.mxu0 0.0
        %3073 = vmatpush1.xpose.msra.mxu0 0.0
        %3074 = vmatprep.subr.mxu0 0.0
        %3075 = vmatpush1.xpose.msra.mxu0 0.0
        %3076 = vmatprep.subr.mxu0 0.0
        %3077 = vmatpush1.xpose.msra.mxu0 0.0
        %3078 = vmatprep.subr.mxu0 0.0
        %3079 = vmatpush1.xpose.msra.mxu0 0.0
        %3080 = vmatprep.subr.mxu0 0.0
        %3081 = vmatpush1.xpose.msra.mxu0 0.0
        %3082 = vmatprep.subr.mxu0 0.0
        %3083 = vmatpush1.xpose.msra.mxu0 %v3050
        %3084 = vmatprep.subr.mxu0 0.0
        %3085 = vmatpush2.xpose.msra.mxu0 0.0
        %3086 = vmatprep.subr.mxu0 0.0
        %3087 = vmatpush2.xpose.msra.mxu0 0.0
        %3088 = vmatprep.subr.mxu0 0.0
        %3089 = vmatpush2.xpose.msra.mxu0 0.0
        %3090 = vmatprep.subr.mxu0 0.0
        %3091 = vmatpush2.xpose.msra.mxu0 0.0
        %3092 = vmatprep.subr.mxu0 0.0
        %3093 = vmatpush2.xpose.msra.mxu0 0.0
        %3094 = vmatprep.subr.mxu0 0.0
        %3095 = vmatpush2.xpose.msra.mxu0 0.0
        %3096 = vmatprep.subr.mxu0 0.0
        %3097 = vmatpush2.xpose.msra.mxu0 0.0
        %3098 = vmatprep.subr.mxu0 0.0
        %3099 = vmatpush2.xpose.msra.mxu0 0.0
        %3100 = vmatprep.subr.mxu0 0.0
        %3101 = vmatpush2.xpose.msra.mxu0 0.0
        %3102 = vmatprep.subr.mxu0 0.0
        %3103 = vmatpush2.xpose.msra.mxu0 0.0
        %3104 = vmatprep.subr.mxu0 0.0
        %3105 = vmatpush2.xpose.msra.mxu0 0.0
        %3106 = vmatprep.subr.mxu0 0.0
        %3107 = vmatpush2.xpose.msra.mxu0 0.0
        %3108 = vmatprep.subr.mxu0 0.0
        %3109 = vmatpush2.xpose.msra.mxu0 0.0
        %3110 = vmatprep.subr.mxu0 0.0
        %3111 = vmatpush2.xpose.msra.mxu0 0.0
        %3112 = vmatprep.subr.mxu0 0.0
        %3113 = vmatpush2.xpose.msra.mxu0 0.0
        %3114 = vmatprep.subr.mxu0 0.0
        %3115 = vmatpush2.xpose.msra.mxu0 0.0
        %3116 = vmatprep.mubr.f32.mxu0 0.0
        %3117 = vmatmul.mubr.f32.gmra.mxu0 %v3047
        %v3118 = vpop.f32.mrf.mxu0
        %v3119 = vadd.f32 %v429, %v3118
        %v3120 = vpop.f32.mrf.mxu0
        %3121 = vdwg.mxu0
        %v3122 = vsel %vm772, %v3119, -inf
        %3123 = vmax.xlane.f32.xlu0 %v3122
        %v3124 = vpop.xlane.xlu0 %3123
        %v3125 = vsub.f32 %v3119, %v3124
        %v3126 = vmul.f32 %v3125, 1.442695
        %v3127 = vpow.pop %v3126
        %v3128 = vsel %vm772, %v3127, 0.0
        %3129 = vadd.xlane.f32.xlu0 %v3128
        %v3130 = vpop.xlane.xlu0 %3129
        %v3131 = vrcp.pop %v3130
        %v3132 = vmul.f32 %v3127, %v3131
        %v3134 = vsel %vm772, %v3132, 0
        %3136 = vmatprep.subr.mxu0 0.0
        %3137 = vmatpush1.msra.mxu0 0.0
        %3138 = vmatprep.subr.mxu0 0.0
        %3139 = vmatpush1.msra.mxu0 0.0
        %3140 = vmatprep.subr.mxu0 0.0
        %3141 = vmatpush1.msra.mxu0 0.0
        %3142 = vmatprep.subr.mxu0 0.0
        %3143 = vmatpush1.msra.mxu0 0.0
        %3144 = vmatprep.subr.mxu0 0.0
        %3145 = vmatpush1.msra.mxu0 0.0
        %3146 = vmatprep.subr.mxu0 0.0
        %3147 = vmatpush1.msra.mxu0 0.0
        %3148 = vmatprep.subr.mxu0 0.0
        %3149 = vmatpush1.msra.mxu0 0.0
        %3150 = vmatprep.subr.mxu0 0.0
        %3151 = vmatpush1.msra.mxu0 0.0
        %3152 = vmatprep.subr.mxu0 0.0
        %3153 = vmatpush1.msra.mxu0 0.0
        %3154 = vmatprep.subr.mxu0 0.0
        %3155 = vmatpush1.msra.mxu0 0.0
        %3156 = vmatprep.subr.mxu0 0.0
        %3157 = vmatpush1.msra.mxu0 0.0
        %3158 = vmatprep.subr.mxu0 0.0
        %3159 = vmatpush1.msra.mxu0 0.0
        %3160 = vmatprep.subr.mxu0 0.0
        %3161 = vmatpush1.msra.mxu0 0.0
        %3162 = vmatprep.subr.mxu0 0.0
        %3163 = vmatpush1.msra.mxu0 0.0
        %3164 = vmatprep.subr.mxu0 0.0
        %3165 = vmatpush1.msra.mxu0 0.0
        %3166 = vmatprep.subr.mxu0 0.0
        %3167 = vmatpush1.msra.mxu0 %v3043
        %3168 = vmatprep.subr.mxu0 0.0
        %3169 = vmatpush2.msra.mxu0 0.0
        %3170 = vmatprep.subr.mxu0 0.0
        %3171 = vmatpush2.msra.mxu0 0.0
        %3172 = vmatprep.subr.mxu0 0.0
        %3173 = vmatpush2.msra.mxu0 0.0
        %3174 = vmatprep.subr.mxu0 0.0
        %3175 = vmatpush2.msra.mxu0 0.0
        %3176 = vmatprep.subr.mxu0 0.0
        %3177 = vmatpush2.msra.mxu0 0.0
        %3178 = vmatprep.subr.mxu0 0.0
        %3179 = vmatpush2.msra.mxu0 0.0
        %3180 = vmatprep.subr.mxu0 0.0
        %3181 = vmatpush2.msra.mxu0 0.0
        %3182 = vmatprep.subr.mxu0 0.0
        %3183 = vmatpush2.msra.mxu0 0.0
        %3184 = vmatprep.subr.mxu0 0.0
        %3185 = vmatpush2.msra.mxu0 0.0
        %3186 = vmatprep.subr.mxu0 0.0
        %3187 = vmatpush2.msra.mxu0 0.0
        %3188 = vmatprep.subr.mxu0 0.0
        %3189 = vmatpush2.msra.mxu0 0.0
        %3190 = vmatprep.subr.mxu0 0.0
        %3191 = vmatpush2.msra.mxu0 0.0
        %3192 = vmatprep.subr.mxu0 0.0
        %3193 = vmatpush2.msra.mxu0 0.0
        %3194 = vmatprep.subr.mxu0 0.0
        %3195 = vmatpush2.msra.mxu0 0.0
        %3196 = vmatprep.subr.mxu0 0.0
        %3197 = vmatpush2.msra.mxu0 0.0
        %3198 = vmatprep.subr.mxu0 0.0
        %3199 = vmatpush2.msra.mxu0 0.0
        %3200 = vmatprep.mubr.f32.mxu0 0.0
        %3201 = vmatmul.mubr.f32.gmra.mxu0 %v3134
        %v3202 = vpop.f32.mrf.mxu0
        %v3203 = vadd.f32 0.0, %v3202
        %v3204 = vpop.f32.mrf.mxu0
        %3205 = vdwg.mxu0
        %s3206 = scalar_lea.vmem %s2, 1152
        %v3207 = vld [vmem:[%s3206] sm:$0xff]
        %v3208 = vld [vmem:[%s3206 + $0x8] sm:$0xff]
        %v3209 = vld [vmem:[%s3206 + $0x10] sm:$0xff]
        %v3210 = vld [vmem:[%s3206 + $0x18] sm:$0xff]
        %v3211 = vld [vmem:[%s3206 + $0x20] sm:$0xff]
        %v3212 = vld [vmem:[%s3206 + $0x28] sm:$0xff]
        %v3213 = vld [vmem:[%s3206 + $0x30] sm:$0xff]
        %v3214 = vld [vmem:[%s3206 + $0x38] sm:$0xff]
        %3215 = vmatprep.subr.mxu0 0.0
        %3216 = vmatpush1.msra.mxu0 0.0
        %3217 = vmatprep.subr.mxu0 0.0
        %3218 = vmatpush1.msra.mxu0 0.0
        %3219 = vmatprep.subr.mxu0 0.0
        %3220 = vmatpush1.msra.mxu0 0.0
        %3221 = vmatprep.subr.mxu0 0.0
        %3222 = vmatpush1.msra.mxu0 0.0
        %3223 = vmatprep.subr.mxu0 0.0
        %3224 = vmatpush1.msra.mxu0 0.0
        %3225 = vmatprep.subr.mxu0 0.0
        %3226 = vmatpush1.msra.mxu0 0.0
        %3227 = vmatprep.subr.mxu0 0.0
        %3228 = vmatpush1.msra.mxu0 0.0
        %3229 = vmatprep.subr.mxu0 0.0
        %3230 = vmatpush1.msra.mxu0 0.0
        %3231 = vmatprep.subr.mxu0 0.0
        %3232 = vmatpush1.msra.mxu0 %v3214
        %3233 = vmatprep.subr.mxu0 0.0
        %3234 = vmatpush1.msra.mxu0 %v3213
        %3235 = vmatprep.subr.mxu0 0.0
        %3236 = vmatpush1.msra.mxu0 %v3212
        %3237 = vmatprep.subr.mxu0 0.0
        %3238 = vmatpush1.msra.mxu0 %v3211
        %3239 = vmatprep.subr.mxu0 0.0
        %3240 = vmatpush1.msra.mxu0 %v3210
        %3241 = vmatprep.subr.mxu0 0.0
        %3242 = vmatpush1.msra.mxu0 %v3209
        %3243 = vmatprep.subr.mxu0 0.0
        %3244 = vmatpush1.msra.mxu0 %v3208
        %3245 = vmatprep.subr.mxu0 0.0
        %3246 = vmatpush1.msra.mxu0 %v3207
        %3247 = vmatprep.subr.mxu0 0.0
        %3248 = vmatpush2.msra.mxu0 0.0
        %3249 = vmatprep.subr.mxu0 0.0
        %3250 = vmatpush2.msra.mxu0 0.0
        %3251 = vmatprep.subr.mxu0 0.0
        %3252 = vmatpush2.msra.mxu0 0.0
        %3253 = vmatprep.subr.mxu0 0.0
        %3254 = vmatpush2.msra.mxu0 0.0
        %3255 = vmatprep.subr.mxu0 0.0
        %3256 = vmatpush2.msra.mxu0 0.0
        %3257 = vmatprep.subr.mxu0 0.0
        %3258 = vmatpush2.msra.mxu0 0.0
        %3259 = vmatprep.subr.mxu0 0.0
        %3260 = vmatpush2.msra.mxu0 0.0
        %3261 = vmatprep.subr.mxu0 0.0
        %3262 = vmatpush2.msra.mxu0 0.0
        %3263 = vmatprep.subr.mxu0 0.0
        %3264 = vmatpush2.msra.mxu0 0.0
        %3265 = vmatprep.subr.mxu0 0.0
        %3266 = vmatpush2.msra.mxu0 0.0
        %3267 = vmatprep.subr.mxu0 0.0
        %3268 = vmatpush2.msra.mxu0 0.0
        %3269 = vmatprep.subr.mxu0 0.0
        %3270 = vmatpush2.msra.mxu0 0.0
        %3271 = vmatprep.subr.mxu0 0.0
        %3272 = vmatpush2.msra.mxu0 0.0
        %3273 = vmatprep.subr.mxu0 0.0
        %3274 = vmatpush2.msra.mxu0 0.0
        %3275 = vmatprep.subr.mxu0 0.0
        %3276 = vmatpush2.msra.mxu0 0.0
        %3277 = vmatprep.subr.mxu0 0.0
        %3278 = vmatpush2.msra.mxu0 0.0
        %3279 = vmatprep.mubr.f32.mxu0 0.0
        %3280 = vmatmul.mubr.f32.gmra.mxu0 %v2419
        %v3281 = vpop.f32.mrf.mxu0
        %v3282 = vadd.f32 0.0, %v3281
        %v3283 = vpop.f32.mrf.mxu0
        %3284 = vdwg.mxu0
        %s3285 = scalar_lea.vmem %s2, 1216
        %v3286 = vld [vmem:[%s3285] sm:$0xff]
        %v3287 = vld [vmem:[%s3285 + $0x8] sm:$0xff]
        %v3288 = vld [vmem:[%s3285 + $0x10] sm:$0xff]
        %v3289 = vld [vmem:[%s3285 + $0x18] sm:$0xff]
        %v3290 = vld [vmem:[%s3285 + $0x20] sm:$0xff]
        %v3291 = vld [vmem:[%s3285 + $0x28] sm:$0xff]
        %v3292 = vld [vmem:[%s3285 + $0x30] sm:$0xff]
        %v3293 = vld [vmem:[%s3285 + $0x38] sm:$0xff]
        %3294 = vmatprep.subr.mxu0 0.0
        %3295 = vmatpush1.msra.mxu0 0.0
        %3296 = vmatprep.subr.mxu0 0.0
        %3297 = vmatpush1.msra.mxu0 0.0
        %3298 = vmatprep.subr.mxu0 0.0
        %3299 = vmatpush1.msra.mxu0 0.0
        %3300 = vmatprep.subr.mxu0 0.0
        %3301 = vmatpush1.msra.mxu0 0.0
        %3302 = vmatprep.subr.mxu0 0.0
        %3303 = vmatpush1.msra.mxu0 0.0
        %3304 = vmatprep.subr.mxu0 0.0
        %3305 = vmatpush1.msra.mxu0 0.0
        %3306 = vmatprep.subr.mxu0 0.0
        %3307 = vmatpush1.msra.mxu0 0.0
        %3308 = vmatprep.subr.mxu0 0.0
        %3309 = vmatpush1.msra.mxu0 0.0
        %3310 = vmatprep.subr.mxu0 0.0
        %3311 = vmatpush1.msra.mxu0 %v3293
        %3312 = vmatprep.subr.mxu0 0.0
        %3313 = vmatpush1.msra.mxu0 %v3292
        %3314 = vmatprep.subr.mxu0 0.0
        %3315 = vmatpush1.msra.mxu0 %v3291
        %3316 = vmatprep.subr.mxu0 0.0
        %3317 = vmatpush1.msra.mxu0 %v3290
        %3318 = vmatprep.subr.mxu0 0.0
        %3319 = vmatpush1.msra.mxu0 %v3289
        %3320 = vmatprep.subr.mxu0 0.0
        %3321 = vmatpush1.msra.mxu0 %v3288
        %3322 = vmatprep.subr.mxu0 0.0
        %3323 = vmatpush1.msra.mxu0 %v3287
        %3324 = vmatprep.subr.mxu0 0.0
        %3325 = vmatpush1.msra.mxu0 %v3286
        %3326 = vmatprep.subr.mxu0 0.0
        %3327 = vmatpush2.msra.mxu0 0.0
        %3328 = vmatprep.subr.mxu0 0.0
        %3329 = vmatpush2.msra.mxu0 0.0
        %3330 = vmatprep.subr.mxu0 0.0
        %3331 = vmatpush2.msra.mxu0 0.0
        %3332 = vmatprep.subr.mxu0 0.0
        %3333 = vmatpush2.msra.mxu0 0.0
        %3334 = vmatprep.subr.mxu0 0.0
        %3335 = vmatpush2.msra.mxu0 0.0
        %3336 = vmatprep.subr.mxu0 0.0
        %3337 = vmatpush2.msra.mxu0 0.0
        %3338 = vmatprep.subr.mxu0 0.0
        %3339 = vmatpush2.msra.mxu0 0.0
        %3340 = vmatprep.subr.mxu0 0.0
        %3341 = vmatpush2.msra.mxu0 0.0
        %3342 = vmatprep.subr.mxu0 0.0
        %3343 = vmatpush2.msra.mxu0 0.0
        %3344 = vmatprep.subr.mxu0 0.0
        %3345 = vmatpush2.msra.mxu0 0.0
        %3346 = vmatprep.subr.mxu0 0.0
        %3347 = vmatpush2.msra.mxu0 0.0
        %3348 = vmatprep.subr.mxu0 0.0
        %3349 = vmatpush2.msra.mxu0 0.0
        %3350 = vmatprep.subr.mxu0 0.0
        %3351 = vmatpush2.msra.mxu0 0.0
        %3352 = vmatprep.subr.mxu0 0.0
        %3353 = vmatpush2.msra.mxu0 0.0
        %3354 = vmatprep.subr.mxu0 0.0
        %3355 = vmatpush2.msra.mxu0 0.0
        %3356 = vmatprep.subr.mxu0 0.0
        %3357 = vmatpush2.msra.mxu0 0.0
        %3358 = vmatprep.mubr.f32.mxu0 0.0
        %3359 = vmatmul.mubr.f32.gmra.mxu0 %v2419
        %v3360 = vpop.f32.mrf.mxu0
        %v3361 = vadd.f32 0.0, %v3360
        %v3362 = vpop.f32.mrf.mxu0
        %3363 = vdwg.mxu0
        %s3364 = scalar_lea.vmem %s2, 1280
        %v3365 = vld [vmem:[%s3364] sm:$0xff]
        %v3366 = vld [vmem:[%s3364 + $0x8] sm:$0xff]
        %v3367 = vld [vmem:[%s3364 + $0x10] sm:$0xff]
        %v3368 = vld [vmem:[%s3364 + $0x18] sm:$0xff]
        %v3369 = vld [vmem:[%s3364 + $0x20] sm:$0xff]
        %v3370 = vld [vmem:[%s3364 + $0x28] sm:$0xff]
        %v3371 = vld [vmem:[%s3364 + $0x30] sm:$0xff]
        %v3372 = vld [vmem:[%s3364 + $0x38] sm:$0xff]
        %3373 = vmatprep.subr.mxu0 0.0
        %3374 = vmatpush1.msra.mxu0 0.0
        %3375 = vmatprep.subr.mxu0 0.0
        %3376 = vmatpush1.msra.mxu0 0.0
        %3377 = vmatprep.subr.mxu0 0.0
        %3378 = vmatpush1.msra.mxu0 0.0
        %3379 = vmatprep.subr.mxu0 0.0
        %3380 = vmatpush1.msra.mxu0 0.0
        %3381 = vmatprep.subr.mxu0 0.0
        %3382 = vmatpush1.msra.mxu0 0.0
        %3383 = vmatprep.subr.mxu0 0.0
        %3384 = vmatpush1.msra.mxu0 0.0
        %3385 = vmatprep.subr.mxu0 0.0
        %3386 = vmatpush1.msra.mxu0 0.0
        %3387 = vmatprep.subr.mxu0 0.0
        %3388 = vmatpush1.msra.mxu0 0.0
        %3389 = vmatprep.subr.mxu0 0.0
        %3390 = vmatpush1.msra.mxu0 %v3372
        %3391 = vmatprep.subr.mxu0 0.0
        %3392 = vmatpush1.msra.mxu0 %v3371
        %3393 = vmatprep.subr.mxu0 0.0
        %3394 = vmatpush1.msra.mxu0 %v3370
        %3395 = vmatprep.subr.mxu0 0.0
        %3396 = vmatpush1.msra.mxu0 %v3369
        %3397 = vmatprep.subr.mxu0 0.0
        %3398 = vmatpush1.msra.mxu0 %v3368
        %3399 = vmatprep.subr.mxu0 0.0
        %3400 = vmatpush1.msra.mxu0 %v3367
        %3401 = vmatprep.subr.mxu0 0.0
        %3402 = vmatpush1.msra.mxu0 %v3366
        %3403 = vmatprep.subr.mxu0 0.0
        %3404 = vmatpush1.msra.mxu0 %v3365
        %3405 = vmatprep.subr.mxu0 0.0
        %3406 = vmatpush2.msra.mxu0 0.0
        %3407 = vmatprep.subr.mxu0 0.0
        %3408 = vmatpush2.msra.mxu0 0.0
        %3409 = vmatprep.subr.mxu0 0.0
        %3410 = vmatpush2.msra.mxu0 0.0
        %3411 = vmatprep.subr.mxu0 0.0
        %3412 = vmatpush2.msra.mxu0 0.0
        %3413 = vmatprep.subr.mxu0 0.0
        %3414 = vmatpush2.msra.mxu0 0.0
        %3415 = vmatprep.subr.mxu0 0.0
        %3416 = vmatpush2.msra.mxu0 0.0
        %3417 = vmatprep.subr.mxu0 0.0
        %3418 = vmatpush2.msra.mxu0 0.0
        %3419 = vmatprep.subr.mxu0 0.0
        %3420 = vmatpush2.msra.mxu0 0.0
        %3421 = vmatprep.subr.mxu0 0.0
        %3422 = vmatpush2.msra.mxu0 0.0
        %3423 = vmatprep.subr.mxu0 0.0
        %3424 = vmatpush2.msra.mxu0 0.0
        %3425 = vmatprep.subr.mxu0 0.0
        %3426 = vmatpush2.msra.mxu0 0.0
        %3427 = vmatprep.subr.mxu0 0.0
        %3428 = vmatpush2.msra.mxu0 0.0
        %3429 = vmatprep.subr.mxu0 0.0
        %3430 = vmatpush2.msra.mxu0 0.0
        %3431 = vmatprep.subr.mxu0 0.0
        %3432 = vmatpush2.msra.mxu0 0.0
        %3433 = vmatprep.subr.mxu0 0.0
        %3434 = vmatpush2.msra.mxu0 0.0
        %3435 = vmatprep.subr.mxu0 0.0
        %3436 = vmatpush2.msra.mxu0 0.0
        %3437 = vmatprep.mubr.f32.mxu0 0.0
        %3438 = vmatmul.mubr.f32.gmra.mxu0 %v2419
        %v3439 = vpop.f32.mrf.mxu0
        %v3440 = vadd.f32 0.0, %v3439
        %v3441 = vpop.f32.mrf.mxu0
        %3442 = vdwg.mxu0
        %v3444 = vsel %vm695, %v3282, 0
        %v3447 = vsel %vm695, %v3361, 0
        %3449 = vmatprep.subr.mxu0 0.0
        %3450 = vmatpush1.xpose.msra.mxu0 0.0
        %3451 = vmatprep.subr.mxu0 0.0
        %3452 = vmatpush1.xpose.msra.mxu0 0.0
        %3453 = vmatprep.subr.mxu0 0.0
        %3454 = vmatpush1.xpose.msra.mxu0 0.0
        %3455 = vmatprep.subr.mxu0 0.0
        %3456 = vmatpush1.xpose.msra.mxu0 0.0
        %3457 = vmatprep.subr.mxu0 0.0
        %3458 = vmatpush1.xpose.msra.mxu0 0.0
        %3459 = vmatprep.subr.mxu0 0.0
        %3460 = vmatpush1.xpose.msra.mxu0 0.0
        %3461 = vmatprep.subr.mxu0 0.0
        %3462 = vmatpush1.xpose.msra.mxu0 0.0
        %3463 = vmatprep.subr.mxu0 0.0
        %3464 = vmatpush1.xpose.msra.mxu0 0.0
        %3465 = vmatprep.subr.mxu0 0.0
        %3466 = vmatpush1.xpose.msra.mxu0 0.0
        %3467 = vmatprep.subr.mxu0 0.0
        %3468 = vmatpush1.xpose.msra.mxu0 0.0
        %3469 = vmatprep.subr.mxu0 0.0
        %3470 = vmatpush1.xpose.msra.mxu0 0.0
        %3471 = vmatprep.subr.mxu0 0.0
        %3472 = vmatpush1.xpose.msra.mxu0 0.0
        %3473 = vmatprep.subr.mxu0 0.0
        %3474 = vmatpush1.xpose.msra.mxu0 0.0
        %3475 = vmatprep.subr.mxu0 0.0
        %3476 = vmatpush1.xpose.msra.mxu0 0.0
        %3477 = vmatprep.subr.mxu0 0.0
        %3478 = vmatpush1.xpose.msra.mxu0 0.0
        %3479 = vmatprep.subr.mxu0 0.0
        %3480 = vmatpush1.xpose.msra.mxu0 %v3447
        %3481 = vmatprep.subr.mxu0 0.0
        %3482 = vmatpush2.xpose.msra.mxu0 0.0
        %3483 = vmatprep.subr.mxu0 0.0
        %3484 = vmatpush2.xpose.msra.mxu0 0.0
        %3485 = vmatprep.subr.mxu0 0.0
        %3486 = vmatpush2.xpose.msra.mxu0 0.0
        %3487 = vmatprep.subr.mxu0 0.0
        %3488 = vmatpush2.xpose.msra.mxu0 0.0
        %3489 = vmatprep.subr.mxu0 0.0
        %3490 = vmatpush2.xpose.msra.mxu0 0.0
        %3491 = vmatprep.subr.mxu0 0.0
        %3492 = vmatpush2.xpose.msra.mxu0 0.0
        %3493 = vmatprep.subr.mxu0 0.0
        %3494 = vmatpush2.xpose.msra.mxu0 0.0
        %3495 = vmatprep.subr.mxu0 0.0
        %3496 = vmatpush2.xpose.msra.mxu0 0.0
        %3497 = vmatprep.subr.mxu0 0.0
        %3498 = vmatpush2.xpose.msra.mxu0 0.0
        %3499 = vmatprep.subr.mxu0 0.0
        %3500 = vmatpush2.xpose.msra.mxu0 0.0
        %3501 = vmatprep.subr.mxu0 0.0
        %3502 = vmatpush2.xpose.msra.mxu0 0.0
        %3503 = vmatprep.subr.mxu0 0.0
        %3504 = vmatpush2.xpose.msra.mxu0 0.0
        %3505 = vmatprep.subr.mxu0 0.0
        %3506 = vmatpush2.xpose.msra.mxu0 0.0
        %3507 = vmatprep.subr.mxu0 0.0
        %3508 = vmatpush2.xpose.msra.mxu0 0.0
        %3509 = vmatprep.subr.mxu0 0.0
        %3510 = vmatpush2.xpose.msra.mxu0 0.0
        %3511 = vmatprep.subr.mxu0 0.0
        %3512 = vmatpush2.xpose.msra.mxu0 0.0
        %3513 = vmatprep.mubr.f32.mxu0 0.0
        %3514 = vmatmul.mubr.f32.gmra.mxu0 %v3444
        %v3515 = vpop.f32.mrf.mxu0
        %v3516 = vadd.f32 %v429, %v3515
        %v3517 = vpop.f32.mrf.mxu0
        %3518 = vdwg.mxu0
        %v3519 = vsel %vm772, %v3516, -inf
        %3520 = vmax.xlane.f32.xlu0 %v3519
        %v3521 = vpop.xlane.xlu0 %3520
        %v3522 = vsub.f32 %v3516, %v3521
        %v3523 = vmul.f32 %v3522, 1.442695
        %v3524 = vpow.pop %v3523
        %v3525 = vsel %vm772, %v3524, 0.0
        %3526 = vadd.xlane.f32.xlu0 %v3525
        %v3527 = vpop.xlane.xlu0 %3526
        %v3528 = vrcp.pop %v3527
        %v3529 = vmul.f32 %v3524, %v3528
        %v3531 = vsel %vm772, %v3529, 0
        %3533 = vmatprep.subr.mxu0 0.0
        %3534 = vmatpush1.msra.mxu0 0.0
        %3535 = vmatprep.subr.mxu0 0.0
        %3536 = vmatpush1.msra.mxu0 0.0
        %3537 = vmatprep.subr.mxu0 0.0
        %3538 = vmatpush1.msra.mxu0 0.0
        %3539 = vmatprep.subr.mxu0 0.0
        %3540 = vmatpush1.msra.mxu0 0.0
        %3541 = vmatprep.subr.mxu0 0.0
        %3542 = vmatpush1.msra.mxu0 0.0
        %3543 = vmatprep.subr.mxu0 0.0
        %3544 = vmatpush1.msra.mxu0 0.0
        %3545 = vmatprep.subr.mxu0 0.0
        %3546 = vmatpush1.msra.mxu0 0.0
        %3547 = vmatprep.subr.mxu0 0.0
        %3548 = vmatpush1.msra.mxu0 0.0
        %3549 = vmatprep.subr.mxu0 0.0
        %3550 = vmatpush1.msra.mxu0 0.0
        %3551 = vmatprep.subr.mxu0 0.0
        %3552 = vmatpush1.msra.mxu0 0.0
        %3553 = vmatprep.subr.mxu0 0.0
        %3554 = vmatpush1.msra.mxu0 0.0
        %3555 = vmatprep.subr.mxu0 0.0
        %3556 = vmatpush1.msra.mxu0 0.0
        %3557 = vmatprep.subr.mxu0 0.0
        %3558 = vmatpush1.msra.mxu0 0.0
        %3559 = vmatprep.subr.mxu0 0.0
        %3560 = vmatpush1.msra.mxu0 0.0
        %3561 = vmatprep.subr.mxu0 0.0
        %3562 = vmatpush1.msra.mxu0 0.0
        %3563 = vmatprep.subr.mxu0 0.0
        %3564 = vmatpush1.msra.mxu0 %v3440
        %3565 = vmatprep.subr.mxu0 0.0
        %3566 = vmatpush2.msra.mxu0 0.0
        %3567 = vmatprep.subr.mxu0 0.0
        %3568 = vmatpush2.msra.mxu0 0.0
        %3569 = vmatprep.subr.mxu0 0.0
        %3570 = vmatpush2.msra.mxu0 0.0
        %3571 = vmatprep.subr.mxu0 0.0
        %3572 = vmatpush2.msra.mxu0 0.0
        %3573 = vmatprep.subr.mxu0 0.0
        %3574 = vmatpush2.msra.mxu0 0.0
        %3575 = vmatprep.subr.mxu0 0.0
        %3576 = vmatpush2.msra.mxu0 0.0
        %3577 = vmatprep.subr.mxu0 0.0
        %3578 = vmatpush2.msra.mxu0 0.0
        %3579 = vmatprep.subr.mxu0 0.0
        %3580 = vmatpush2.msra.mxu0 0.0
        %3581 = vmatprep.subr.mxu0 0.0
        %3582 = vmatpush2.msra.mxu0 0.0
        %3583 = vmatprep.subr.mxu0 0.0
        %3584 = vmatpush2.msra.mxu0 0.0
        %3585 = vmatprep.subr.mxu0 0.0
        %3586 = vmatpush2.msra.mxu0 0.0
        %3587 = vmatprep.subr.mxu0 0.0
        %3588 = vmatpush2.msra.mxu0 0.0
        %3589 = vmatprep.subr.mxu0 0.0
        %3590 = vmatpush2.msra.mxu0 0.0
        %3591 = vmatprep.subr.mxu0 0.0
        %3592 = vmatpush2.msra.mxu0 0.0
        %3593 = vmatprep.subr.mxu0 0.0
        %3594 = vmatpush2.msra.mxu0 0.0
        %3595 = vmatprep.subr.mxu0 0.0
        %3596 = vmatpush2.msra.mxu0 0.0
        %3597 = vmatprep.mubr.f32.mxu0 0.0
        %3598 = vmatmul.mubr.f32.gmra.mxu0 %v3531
        %v3599 = vpop.f32.mrf.mxu0
        %v3600 = vadd.f32 0.0, %v3599
        %v3601 = vpop.f32.mrf.mxu0
        %3602 = vdwg.mxu0
        %s3603 = scalar_lea.vmem %s2, 1344
        %v3604 = vld [vmem:[%s3603] sm:$0xff]
        %v3605 = vld [vmem:[%s3603 + $0x8] sm:$0xff]
        %v3606 = vld [vmem:[%s3603 + $0x10] sm:$0xff]
        %v3607 = vld [vmem:[%s3603 + $0x18] sm:$0xff]
        %v3608 = vld [vmem:[%s3603 + $0x20] sm:$0xff]
        %v3609 = vld [vmem:[%s3603 + $0x28] sm:$0xff]
        %v3610 = vld [vmem:[%s3603 + $0x30] sm:$0xff]
        %v3611 = vld [vmem:[%s3603 + $0x38] sm:$0xff]
        %3612 = vmatprep.subr.mxu0 0.0
        %3613 = vmatpush1.msra.mxu0 0.0
        %3614 = vmatprep.subr.mxu0 0.0
        %3615 = vmatpush1.msra.mxu0 0.0
        %3616 = vmatprep.subr.mxu0 0.0
        %3617 = vmatpush1.msra.mxu0 0.0
        %3618 = vmatprep.subr.mxu0 0.0
        %3619 = vmatpush1.msra.mxu0 0.0
        %3620 = vmatprep.subr.mxu0 0.0
        %3621 = vmatpush1.msra.mxu0 0.0
        %3622 = vmatprep.subr.mxu0 0.0
        %3623 = vmatpush1.msra.mxu0 0.0
        %3624 = vmatprep.subr.mxu0 0.0
        %3625 = vmatpush1.msra.mxu0 0.0
        %3626 = vmatprep.subr.mxu0 0.0
        %3627 = vmatpush1.msra.mxu0 0.0
        %3628 = vmatprep.subr.mxu0 0.0
        %3629 = vmatpush1.msra.mxu0 %v3611
        %3630 = vmatprep.subr.mxu0 0.0
        %3631 = vmatpush1.msra.mxu0 %v3610
        %3632 = vmatprep.subr.mxu0 0.0
        %3633 = vmatpush1.msra.mxu0 %v3609
        %3634 = vmatprep.subr.mxu0 0.0
        %3635 = vmatpush1.msra.mxu0 %v3608
        %3636 = vmatprep.subr.mxu0 0.0
        %3637 = vmatpush1.msra.mxu0 %v3607
        %3638 = vmatprep.subr.mxu0 0.0
        %3639 = vmatpush1.msra.mxu0 %v3606
        %3640 = vmatprep.subr.mxu0 0.0
        %3641 = vmatpush1.msra.mxu0 %v3605
        %3642 = vmatprep.subr.mxu0 0.0
        %3643 = vmatpush1.msra.mxu0 %v3604
        %3644 = vmatprep.subr.mxu0 0.0
        %3645 = vmatpush2.msra.mxu0 0.0
        %3646 = vmatprep.subr.mxu0 0.0
        %3647 = vmatpush2.msra.mxu0 0.0
        %3648 = vmatprep.subr.mxu0 0.0
        %3649 = vmatpush2.msra.mxu0 0.0
        %3650 = vmatprep.subr.mxu0 0.0
        %3651 = vmatpush2.msra.mxu0 0.0
        %3652 = vmatprep.subr.mxu0 0.0
        %3653 = vmatpush2.msra.mxu0 0.0
        %3654 = vmatprep.subr.mxu0 0.0
        %3655 = vmatpush2.msra.mxu0 0.0
        %3656 = vmatprep.subr.mxu0 0.0
        %3657 = vmatpush2.msra.mxu0 0.0
        %3658 = vmatprep.subr.mxu0 0.0
        %3659 = vmatpush2.msra.mxu0 0.0
        %3660 = vmatprep.subr.mxu0 0.0
        %3661 = vmatpush2.msra.mxu0 0.0
        %3662 = vmatprep.subr.mxu0 0.0
        %3663 = vmatpush2.msra.mxu0 0.0
        %3664 = vmatprep.subr.mxu0 0.0
        %3665 = vmatpush2.msra.mxu0 0.0
        %3666 = vmatprep.subr.mxu0 0.0
        %3667 = vmatpush2.msra.mxu0 0.0
        %3668 = vmatprep.subr.mxu0 0.0
        %3669 = vmatpush2.msra.mxu0 0.0
        %3670 = vmatprep.subr.mxu0 0.0
        %3671 = vmatpush2.msra.mxu0 0.0
        %3672 = vmatprep.subr.mxu0 0.0
        %3673 = vmatpush2.msra.mxu0 0.0
        %3674 = vmatprep.subr.mxu0 0.0
        %3675 = vmatpush2.msra.mxu0 0.0
        %3676 = vmatprep.mubr.f32.mxu0 0.0
        %3677 = vmatmul.mubr.f32.gmra.mxu0 %v2419
        %v3678 = vpop.f32.mrf.mxu0
        %v3679 = vadd.f32 0.0, %v3678
        %v3680 = vpop.f32.mrf.mxu0
        %3681 = vdwg.mxu0
        %s3682 = scalar_lea.vmem %s2, 1408
        %v3683 = vld [vmem:[%s3682] sm:$0xff]
        %v3684 = vld [vmem:[%s3682 + $0x8] sm:$0xff]
        %v3685 = vld [vmem:[%s3682 + $0x10] sm:$0xff]
        %v3686 = vld [vmem:[%s3682 + $0x18] sm:$0xff]
        %v3687 = vld [vmem:[%s3682 + $0x20] sm:$0xff]
        %v3688 = vld [vmem:[%s3682 + $0x28] sm:$0xff]
        %v3689 = vld [vmem:[%s3682 + $0x30] sm:$0xff]
        %v3690 = vld [vmem:[%s3682 + $0x38] sm:$0xff]
        %3691 = vmatprep.subr.mxu0 0.0
        %3692 = vmatpush1.msra.mxu0 0.0
        %3693 = vmatprep.subr.mxu0 0.0
        %3694 = vmatpush1.msra.mxu0 0.0
        %3695 = vmatprep.subr.mxu0 0.0
        %3696 = vmatpush1.msra.mxu0 0.0
        %3697 = vmatprep.subr.mxu0 0.0
        %3698 = vmatpush1.msra.mxu0 0.0
        %3699 = vmatprep.subr.mxu0 0.0
        %3700 = vmatpush1.msra.mxu0 0.0
        %3701 = vmatprep.subr.mxu0 0.0
        %3702 = vmatpush1.msra.mxu0 0.0
        %3703 = vmatprep.subr.mxu0 0.0
        %3704 = vmatpush1.msra.mxu0 0.0
        %3705 = vmatprep.subr.mxu0 0.0
        %3706 = vmatpush1.msra.mxu0 0.0
        %3707 = vmatprep.subr.mxu0 0.0
        %3708 = vmatpush1.msra.mxu0 %v3690
        %3709 = vmatprep.subr.mxu0 0.0
        %3710 = vmatpush1.msra.mxu0 %v3689
        %3711 = vmatprep.subr.mxu0 0.0
        %3712 = vmatpush1.msra.mxu0 %v3688
        %3713 = vmatprep.subr.mxu0 0.0
        %3714 = vmatpush1.msra.mxu0 %v3687
        %3715 = vmatprep.subr.mxu0 0.0
        %3716 = vmatpush1.msra.mxu0 %v3686
        %3717 = vmatprep.subr.mxu0 0.0
        %3718 = vmatpush1.msra.mxu0 %v3685
        %3719 = vmatprep.subr.mxu0 0.0
        %3720 = vmatpush1.msra.mxu0 %v3684
        %3721 = vmatprep.subr.mxu0 0.0
        %3722 = vmatpush1.msra.mxu0 %v3683
        %3723 = vmatprep.subr.mxu0 0.0
        %3724 = vmatpush2.msra.mxu0 0.0
        %3725 = vmatprep.subr.mxu0 0.0
        %3726 = vmatpush2.msra.mxu0 0.0
        %3727 = vmatprep.subr.mxu0 0.0
        %3728 = vmatpush2.msra.mxu0 0.0
        %3729 = vmatprep.subr.mxu0 0.0
        %3730 = vmatpush2.msra.mxu0 0.0
        %3731 = vmatprep.subr.mxu0 0.0
        %3732 = vmatpush2.msra.mxu0 0.0
        %3733 = vmatprep.subr.mxu0 0.0
        %3734 = vmatpush2.msra.mxu0 0.0
        %3735 = vmatprep.subr.mxu0 0.0
        %3736 = vmatpush2.msra.mxu0 0.0
        %3737 = vmatprep.subr.mxu0 0.0
        %3738 = vmatpush2.msra.mxu0 0.0
        %3739 = vmatprep.subr.mxu0 0.0
        %3740 = vmatpush2.msra.mxu0 0.0
        %3741 = vmatprep.subr.mxu0 0.0
        %3742 = vmatpush2.msra.mxu0 0.0
        %3743 = vmatprep.subr.mxu0 0.0
        %3744 = vmatpush2.msra.mxu0 0.0
        %3745 = vmatprep.subr.mxu0 0.0
        %3746 = vmatpush2.msra.mxu0 0.0
        %3747 = vmatprep.subr.mxu0 0.0
        %3748 = vmatpush2.msra.mxu0 0.0
        %3749 = vmatprep.subr.mxu0 0.0
        %3750 = vmatpush2.msra.mxu0 0.0
        %3751 = vmatprep.subr.mxu0 0.0
        %3752 = vmatpush2.msra.mxu0 0.0
        %3753 = vmatprep.subr.mxu0 0.0
        %3754 = vmatpush2.msra.mxu0 0.0
        %3755 = vmatprep.mubr.f32.mxu0 0.0
        %3756 = vmatmul.mubr.f32.gmra.mxu0 %v2419
        %v3757 = vpop.f32.mrf.mxu0
        %v3758 = vadd.f32 0.0, %v3757
        %v3759 = vpop.f32.mrf.mxu0
        %3760 = vdwg.mxu0
        %s3761 = scalar_lea.vmem %s2, 1472
        %v3762 = vld [vmem:[%s3761] sm:$0xff]
        %v3763 = vld [vmem:[%s3761 + $0x8] sm:$0xff]
        %v3764 = vld [vmem:[%s3761 + $0x10] sm:$0xff]
        %v3765 = vld [vmem:[%s3761 + $0x18] sm:$0xff]
        %v3766 = vld [vmem:[%s3761 + $0x20] sm:$0xff]
        %v3767 = vld [vmem:[%s3761 + $0x28] sm:$0xff]
        %v3768 = vld [vmem:[%s3761 + $0x30] sm:$0xff]
        %v3769 = vld [vmem:[%s3761 + $0x38] sm:$0xff]
        %3770 = vmatprep.subr.mxu0 0.0
        %3771 = vmatpush1.msra.mxu0 0.0
        %3772 = vmatprep.subr.mxu0 0.0
        %3773 = vmatpush1.msra.mxu0 0.0
        %3774 = vmatprep.subr.mxu0 0.0
        %3775 = vmatpush1.msra.mxu0 0.0
        %3776 = vmatprep.subr.mxu0 0.0
        %3777 = vmatpush1.msra.mxu0 0.0
        %3778 = vmatprep.subr.mxu0 0.0
        %3779 = vmatpush1.msra.mxu0 0.0
        %3780 = vmatprep.subr.mxu0 0.0
        %3781 = vmatpush1.msra.mxu0 0.0
        %3782 = vmatprep.subr.mxu0 0.0
        %3783 = vmatpush1.msra.mxu0 0.0
        %3784 = vmatprep.subr.mxu0 0.0
        %3785 = vmatpush1.msra.mxu0 0.0
        %3786 = vmatprep.subr.mxu0 0.0
        %3787 = vmatpush1.msra.mxu0 %v3769
        %3788 = vmatprep.subr.mxu0 0.0
        %3789 = vmatpush1.msra.mxu0 %v3768
        %3790 = vmatprep.subr.mxu0 0.0
        %3791 = vmatpush1.msra.mxu0 %v3767
        %3792 = vmatprep.subr.mxu0 0.0
        %3793 = vmatpush1.msra.mxu0 %v3766
        %3794 = vmatprep.subr.mxu0 0.0
        %3795 = vmatpush1.msra.mxu0 %v3765
        %3796 = vmatprep.subr.mxu0 0.0
        %3797 = vmatpush1.msra.mxu0 %v3764
        %3798 = vmatprep.subr.mxu0 0.0
        %3799 = vmatpush1.msra.mxu0 %v3763
        %3800 = vmatprep.subr.mxu0 0.0
        %3801 = vmatpush1.msra.mxu0 %v3762
        %3802 = vmatprep.subr.mxu0 0.0
        %3803 = vmatpush2.msra.mxu0 0.0
        %3804 = vmatprep.subr.mxu0 0.0
        %3805 = vmatpush2.msra.mxu0 0.0
        %3806 = vmatprep.subr.mxu0 0.0
        %3807 = vmatpush2.msra.mxu0 0.0
        %3808 = vmatprep.subr.mxu0 0.0
        %3809 = vmatpush2.msra.mxu0 0.0
        %3810 = vmatprep.subr.mxu0 0.0
        %3811 = vmatpush2.msra.mxu0 0.0
        %3812 = vmatprep.subr.mxu0 0.0
        %3813 = vmatpush2.msra.mxu0 0.0
        %3814 = vmatprep.subr.mxu0 0.0
        %3815 = vmatpush2.msra.mxu0 0.0
        %3816 = vmatprep.subr.mxu0 0.0
        %3817 = vmatpush2.msra.mxu0 0.0
        %3818 = vmatprep.subr.mxu0 0.0
        %3819 = vmatpush2.msra.mxu0 0.0
        %3820 = vmatprep.subr.mxu0 0.0
        %3821 = vmatpush2.msra.mxu0 0.0
        %3822 = vmatprep.subr.mxu0 0.0
        %3823 = vmatpush2.msra.mxu0 0.0
        %3824 = vmatprep.subr.mxu0 0.0
        %3825 = vmatpush2.msra.mxu0 0.0
        %3826 = vmatprep.subr.mxu0 0.0
        %3827 = vmatpush2.msra.mxu0 0.0
        %3828 = vmatprep.subr.mxu0 0.0
        %3829 = vmatpush2.msra.mxu0 0.0
        %3830 = vmatprep.subr.mxu0 0.0
        %3831 = vmatpush2.msra.mxu0 0.0
        %3832 = vmatprep.subr.mxu0 0.0
        %3833 = vmatpush2.msra.mxu0 0.0
        %3834 = vmatprep.mubr.f32.mxu0 0.0
        %3835 = vmatmul.mubr.f32.gmra.mxu0 %v2419
        %v3836 = vpop.f32.mrf.mxu0
        %v3837 = vadd.f32 0.0, %v3836
        %v3838 = vpop.f32.mrf.mxu0
        %3839 = vdwg.mxu0
        %v3841 = vsel %vm695, %v3679, 0
        %v3844 = vsel %vm695, %v3758, 0
        %3846 = vmatprep.subr.mxu0 0.0
        %3847 = vmatpush1.xpose.msra.mxu0 0.0
        %3848 = vmatprep.subr.mxu0 0.0
        %3849 = vmatpush1.xpose.msra.mxu0 0.0
        %3850 = vmatprep.subr.mxu0 0.0
        %3851 = vmatpush1.xpose.msra.mxu0 0.0
        %3852 = vmatprep.subr.mxu0 0.0
        %3853 = vmatpush1.xpose.msra.mxu0 0.0
        %3854 = vmatprep.subr.mxu0 0.0
        %3855 = vmatpush1.xpose.msra.mxu0 0.0
        %3856 = vmatprep.subr.mxu0 0.0
        %3857 = vmatpush1.xpose.msra.mxu0 0.0
        %3858 = vmatprep.subr.mxu0 0.0
        %3859 = vmatpush1.xpose.msra.mxu0 0.0
        %3860 = vmatprep.subr.mxu0 0.0
        %3861 = vmatpush1.xpose.msra.mxu0 0.0
        %3862 = vmatprep.subr.mxu0 0.0
        %3863 = vmatpush1.xpose.msra.mxu0 0.0
        %3864 = vmatprep.subr.mxu0 0.0
        %3865 = vmatpush1.xpose.msra.mxu0 0.0
        %3866 = vmatprep.subr.mxu0 0.0
        %3867 = vmatpush1.xpose.msra.mxu0 0.0
        %3868 = vmatprep.subr.mxu0 0.0
        %3869 = vmatpush1.xpose.msra.mxu0 0.0
        %3870 = vmatprep.subr.mxu0 0.0
        %3871 = vmatpush1.xpose.msra.mxu0 0.0
        %3872 = vmatprep.subr.mxu0 0.0
        %3873 = vmatpush1.xpose.msra.mxu0 0.0
        %3874 = vmatprep.subr.mxu0 0.0
        %3875 = vmatpush1.xpose.msra.mxu0 0.0
        %3876 = vmatprep.subr.mxu0 0.0
        %3877 = vmatpush1.xpose.msra.mxu0 %v3844
        %3878 = vmatprep.subr.mxu0 0.0
        %3879 = vmatpush2.xpose.msra.mxu0 0.0
        %3880 = vmatprep.subr.mxu0 0.0
        %3881 = vmatpush2.xpose.msra.mxu0 0.0
        %3882 = vmatprep.subr.mxu0 0.0
        %3883 = vmatpush2.xpose.msra.mxu0 0.0
        %3884 = vmatprep.subr.mxu0 0.0
        %3885 = vmatpush2.xpose.msra.mxu0 0.0
        %3886 = vmatprep.subr.mxu0 0.0
        %3887 = vmatpush2.xpose.msra.mxu0 0.0
        %3888 = vmatprep.subr.mxu0 0.0
        %3889 = vmatpush2.xpose.msra.mxu0 0.0
        %3890 = vmatprep.subr.mxu0 0.0
        %3891 = vmatpush2.xpose.msra.mxu0 0.0
        %3892 = vmatprep.subr.mxu0 0.0
        %3893 = vmatpush2.xpose.msra.mxu0 0.0
        %3894 = vmatprep.subr.mxu0 0.0
        %3895 = vmatpush2.xpose.msra.mxu0 0.0
        %3896 = vmatprep.subr.mxu0 0.0
        %3897 = vmatpush2.xpose.msra.mxu0 0.0
        %3898 = vmatprep.subr.mxu0 0.0
        %3899 = vmatpush2.xpose.msra.mxu0 0.0
        %3900 = vmatprep.subr.mxu0 0.0
        %3901 = vmatpush2.xpose.msra.mxu0 0.0
        %3902 = vmatprep.subr.mxu0 0.0
        %3903 = vmatpush2.xpose.msra.mxu0 0.0
        %3904 = vmatprep.subr.mxu0 0.0
        %3905 = vmatpush2.xpose.msra.mxu0 0.0
        %3906 = vmatprep.subr.mxu0 0.0
        %3907 = vmatpush2.xpose.msra.mxu0 0.0
        %3908 = vmatprep.subr.mxu0 0.0
        %3909 = vmatpush2.xpose.msra.mxu0 0.0
        %3910 = vmatprep.mubr.f32.mxu0 0.0
        %3911 = vmatmul.mubr.f32.gmra.mxu0 %v3841
        %v3912 = vpop.f32.mrf.mxu0
        %v3913 = vadd.f32 %v429, %v3912
        %v3914 = vpop.f32.mrf.mxu0
        %3915 = vdwg.mxu0
        %v3916 = vsel %vm772, %v3913, -inf
        %3917 = vmax.xlane.f32.xlu0 %v3916
        %v3918 = vpop.xlane.xlu0 %3917
        %v3919 = vsub.f32 %v3913, %v3918
        %v3920 = vmul.f32 %v3919, 1.442695
        %v3921 = vpow.pop %v3920
        %v3922 = vsel %vm772, %v3921, 0.0
        %3923 = vadd.xlane.f32.xlu0 %v3922
        %v3924 = vpop.xlane.xlu0 %3923
        %v3925 = vrcp.pop %v3924
        %v3926 = vmul.f32 %v3921, %v3925
        %v3928 = vsel %vm772, %v3926, 0
        %3930 = vmatprep.subr.mxu0 0.0
        %3931 = vmatpush1.msra.mxu0 0.0
        %3932 = vmatprep.subr.mxu0 0.0
        %3933 = vmatpush1.msra.mxu0 0.0
        %3934 = vmatprep.subr.mxu0 0.0
        %3935 = vmatpush1.msra.mxu0 0.0
        %3936 = vmatprep.subr.mxu0 0.0
        %3937 = vmatpush1.msra.mxu0 0.0
        %3938 = vmatprep.subr.mxu0 0.0
        %3939 = vmatpush1.msra.mxu0 0.0
        %3940 = vmatprep.subr.mxu0 0.0
        %3941 = vmatpush1.msra.mxu0 0.0
        %3942 = vmatprep.subr.mxu0 0.0
        %3943 = vmatpush1.msra.mxu0 0.0
        %3944 = vmatprep.subr.mxu0 0.0
        %3945 = vmatpush1.msra.mxu0 0.0
        %3946 = vmatprep.subr.mxu0 0.0
        %3947 = vmatpush1.msra.mxu0 0.0
        %3948 = vmatprep.subr.mxu0 0.0
        %3949 = vmatpush1.msra.mxu0 0.0
        %3950 = vmatprep.subr.mxu0 0.0
        %3951 = vmatpush1.msra.mxu0 0.0
        %3952 = vmatprep.subr.mxu0 0.0
        %3953 = vmatpush1.msra.mxu0 0.0
        %3954 = vmatprep.subr.mxu0 0.0
        %3955 = vmatpush1.msra.mxu0 0.0
        %3956 = vmatprep.subr.mxu0 0.0
        %3957 = vmatpush1.msra.mxu0 0.0
        %3958 = vmatprep.subr.mxu0 0.0
        %3959 = vmatpush1.msra.mxu0 0.0
        %3960 = vmatprep.subr.mxu0 0.0
        %3961 = vmatpush1.msra.mxu0 %v3837
        %3962 = vmatprep.subr.mxu0 0.0
        %3963 = vmatpush2.msra.mxu0 0.0
        %3964 = vmatprep.subr.mxu0 0.0
        %3965 = vmatpush2.msra.mxu0 0.0
        %3966 = vmatprep.subr.mxu0 0.0
        %3967 = vmatpush2.msra.mxu0 0.0
        %3968 = vmatprep.subr.mxu0 0.0
        %3969 = vmatpush2.msra.mxu0 0.0
        %3970 = vmatprep.subr.mxu0 0.0
        %3971 = vmatpush2.msra.mxu0 0.0
        %3972 = vmatprep.subr.mxu0 0.0
        %3973 = vmatpush2.msra.mxu0 0.0
        %3974 = vmatprep.subr.mxu0 0.0
        %3975 = vmatpush2.msra.mxu0 0.0
        %3976 = vmatprep.subr.mxu0 0.0
        %3977 = vmatpush2.msra.mxu0 0.0
        %3978 = vmatprep.subr.mxu0 0.0
        %3979 = vmatpush2.msra.mxu0 0.0
        %3980 = vmatprep.subr.mxu0 0.0
        %3981 = vmatpush2.msra.mxu0 0.0
        %3982 = vmatprep.subr.mxu0 0.0
        %3983 = vmatpush2.msra.mxu0 0.0
        %3984 = vmatprep.subr.mxu0 0.0
        %3985 = vmatpush2.msra.mxu0 0.0
        %3986 = vmatprep.subr.mxu0 0.0
        %3987 = vmatpush2.msra.mxu0 0.0
        %3988 = vmatprep.subr.mxu0 0.0
        %3989 = vmatpush2.msra.mxu0 0.0
        %3990 = vmatprep.subr.mxu0 0.0
        %3991 = vmatpush2.msra.mxu0 0.0
        %3992 = vmatprep.subr.mxu0 0.0
        %3993 = vmatpush2.msra.mxu0 0.0
        %3994 = vmatprep.mubr.f32.mxu0 0.0
        %3995 = vmatmul.mubr.f32.gmra.mxu0 %v3928
        %v3996 = vpop.f32.mrf.mxu0
        %v3997 = vadd.f32 0.0, %v3996
        %v3998 = vpop.f32.mrf.mxu0
        %3999 = vdwg.mxu0
        %4001 = vrot.lane.b32.xlu0 %v3203, 16
        %v4002 = vpop.permute.xlu0 %4001
        %4005 = vrot.lane.b32.xlu0 %v3600, 32
        %v4006 = vpop.permute.xlu0 %4005
        %4009 = vrot.lane.b32.xlu0 %v3997, 48
        %v4010 = vpop.permute.xlu0 %4009
        %v4012 = vsel %vm695, %v2806, %v4002
        %v4013 = vsel %vm2061, %v4012, %v4006
        %v4014 = vsel %vm2063, %v4013, %v4010
        %v4015 = vld [vmem:[%s1 + $0x100] sm:$0xff]
        %v4016 = vld [vmem:[%s1 + $0x108] sm:$0xff]
        %v4017 = vld [vmem:[%s1 + $0x110] sm:$0xff]
        %v4018 = vld [vmem:[%s1 + $0x118] sm:$0xff]
        %v4019 = vld [vmem:[%s1 + $0x120] sm:$0xff]
        %v4020 = vld [vmem:[%s1 + $0x128] sm:$0xff]
        %v4021 = vld [vmem:[%s1 + $0x130] sm:$0xff]
        %v4022 = vld [vmem:[%s1 + $0x138] sm:$0xff]
        %v4024 = vsel %vm254, %v4014, 0
        %4026 = vmatprep.subr.mxu0 0.0
        %4027 = vmatpush1.msra.mxu0 0.0
        %4028 = vmatprep.subr.mxu0 0.0
        %4029 = vmatpush1.msra.mxu0 0.0
        %4030 = vmatprep.subr.mxu0 0.0
        %4031 = vmatpush1.msra.mxu0 0.0
        %4032 = vmatprep.subr.mxu0 0.0
        %4033 = vmatpush1.msra.mxu0 0.0
        %4034 = vmatprep.subr.mxu0 0.0
        %4035 = vmatpush1.msra.mxu0 0.0
        %4036 = vmatprep.subr.mxu0 0.0
        %4037 = vmatpush1.msra.mxu0 0.0
        %4038 = vmatprep.subr.mxu0 0.0
        %4039 = vmatpush1.msra.mxu0 0.0
        %4040 = vmatprep.subr.mxu0 0.0
        %4041 = vmatpush1.msra.mxu0 0.0
        %4042 = vmatprep.subr.mxu0 0.0
        %4043 = vmatpush1.msra.mxu0 %v4022
        %4044 = vmatprep.subr.mxu0 0.0
        %4045 = vmatpush1.msra.mxu0 %v4021
        %4046 = vmatprep.subr.mxu0 0.0
        %4047 = vmatpush1.msra.mxu0 %v4020
        %4048 = vmatprep.subr.mxu0 0.0
        %4049 = vmatpush1.msra.mxu0 %v4019
        %4050 = vmatprep.subr.mxu0 0.0
        %4051 = vmatpush1.msra.mxu0 %v4018
        %4052 = vmatprep.subr.mxu0 0.0
        %4053 = vmatpush1.msra.mxu0 %v4017
        %4054 = vmatprep.subr.mxu0 0.0
        %4055 = vmatpush1.msra.mxu0 %v4016
        %4056 = vmatprep.subr.mxu0 0.0
        %4057 = vmatpush1.msra.mxu0 %v4015
        %4058 = vmatprep.subr.mxu0 0.0
        %4059 = vmatpush2.msra.mxu0 0.0
        %4060 = vmatprep.subr.mxu0 0.0
        %4061 = vmatpush2.msra.mxu0 0.0
        %4062 = vmatprep.subr.mxu0 0.0
        %4063 = vmatpush2.msra.mxu0 0.0
        %4064 = vmatprep.subr.mxu0 0.0
        %4065 = vmatpush2.msra.mxu0 0.0
        %4066 = vmatprep.subr.mxu0 0.0
        %4067 = vmatpush2.msra.mxu0 0.0
        %4068 = vmatprep.subr.mxu0 0.0
        %4069 = vmatpush2.msra.mxu0 0.0
        %4070 = vmatprep.subr.mxu0 0.0
        %4071 = vmatpush2.msra.mxu0 0.0
        %4072 = vmatprep.subr.mxu0 0.0
        %4073 = vmatpush2.msra.mxu0 0.0
        %4074 = vmatprep.subr.mxu0 0.0
        %4075 = vmatpush2.msra.mxu0 0.0
        %4076 = vmatprep.subr.mxu0 0.0
        %4077 = vmatpush2.msra.mxu0 0.0
        %4078 = vmatprep.subr.mxu0 0.0
        %4079 = vmatpush2.msra.mxu0 0.0
        %4080 = vmatprep.subr.mxu0 0.0
        %4081 = vmatpush2.msra.mxu0 0.0
        %4082 = vmatprep.subr.mxu0 0.0
        %4083 = vmatpush2.msra.mxu0 0.0
        %4084 = vmatprep.subr.mxu0 0.0
        %4085 = vmatpush2.msra.mxu0 0.0
        %4086 = vmatprep.subr.mxu0 0.0
        %4087 = vmatpush2.msra.mxu0 0.0
        %4088 = vmatprep.subr.mxu0 0.0
        %4089 = vmatpush2.msra.mxu0 0.0
        %4090 = vmatprep.mubr.f32.mxu0 0.0
        %4091 = vmatmul.mubr.f32.gmra.mxu0 %v4024
        %v4092 = vpop.f32.mrf.mxu0
        %v4093 = vadd.f32 0.0, %v4092
        %v4094 = vpop.f32.mrf.mxu0
        %4095 = vdwg.mxu0
        %v4096 = vadd.f32 %v2383, %v4093
        %v4097 = vld [vmem:[%s4 + $0xf] sm:$0x1]
        %v4098 = vlaneseq
        %v4099 = vshrl.u32 %v4098, 7
        %v4100 = vsub.s32 0, %v4099
        %v4101 = vrot.slane %v4097, %v4100
        %v4102 = vadd.f32 %v4096, %v4101
        %v4103 = vld [vmem:[%s4 + $0x10] sm:$0x1]
        %v4104 = vld [vmem:[%s4 + $0x11] sm:$0x1]
        %v4105 = vsel %vm254, %v4102, 0.0
        %4106 = vadd.xlane.f32.xlu0 %v4105
        %v4107 = vpop.xlane.xlu0 %4106
        %v4108 = vmul.f32 %v4107, %v435
        %v4109 = vsub.f32 %v4102, %v4108
        %v4110 = vmul.f32 %v4109, %v4109
        %v4111 = vsel %vm254, %v4110, 0.0
        %4112 = vadd.xlane.f32.xlu0 %v4111
        %v4113 = vpop.xlane.xlu0 %4112
        %v4114 = vmul.f32 %v4113, %v435
        %v4115 = vadd.f32 %v4114, 1e-05
        %v4116 = vrsqrt.pop %v4115
        %v4117 = vmul.f32 %v4109, %v4116
        %v4118 = vlaneseq
        %v4119 = vshrl.u32 %v4118, 7
        %v4120 = vsub.s32 0, %v4119
        %v4121 = vrot.slane %v4103, %v4120
        %v4122 = vmul.f32 %v4117, %v4121
        %v4123 = vlaneseq
        %v4124 = vshrl.u32 %v4123, 7
        %v4125 = vsub.s32 0, %v4124
        %v4126 = vrot.slane %v4104, %v4125
        %v4127 = vadd.f32 %v4122, %v4126
        %s4128 = scalar_lea.vmem %s3, 64
        %v4129 = vld [vmem:[%s4128] sm:$0xff]
        %v4130 = vld [vmem:[%s4128 + $0x8] sm:$0xff]
        %v4131 = vld [vmem:[%s4128 + $0x10] sm:$0xff]
        %v4132 = vld [vmem:[%s4128 + $0x18] sm:$0xff]
        %v4133 = vld [vmem:[%s4128 + $0x20] sm:$0xff]
        %v4134 = vld [vmem:[%s4128 + $0x28] sm:$0xff]
        %v4135 = vld [vmem:[%s4128 + $0x30] sm:$0xff]
        %v4136 = vld [vmem:[%s4128 + $0x38] sm:$0xff]
        %v4137 = vld [vmem:[%s4 + $0x12] sm:$0x1]
        %v4138 = vlaneseq
        %v4139 = vshrl.u32 %v4138, 7
        %v4140 = vsub.s32 0, %v4139
        %v4141 = vrot.slane %v4137, %v4140
        %v4143 = vsel %vm254, %v4127, 0
        %4145 = vmatprep.subr.mxu0 0.0
        %4146 = vmatpush1.msra.mxu0 0.0
        %4147 = vmatprep.subr.mxu0 0.0
        %4148 = vmatpush1.msra.mxu0 0.0
        %4149 = vmatprep.subr.mxu0 0.0
        %4150 = vmatpush1.msra.mxu0 0.0
        %4151 = vmatprep.subr.mxu0 0.0
        %4152 = vmatpush1.msra.mxu0 0.0
        %4153 = vmatprep.subr.mxu0 0.0
        %4154 = vmatpush1.msra.mxu0 0.0
        %4155 = vmatprep.subr.mxu0 0.0
        %4156 = vmatpush1.msra.mxu0 0.0
        %4157 = vmatprep.subr.mxu0 0.0
        %4158 = vmatpush1.msra.mxu0 0.0
        %4159 = vmatprep.subr.mxu0 0.0
        %4160 = vmatpush1.msra.mxu0 0.0
        %4161 = vmatprep.subr.mxu0 0.0
        %4162 = vmatpush1.msra.mxu0 %v4136
        %4163 = vmatprep.subr.mxu0 0.0
        %4164 = vmatpush1.msra.mxu0 %v4135
        %4165 = vmatprep.subr.mxu0 0.0
        %4166 = vmatpush1.msra.mxu0 %v4134
        %4167 = vmatprep.subr.mxu0 0.0
        %4168 = vmatpush1.msra.mxu0 %v4133
        %4169 = vmatprep.subr.mxu0 0.0
        %4170 = vmatpush1.msra.mxu0 %v4132
        %4171 = vmatprep.subr.mxu0 0.0
        %4172 = vmatpush1.msra.mxu0 %v4131
        %4173 = vmatprep.subr.mxu0 0.0
        %4174 = vmatpush1.msra.mxu0 %v4130
        %4175 = vmatprep.subr.mxu0 0.0
        %4176 = vmatpush1.msra.mxu0 %v4129
        %4177 = vmatprep.subr.mxu0 0.0
        %4178 = vmatpush2.msra.mxu0 0.0
        %4179 = vmatprep.subr.mxu0 0.0
        %4180 = vmatpush2.msra.mxu0 0.0
        %4181 = vmatprep.subr.mxu0 0.0
        %4182 = vmatpush2.msra.mxu0 0.0
        %4183 = vmatprep.subr.mxu0 0.0
        %4184 = vmatpush2.msra.mxu0 0.0
        %4185 = vmatprep.subr.mxu0 0.0
        %4186 = vmatpush2.msra.mxu0 0.0
        %4187 = vmatprep.subr.mxu0 0.0
        %4188 = vmatpush2.msra.mxu0 0.0
        %4189 = vmatprep.subr.mxu0 0.0
        %4190 = vmatpush2.msra.mxu0 0.0
        %4191 = vmatprep.subr.mxu0 0.0
        %4192 = vmatpush2.msra.mxu0 0.0
        %4193 = vmatprep.subr.mxu0 0.0
        %4194 = vmatpush2.msra.mxu0 0.0
        %4195 = vmatprep.subr.mxu0 0.0
        %4196 = vmatpush2.msra.mxu0 0.0
        %4197 = vmatprep.subr.mxu0 0.0
        %4198 = vmatpush2.msra.mxu0 0.0
        %4199 = vmatprep.subr.mxu0 0.0
        %4200 = vmatpush2.msra.mxu0 0.0
        %4201 = vmatprep.subr.mxu0 0.0
        %4202 = vmatpush2.msra.mxu0 0.0
        %4203 = vmatprep.subr.mxu0 0.0
        %4204 = vmatpush2.msra.mxu0 0.0
        %4205 = vmatprep.subr.mxu0 0.0
        %4206 = vmatpush2.msra.mxu0 0.0
        %4207 = vmatprep.subr.mxu0 0.0
        %4208 = vmatpush2.msra.mxu0 0.0
        %4209 = vmatprep.mubr.f32.mxu0 0.0
        %4210 = vmatmul.mubr.f32.gmra.mxu0 %v4143
        %v4211 = vpop.f32.mrf.mxu0
        %v4212 = vadd.f32 %v4141, %v4211
        %v4213 = vpop.f32.mrf.mxu0
        %4214 = vdwg.mxu0
        %v4215 = vmul.f32 %v4212, 0.5
        %v4216 = vmul.f32 %v4212, 0.70710677
        %vm4217 = vcmp.ge.f32.partialorder %v4216, 0.0
        %v4218 = vsel %vm4217, 1.0, -1.0
        %v4219 = vand.u32 2147483647, %v4216
        %v4220 = vmul.f32 %v4219, 0.3275911
        %v4221 = vadd.f32 %v4220, 1.0
        %v4222 = vrcp.pop %v4221
        %v4223 = vmul.f32 1.0, %v4222
        %v4224 = vmul.f32 %v4223, 1.0614054
        %v4225 = vadd.f32 %v4224, -1.4531521
        %v4226 = vmul.f32 %v4225, %v4223
        %v4227 = vadd.f32 %v4226, 1.4214138
        %v4228 = vmul.f32 %v4227, %v4223
        %v4229 = vadd.f32 %v4228, -0.28449672
        %v4230 = vmul.f32 %v4229, %v4223
        %v4231 = vadd.f32 %v4230, 0.2548296
        %v4232 = vmul.f32 %v4231, %v4223
        %v4233 = vsub.f32 0.0, %v4219
        %v4234 = vmul.f32 %v4233, %v4219
        %v4235 = vmul.f32 %v4234, 1.442695
        %v4236 = vpow.pop %v4235
        %v4237 = vmul.f32 %v4232, %v4236
        %v4238 = vsub.f32 1.0, %v4237
        %v4239 = vmul.f32 %v4218, %v4238
        %v4240 = vadd.f32 %v4239, 1.0
        %v4241 = vmul.f32 %v4215, %v4240
        %v4242 = vld [vmem:[%s1 + $0x1c0] sm:$0xff]
        %v4243 = vld [vmem:[%s1 + $0x1c8] sm:$0xff]
        %v4244 = vld [vmem:[%s1 + $0x1d0] sm:$0xff]
        %v4245 = vld [vmem:[%s1 + $0x1d8] sm:$0xff]
        %v4246 = vld [vmem:[%s1 + $0x1e0] sm:$0xff]
        %v4247 = vld [vmem:[%s1 + $0x1e8] sm:$0xff]
        %v4248 = vld [vmem:[%s1 + $0x1f0] sm:$0xff]
        %v4249 = vld [vmem:[%s1 + $0x1f8] sm:$0xff]
        %v4250 = vld [vmem:[%s1 + $0x200] sm:$0xff]
        %v4251 = vld [vmem:[%s1 + $0x208] sm:$0xff]
        %v4252 = vld [vmem:[%s1 + $0x210] sm:$0xff]
        %v4253 = vld [vmem:[%s1 + $0x218] sm:$0xff]
        %v4254 = vld [vmem:[%s1 + $0x220] sm:$0xff]
        %v4255 = vld [vmem:[%s1 + $0x228] sm:$0xff]
        %v4256 = vld [vmem:[%s1 + $0x230] sm:$0xff]
        %v4257 = vld [vmem:[%s1 + $0x238] sm:$0xff]
        %4258 = vmatprep.subr.mxu0 0.0
        %4259 = vmatpush1.msra.mxu0 %v4257
        %4260 = vmatprep.subr.mxu0 0.0
        %4261 = vmatpush1.msra.mxu0 %v4256
        %4262 = vmatprep.subr.mxu0 0.0
        %4263 = vmatpush1.msra.mxu0 %v4255
        %4264 = vmatprep.subr.mxu0 0.0
        %4265 = vmatpush1.msra.mxu0 %v4254
        %4266 = vmatprep.subr.mxu0 0.0
        %4267 = vmatpush1.msra.mxu0 %v4253
        %4268 = vmatprep.subr.mxu0 0.0
        %4269 = vmatpush1.msra.mxu0 %v4252
        %4270 = vmatprep.subr.mxu0 0.0
        %4271 = vmatpush1.msra.mxu0 %v4251
        %4272 = vmatprep.subr.mxu0 0.0
        %4273 = vmatpush1.msra.mxu0 %v4250
        %4274 = vmatprep.subr.mxu0 0.0
        %4275 = vmatpush1.msra.mxu0 %v4249
        %4276 = vmatprep.subr.mxu0 0.0
        %4277 = vmatpush1.msra.mxu0 %v4248
        %4278 = vmatprep.subr.mxu0 0.0
        %4279 = vmatpush1.msra.mxu0 %v4247
        %4280 = vmatprep.subr.mxu0 0.0
        %4281 = vmatpush1.msra.mxu0 %v4246
        %4282 = vmatprep.subr.mxu0 0.0
        %4283 = vmatpush1.msra.mxu0 %v4245
        %4284 = vmatprep.subr.mxu0 0.0
        %4285 = vmatpush1.msra.mxu0 %v4244
        %4286 = vmatprep.subr.mxu0 0.0
        %4287 = vmatpush1.msra.mxu0 %v4243
        %4288 = vmatprep.subr.mxu0 0.0
        %4289 = vmatpush1.msra.mxu0 %v4242
        %4290 = vmatprep.subr.mxu0 0.0
        %4291 = vmatpush2.msra.mxu0 0.0
        %4292 = vmatprep.subr.mxu0 0.0
        %4293 = vmatpush2.msra.mxu0 0.0
        %4294 = vmatprep.subr.mxu0 0.0
        %4295 = vmatpush2.msra.mxu0 0.0
        %4296 = vmatprep.subr.mxu0 0.0
        %4297 = vmatpush2.msra.mxu0 0.0
        %4298 = vmatprep.subr.mxu0 0.0
        %4299 = vmatpush2.msra.mxu0 0.0
        %4300 = vmatprep.subr.mxu0 0.0
        %4301 = vmatpush2.msra.mxu0 0.0
        %4302 = vmatprep.subr.mxu0 0.0
        %4303 = vmatpush2.msra.mxu0 0.0
        %4304 = vmatprep.subr.mxu0 0.0
        %4305 = vmatpush2.msra.mxu0 0.0
        %4306 = vmatprep.subr.mxu0 0.0
        %4307 = vmatpush2.msra.mxu0 0.0
        %4308 = vmatprep.subr.mxu0 0.0
        %4309 = vmatpush2.msra.mxu0 0.0
        %4310 = vmatprep.subr.mxu0 0.0
        %4311 = vmatpush2.msra.mxu0 0.0
        %4312 = vmatprep.subr.mxu0 0.0
        %4313 = vmatpush2.msra.mxu0 0.0
        %4314 = vmatprep.subr.mxu0 0.0
        %4315 = vmatpush2.msra.mxu0 0.0
        %4316 = vmatprep.subr.mxu0 0.0
        %4317 = vmatpush2.msra.mxu0 0.0
        %4318 = vmatprep.subr.mxu0 0.0
        %4319 = vmatpush2.msra.mxu0 0.0
        %4320 = vmatprep.subr.mxu0 0.0
        %4321 = vmatpush2.msra.mxu0 0.0
        %4322 = vmatprep.mubr.f32.mxu0 0.0
        %4323 = vmatmul.mubr.f32.gmra.mxu0 %v4241
        %v4324 = vpop.f32.mrf.mxu0
        %v4325 = vadd.f32 0.0, %v4324
        %v4326 = vpop.f32.mrf.mxu0
        %4327 = vdwg.mxu0
        %v4328 = vadd.f32 %v4102, %v4325
        %v4329 = vld [vmem:[%s4 + $0x13] sm:$0x1]
        %v4330 = vlaneseq
        %v4331 = vshrl.u32 %v4330, 7
        %v4332 = vsub.s32 0, %v4331
        %v4333 = vrot.slane %v4329, %v4332
        %v4334 = vadd.f32 %v4328, %v4333
        %v4335 = vld [vmem:[%s4 + $0x3] sm:$0x1]
        %v4336 = vld [vmem:[%s4 + $0x4] sm:$0x1]
        %vm4337 = vcmask 516096
        %v4338 = vsel %vm4337, %v4334, 0.0
        %4339 = vadd.xlane.f32.xlu0 %v4338
        %v4340 = vpop.xlane.xlu0 %4339
        %v4341 = vmul.f32 %v4340, %v435
        %v4342 = vsub.f32 %v4334, %v4341
        %v4343 = vmul.f32 %v4342, %v4342
        %v4344 = vsel %vm4337, %v4343, 0.0
        %4345 = vadd.xlane.f32.xlu0 %v4344
        %v4346 = vpop.xlane.xlu0 %4345
        %v4347 = vmul.f32 %v4346, %v435
        %v4348 = vadd.f32 %v4347, 1e-05
        %v4349 = vrsqrt.pop %v4348
        %v4350 = vmul.f32 %v4342, %v4349
        %v4351 = vmul.f32 %v4350, %v4335
        %v4352 = vadd.f32 %v4351, %v4336
        %s4353 = scalar_lea.vmem %s3, 128
        %v4354 = vld [vmem:[%s4353] sm:$0xff]
        %v4355 = vld [vmem:[%s4353 + $0x8] sm:$0xff]
        %v4356 = vld [vmem:[%s4353 + $0x10] sm:$0xff]
        %v4357 = vld [vmem:[%s4353 + $0x18] sm:$0xff]
        %v4358 = vld [vmem:[%s4353 + $0x20] sm:$0xff]
        %v4359 = vld [vmem:[%s4353 + $0x28] sm:$0xff]
        %v4360 = vld [vmem:[%s4353 + $0x30] sm:$0xff]
        %v4361 = vld [vmem:[%s4353 + $0x38] sm:$0xff]
        %v4362 = vld [vmem:[%s4 + $0x5] sm:$0x1]
        %v4364 = vsel %vm254, %v4352, 0
        %4366 = vmatprep.subr.mxu0 0.0
        %4367 = vmatpush1.msra.mxu0 0.0
        %4368 = vmatprep.subr.mxu0 0.0
        %4369 = vmatpush1.msra.mxu0 0.0
        %4370 = vmatprep.subr.mxu0 0.0
        %4371 = vmatpush1.msra.mxu0 0.0
        %4372 = vmatprep.subr.mxu0 0.0
        %4373 = vmatpush1.msra.mxu0 0.0
        %4374 = vmatprep.subr.mxu0 0.0
        %4375 = vmatpush1.msra.mxu0 0.0
        %4376 = vmatprep.subr.mxu0 0.0
        %4377 = vmatpush1.msra.mxu0 0.0
        %4378 = vmatprep.subr.mxu0 0.0
        %4379 = vmatpush1.msra.mxu0 0.0
        %4380 = vmatprep.subr.mxu0 0.0
        %4381 = vmatpush1.msra.mxu0 0.0
        %4382 = vmatprep.subr.mxu0 0.0
        %4383 = vmatpush1.msra.mxu0 %v4361
        %4384 = vmatprep.subr.mxu0 0.0
        %4385 = vmatpush1.msra.mxu0 %v4360
        %4386 = vmatprep.subr.mxu0 0.0
        %4387 = vmatpush1.msra.mxu0 %v4359
        %4388 = vmatprep.subr.mxu0 0.0
        %4389 = vmatpush1.msra.mxu0 %v4358
        %4390 = vmatprep.subr.mxu0 0.0
        %4391 = vmatpush1.msra.mxu0 %v4357
        %4392 = vmatprep.subr.mxu0 0.0
        %4393 = vmatpush1.msra.mxu0 %v4356
        %4394 = vmatprep.subr.mxu0 0.0
        %4395 = vmatpush1.msra.mxu0 %v4355
        %4396 = vmatprep.subr.mxu0 0.0
        %4397 = vmatpush1.msra.mxu0 %v4354
        %4398 = vmatprep.subr.mxu0 0.0
        %4399 = vmatpush2.msra.mxu0 0.0
        %4400 = vmatprep.subr.mxu0 0.0
        %4401 = vmatpush2.msra.mxu0 0.0
        %4402 = vmatprep.subr.mxu0 0.0
        %4403 = vmatpush2.msra.mxu0 0.0
        %4404 = vmatprep.subr.mxu0 0.0
        %4405 = vmatpush2.msra.mxu0 0.0
        %4406 = vmatprep.subr.mxu0 0.0
        %4407 = vmatpush2.msra.mxu0 0.0
        %4408 = vmatprep.subr.mxu0 0.0
        %4409 = vmatpush2.msra.mxu0 0.0
        %4410 = vmatprep.subr.mxu0 0.0
        %4411 = vmatpush2.msra.mxu0 0.0
        %4412 = vmatprep.subr.mxu0 0.0
        %4413 = vmatpush2.msra.mxu0 0.0
        %4414 = vmatprep.subr.mxu0 0.0
        %4415 = vmatpush2.msra.mxu0 0.0
        %4416 = vmatprep.subr.mxu0 0.0
        %4417 = vmatpush2.msra.mxu0 0.0
        %4418 = vmatprep.subr.mxu0 0.0
        %4419 = vmatpush2.msra.mxu0 0.0
        %4420 = vmatprep.subr.mxu0 0.0
        %4421 = vmatpush2.msra.mxu0 0.0
        %4422 = vmatprep.subr.mxu0 0.0
        %4423 = vmatpush2.msra.mxu0 0.0
        %4424 = vmatprep.subr.mxu0 0.0
        %4425 = vmatpush2.msra.mxu0 0.0
        %4426 = vmatprep.subr.mxu0 0.0
        %4427 = vmatpush2.msra.mxu0 0.0
        %4428 = vmatprep.subr.mxu0 0.0
        %4429 = vmatpush2.msra.mxu0 0.0
        %4430 = vmatprep.mubr.f32.mxu0 0.0
        %4431 = vmatmul.mubr.f32.gmra.mxu0 %v4364
        %v4432 = vpop.f32.mrf.mxu0
        %v4433 = vadd.f32 %v4362, %v4432
        %v4434 = vpop.f32.mrf.mxu0
        %4435 = vdwg.mxu0
        %4436 = vst [vmem:[%s216] sm:$0x1] %v4433
        %s4437 = sand.u32 %s137, 1
        %s4438 = scalar_lea.sflag [#allocation3], %s4437
        %s4439 = sand.u32 %s137, 1
        %s4440 = scalar_lea.vmem [#allocation2], %s4439
        // Predicated region
        $region41: #{vit_forward.1} parent=39 // pred_check
          %p4441 = pneg %p147
        $region42: #{vit_forward.1} parent=39 // pred_check_branch
          %4443 = sbr.rel (%p4441) target = $region44
        $region43: #{vit_forward.1} parent=39 // pred_region
          %s4445 = ssub.s32 16, 16
          %4446 = vsyncadd %s4438, %s4445
          %s4447 = smul.addr %s19, 16
          %s4448 = scalar_lea.hbm %s5, %s4447
          %s4450 = sshll.u32 %s4440, 4
          %s4451 = int_to_ptr.vmem [resolvable:$true] %s4450
          %4453 = dma.vmem_to_hbm [thread:$0]  %s4451, 16, %s4448, %s4438
        $region44: #{vit_forward.1} parent=39 // pred_fallthru
          _
      $region40: #{vit_forward.1} parent=5 // pred_fallthru
        _
      %p4454 = scmp.le.s32.totalorder 2, %s14
      // Predicated region
      $region45: #{vit_forward.1} parent=5 // pred_check
        %p4455 = pneg %p4454
      $region46: #{vit_forward.1} parent=5 // pred_check_branch
        %4457 = sbr.rel (%p4455) target = $region48
      $region47: #{vit_forward.1} parent=5 // pred_region
        %s4458 = ssub.s32 %s14, 2
        // Predicated region
        $region49: #{vit_forward.1} parent=47 // pred_check
          %p4459 = pneg %p153
        $region50: #{vit_forward.1} parent=47 // pred_check_branch
          %4461 = sbr.rel (%p4459) target = $region52
        $region51: #{vit_forward.1} parent=47 // pred_region
          %s4462 = sand.u32 %s138, 1
          %s4463 = scalar_lea.sflag [#allocation3], %s4462
          %s4464 = sand.u32 %s138, 1
          %s4465 = scalar_lea.vmem [#allocation2], %s4464
          %4466 = dma.done %s4463, 16
        $region52: #{vit_forward.1} parent=47 // pred_fallthru
          _
      $region48: #{vit_forward.1} parent=5 // pred_fallthru
        _
    $region6: #{vit_forward.1} parent=1 // loop_footer
      %s18 = sadd.s32 1, %s14
    $region7: #{vit_forward.1} parent=1 // loop_footer_branch
      %13 = sbr.rel target = $region3
    $region8: #{vit_forward.1} parent=1 // loop_exit
      _
    %4467 = vsyncpa [#allocation3], 1
    %s4468 = scalar_lea.sflag [#allocation3], 1
    %4469 = vsyncpa %s4468, 1

</llo_original>
